<compile_context>
chip_gen: v6e
topology: v6e:2x2x1
jax: 0.10.0
libtpu: 0.0.40
codegen_flags: <defaults>
</compile_context>

<pallas_src>
import functools

import jax
import jax.numpy as jnp
from jax import lax
from jax.experimental import pallas as pl
from jax.experimental.pallas import tpu as pltpu


# ----------------------------------------------------------------------------
# Generation-aware VMEM budget and tile sizing
# ----------------------------------------------------------------------------
@functools.lru_cache(maxsize=1)
def _vmem_limit():
    """~0.75x physical VMEM: ~96 MiB on v5e/v6e (128 MiB), ~48 MiB on v7x (64)."""
    try:
        info = pltpu.get_tpu_info()
        cap = int(getattr(info, "vmem_capacity_bytes", 0)) or (64 << 20)
    except Exception:  # interpret mode / unknown chip -> conservative default
        cap = 64 << 20
    return (cap * 3) // 4


def _pick_tile_m(m, bytes_per_row, resident_bytes, budget):
    """VMEM-budget-driven M tile: biggest tile whose double-buffered blocks fit
    ~half the budget (minus resident weights), capped at 2048 rows, keeping
    >= 2 grid steps when possible so both v7x TensorCores get work."""
    avail = max(budget // 2 - resident_bytes, 2 << 20)
    t = avail // (2 * max(bytes_per_row, 1))     # 2x: blocks are double-buffered
    t = int(min(t, 2048, m))
    if t >= m:
        if m >= 16 and (m // 2) % 8 == 0:
            return m // 2                         # keep >= 2 grid steps (megacore)
        return m
    return max(8, (t // 8) * 8)


def _pick_tile_co(cout, n_batch):
    """Output-channel tile for the 3x3 conv: bounds the f32 accumulator and the
    output block, keeps lane-dense (multiple-of-128) tiles, and gives >= 2 grid
    steps at N=1 when Cout >= 256 (v7x megacore)."""
    if cout > 256 and cout % 256 == 0:
        return 256
    if n_batch < 2 and cout >= 256 and (cout // 2) % 128 == 0:
        return cout // 2
    return cout


# ----------------------------------------------------------------------------
# Pallas kernel 1: matmul (bf16 x bf16 -> f32 acc) + bias + optional fused
# projection shortcut (second matmul) or f32 residual, + optional ReLU.
# BN scale is pre-folded into the weight columns.
# ----------------------------------------------------------------------------
def _mm_epilogue_kernel(x_ref, w_ref, b_ref, *rest, relu, mode):
    """acc = x @ w + b  [+ xs @ wsc + bsc  |  + residual_f32]  -> relu -> out.

    Partial last M blocks feed padded garbage rows into the matmul; this is
    safe because there is NO reduction across M (each output row depends only
    on its own input row).  A future K-tiled variant must not inherit this.
    """
    if mode == "proj":
        xs_ref, wsc_ref, bsc_ref, o_ref = rest
    elif mode == "residual":
        res_ref, o_ref = rest
    else:
        (o_ref,) = rest
    acc = jnp.dot(x_ref[...], w_ref[...], preferred_element_type=jnp.float32)
    acc = acc + b_ref[...]
    if mode == "proj":
        acc = acc + jnp.dot(xs_ref[...], wsc_ref[...],
                            preferred_element_type=jnp.float32) + bsc_ref[...]
    elif mode == "residual":
        acc = acc + res_ref[...].astype(jnp.float32)
    if relu:
        acc = jnp.maximum(acc, 0.0)
    o_ref[...] = acc.astype(o_ref.dtype)


def fused_matmul(x2d, w_f, b2, *, shortcut=None, residual=None, relu=True,
                 out_dtype=jnp.bfloat16):
    """out = relu?( x2d @ w_f + b2 [+ xs @ wsc_f + bsc | + residual_f32] ).

    w_f / b2 (and wsc_f / bsc) are pre-folded at load time (BN scale folded
    into weight columns, bf16 weights, f32 bias rows).
    """
    M, K = x2d.shape
    Kw, Cout = w_f.shape
    assert K == Kw and (shortcut is None or residual is None)
    out_bytes = jnp.dtype(out_dtype).itemsize

    bytes_per_row = K * x2d.dtype.itemsize + Cout * out_bytes
    resident = w_f.size * w_f.dtype.itemsize + b2.size * 4
    mode = "plain"
    if shortcut is not None:
        xs, wsc, bsc = shortcut
        mode = "proj"
        bytes_per_row += xs.shape[1] * xs.dtype.itemsize
        resident += wsc.size * wsc.dtype.itemsize + bsc.size * 4
    elif residual is not None:
        mode = "residual"
        bytes_per_row += Cout * residual.dtype.itemsize

    tile_m = _pick_tile_m(M, bytes_per_row, resident, _vmem_limit())
    grid = (pl.cdiv(M, tile_m),)

    in_specs = [
        pl.BlockSpec((tile_m, K), lambda i: (i, 0)),
        pl.BlockSpec((K, Cout), lambda i: (0, 0)),
        pl.BlockSpec((1, Cout), lambda i: (0, 0)),
    ]
    args = [x2d, w_f, b2]
    if mode == "proj":
        Ks = xs.shape[1]
        in_specs += [
            pl.BlockSpec((tile_m, Ks), lambda i: (i, 0)),
            pl.BlockSpec((Ks, Cout), lambda i: (0, 0)),
            pl.BlockSpec((1, Cout), lambda i: (0, 0)),
        ]
        args += [xs, wsc, bsc]
    elif mode == "residual":
        in_specs.append(pl.BlockSpec((tile_m, Cout), lambda i: (i, 0)))
        args.append(residual)

    kernel = functools.partial(_mm_epilogue_kernel, relu=relu, mode=mode)
    # NOTE: for Cout < 128 stages the output is lane-narrow (masked stores);
    # unavoidable at the toy channel counts used in the self-test.
    return pl.pallas_call(
        kernel,
        out_shape=jax.ShapeDtypeStruct((M, Cout), out_dtype),
        grid=grid,
        in_specs=in_specs,
        out_specs=pl.BlockSpec((tile_m, Cout), lambda i: (i, 0)),
        compiler_params=pltpu.CompilerParams(
            dimension_semantics=("parallel",), vmem_limit_bytes=_vmem_limit()),
    )(*args)


# ----------------------------------------------------------------------------
# Pallas kernel 2: 3x3 conv (stride 1/2, pad 1) + BN + ReLU via 9 shifted-tap
# matmuls over contiguous full-width row slabs (no im2col, no per-tap relayout)
# ----------------------------------------------------------------------------
def _conv3x3_kernel(x_ref, w_ref, b_ref, o_ref, acc_ref, *, stride, ho, wo, wq):
    """x_ref : (1, s*s, FLAT, Cin)  spatially flattened padded parity planes
    w_ref : (9, Cin, tco)          BN scale pre-folded into output columns
    acc   : (ho*wq, tco) f32       full padded-width rows; the garbage columns
                                   (w >= wo) are trimmed once in the epilogue.
    """
    s = stride
    rows = ho * wq
    for ky in range(3):
        for kx in range(3):
            t = ky * 3 + kx
            p_idx = (ky % s) * s + (kx % s)            # parity plane
            off = (ky // s) * wq + (kx // s)           # contiguous row offset
            lhs = x_ref[0, p_idx, off:off + rows, :]
            part = jnp.dot(lhs, w_ref[t], preferred_element_type=jnp.float32)
            if t == 0:
                acc_ref[...] = part                    # first tap: direct write
            else:
                acc_ref[...] += part
    y = jnp.maximum(acc_ref[...] + b_ref[...], 0.0)
    y = y.reshape(ho, wq, -1)[:, :wo, :]               # single Wq -> Wo trim
    o_ref[...] = y[None].astype(o_ref.dtype)


def conv3x3_bn_relu(x_nhwc, w9, b2, *, stride, out_dtype=jnp.bfloat16):
    """y = relu(bn(conv3x3(x, stride, pad=1))), NHWC; w9: (9, Cin, Cout) bf16."""
    N, H, W, Cin = x_nhwc.shape
    Cout = w9.shape[-1]
    s = stride
    Ho = (H - 1) // s + 1
    Wo = (W - 1) // s + 1

    xp = jnp.pad(x_nhwc.astype(jnp.bfloat16), ((0, 0), (1, 1), (1, 1), (0, 0)))
    Hp, Wp = H + 2, W + 2
    if s == 1:
        Hq, Wq = Hp, Wp
        xq = xp.reshape(N, 1, Hp, Wp, Cin)
    else:
        # Space-to-depth by the stride so every tap window is contiguous.
        Hq, Wq = -(-Hp // s), -(-Wp // s)
        xp = jnp.pad(xp, ((0, 0), (0, Hq * s - Hp), (0, Wq * s - Wp), (0, 0)))
        xq = (xp.reshape(N, Hq, s, Wq, s, Cin)
                .transpose(0, 2, 4, 1, 3, 5)
                .reshape(N, s * s, Hq, Wq, Cin))
    # One extra zero row per plane so every tap's full-width row slab stays
    # in-bounds; flatten spatial so in-kernel tap slices are contiguous.
    xq = jnp.pad(xq, ((0, 0), (0, 0), (0, 1), (0, 0), (0, 0)))
    flat = (Hq + 1) * Wq
    xf = xq.reshape(N, s * s, flat, Cin)

    tco = _pick_tile_co(Cout, N)
    grid = (N, Cout // tco)
    kernel = functools.partial(_conv3x3_kernel, stride=s, ho=Ho, wo=Wo, wq=Wq)
    # TODO(synk): add row-band (halo) tiling of the flattened plane for very
    #             large feature maps at N=1; whole padded planes fit VMEM here.
    return pl.pallas_call(
        kernel,
        out_shape=jax.ShapeDtypeStruct((N, Ho, Wo, Cout), out_dtype),
        grid=grid,
        in_specs=[
            pl.BlockSpec((1, s * s, flat, Cin), lambda n, j: (n, 0, 0, 0)),
            pl.BlockSpec((9, Cin, tco), lambda n, j: (0, 0, j)),
            pl.BlockSpec((1, tco), lambda n, j: (0, j)),
        ],
        out_specs=pl.BlockSpec((1, Ho, Wo, tco), lambda n, j: (n, 0, 0, j)),
        scratch_shapes=[pltpu.VMEM((Ho * Wq, tco), jnp.float32)],
        compiler_params=pltpu.CompilerParams(
            dimension_semantics=("parallel", "parallel"),
            vmem_limit_bytes=_vmem_limit()),
    )(xf, w9, b2)


# ----------------------------------------------------------------------------
# One-time (load-time) parameter preparation: fold eval-mode BN, transpose,
# cast to bf16.  Hoisted out of the forward path (perf-review item 10).
# ----------------------------------------------------------------------------
def _w1x1_to_mat(w_oihw):   # (O, I, 1, 1) -> (I, O)
    return jnp.transpose(w_oihw[:, :, 0, 0], (1, 0))


def _fold_bn(gamma, beta, mean, var, eps=1e-5):
    scale = gamma / jnp.sqrt(var + eps)
    return scale, beta - mean * scale


def prepare_bottleneck_params(p, eps=1e-5):
    def prep1x1(w, bn):
        s, b = _fold_bn(*bn, eps=eps)
        wm = _w1x1_to_mat(w).astype(jnp.float32) * s[None, :]
        return wm.astype(jnp.bfloat16), b.reshape(1, -1).astype(jnp.float32)

    out = {}
    out["w1"], out["b1"] = prep1x1(p["w1"], p["bn1"])
    s2, b2 = _fold_bn(*p["bn2"], eps=eps)
    w2 = jnp.transpose(p["w2"], (2, 3, 1, 0)).reshape(
        9, p["w2"].shape[1], p["w2"].shape[0])
    out["w2"] = (w2.astype(jnp.float32) * s2.reshape(1, 1, -1)).astype(jnp.bfloat16)
    out["b2"] = b2.reshape(1, -1).astype(jnp.float32)
    out["w3"], out["b3"] = prep1x1(p["w3"], p["bn3"])
    if "w_sc" in p:
        out["w_sc"], out["b_sc"] = prep1x1(p["w_sc"], p["bn_sc"])
    return out


# ----------------------------------------------------------------------------
# Bottleneck forward (Pallas hot path)
# ----------------------------------------------------------------------------
def bottleneck_forward(x_nchw, prep, *, stride):
    N, Cin, H, W = x_nchw.shape
    P = prep["w1"].shape[1]
    E = prep["w3"].shape[1]
    Ho = (H - 1) // stride + 1
    Wo = (W - 1) // stride + 1
    Mo = N * Ho * Wo

    x_nhwc = jnp.transpose(x_nchw, (0, 2, 3, 1))          # f32 master copy
    x_bf = x_nhwc.astype(jnp.bfloat16)

    # conv1 (1x1) + bn1 + relu
    out1 = fused_matmul(x_bf.reshape(N * H * W, Cin), prep["w1"], prep["b1"],
                        relu=True).reshape(N, H, W, P)

    # conv2 (3x3, stride, pad 1) + bn2 + relu
    out2 = conv3x3_bn_relu(out1, prep["w2"], prep["b2"], stride=stride)

    # conv3 (1x1) + bn3 + shortcut + residual add + relu -- one fused kernel.
    if "w_sc" in prep:
        if stride == 1:
            x_s = x_bf
        else:
            # TODO(synk): fuse this strided subsample into the conv3 kernel via
            #             a strided index_map / DMA instead of an XLA gather.
            x_s = x_bf[:, ::stride, ::stride, :]
        out3 = fused_matmul(
            out2.reshape(Mo, P), prep["w3"], prep["b3"],
            shortcut=(x_s.reshape(Mo, Cin), prep["w_sc"], prep["b_sc"]),
            relu=True, out_dtype=jnp.float32)
    else:
        # Identity shortcut is only valid for stride 1 and Cin == 4*planes.
        assert stride == 1 and Cin == E, "identity shortcut needs stride=1, Cin=4*planes"
        out3 = fused_matmul(
            out2.reshape(Mo, P), prep["w3"], prep["b3"],
            residual=x_nhwc.reshape(Mo, Cin).astype(jnp.float32),  # f32 residual
            relu=True, out_dtype=jnp.float32)

    return jnp.transpose(out3.reshape(N, Ho, Wo, E), (0, 3, 1, 2))  # NCHW


# ----------------------------------------------------------------------------
# Pure-JAX reference (mirrors the PyTorch Bottleneck, eval-mode BN, f32)
# ----------------------------------------------------------------------------
def bottleneck_ref(x_nchw, p, stride, eps=1e-5):
    def bn(x, g, b, m, v):
        g, b, m, v = (t[None, :, None, None] for t in (g, b, m, v))
        return (x - m) / jnp.sqrt(v + eps) * g + b

    def conv(x, w, s, pad):
        return lax.conv_general_dilated(
            x, w, (s, s), [(pad, pad), (pad, pad)],
            dimension_numbers=("NCHW", "OIHW", "NCHW"))

    out = jax.nn.relu(bn(conv(x_nchw, p["w1"], 1, 0), *p["bn1"]))
    out = jax.nn.relu(bn(conv(out, p["w2"], stride, 1), *p["bn2"]))
    out = bn(conv(out, p["w3"], 1, 0), *p["bn3"])
    sc = x_nchw
    if "w_sc" in p:
        sc = bn(conv(x_nchw, p["w_sc"], stride, 0), *p["bn_sc"])
    return jax.nn.relu(out + sc)


def make_params(key, in_planes, planes, stride):
    E = 4 * planes
    ks = iter(jax.random.split(key, 24))

    def w(shape):
        return 0.1 * jax.random.normal(next(ks), shape, jnp.float32)

    def bn(c):
        return (0.5 + jax.random.uniform(next(ks), (c,), jnp.float32),   # gamma
                0.1 * jax.random.normal(next(ks), (c,), jnp.float32),    # beta
                0.1 * jax.random.normal(next(ks), (c,), jnp.float32),    # mean
                0.5 + jax.random.uniform(next(ks), (c,), jnp.float32))   # var

    p = {"w1": w((planes, in_planes, 1, 1)), "bn1": bn(planes),
         "w2": w((planes, planes, 3, 3)),    "bn2": bn(planes),
         "w3": w((E, planes, 1, 1)),         "bn3": bn(E)}
    if stride != 1 or in_planes != E:
        p["w_sc"] = w((E, in_planes, 1, 1))
        p["bn_sc"] = bn(E)
    return p


if __name__ == "__main__":
    key = jax.random.PRNGKey(0)

    def run_case(k, N, in_planes, planes, H, W, stride):
        kx, kp = jax.random.split(k)
        x = jax.random.normal(kx, (N, in_planes, H, W), jnp.float32)
        params = make_params(kp, in_planes, planes, stride)
        prep = prepare_bottleneck_params(params)            # load-time weight prep
        fwd = jax.jit(functools.partial(bottleneck_forward, stride=stride))
        out = jax.block_until_ready(fwd(x, prep))
        ref = jax.block_until_ready(bottleneck_ref(x, params, stride))
        assert out.shape == ref.shape, (out.shape, ref.shape)
        err = float(jnp.max(jnp.abs(out - ref)))
        # bf16 MXU operands + bf16 out1/out2 intermediates -> loosened f32 tol.
        assert jnp.allclose(out, ref, atol=5e-2, rtol=5e-2), err

    k1, k2, k3, k4 = jax.random.split(key, 4)
    # stride-2 block with projection shortcut
    run_case(k1, 2, 4, 4, 16, 16, 2)
    # stride-1 block with identity shortcut (in_planes == 4*planes)
    run_case(k2, 2, 16, 4, 16, 16, 1)
    # stride-2 projection block with odd spatial dims
    run_case(k3, 2, 8, 4, 15, 15, 2)
    # stride-1 projection block (first block of a layer), N=1
    run_case(k4, 1, 8, 4, 8, 8, 1)

    print("KERNEL_OK")
</pallas_src>

<mosaic_0001>
module attributes {stable_mosaic.version = 11 : i64} {
  func.func @_mm_epilogue_kernel(%arg0: i32, %arg1: memref<256x4xbf16, #tpu.memory_space<vmem>>, %arg2: memref<4x4xbf16, #tpu.memory_space<vmem>>, %arg3: memref<1x4xf32, #tpu.memory_space<vmem>>, %arg4: memref<256x4xbf16, #tpu.memory_space<vmem>>) attributes {dimension_semantics = [#tpu.dimension_semantics<parallel>], iteration_bounds = array<i64: 2>, scalar_prefetch = 0 : i64, scratch_operands = 0 : i64, tpu.core_type = #tpu.core_type<tc>, window_params = [{transform_indices = @transform_0, window_bounds = array<i64: 256, 4>}, {pipeline_mode = #tpu.pipeline_mode<synchronous>, transform_indices = @transform_1, window_bounds = array<i64: 4, 4>}, {pipeline_mode = #tpu.pipeline_mode<synchronous>, transform_indices = @transform_2, window_bounds = array<i64: 1, 4>}, {transform_indices = @transform_3, window_bounds = array<i64: 256, 4>}]} {
    %c0 = arith.constant 0 : index
    %c0_0 = arith.constant 0 : index
    %0 = vector.load %arg1[%c0, %c0_0] : memref<256x4xbf16, #tpu.memory_space<vmem>>, vector<256x4xbf16>
    %c0_1 = arith.constant 0 : index
    %c0_2 = arith.constant 0 : index
    %1 = vector.load %arg2[%c0_1, %c0_2] : memref<4x4xbf16, #tpu.memory_space<vmem>>, vector<4x4xbf16>
    %cst = arith.constant dense<0.000000e+00> : vector<256x4xf32>
    %2 = tpu.matmul %0, %1, %cst {dimension_numbers = #tpu.dot_dimension_numbers<[1], [0], [0], [1], [0, 0, 1, 1], [], []>} : vector<256x4xbf16>, vector<4x4xbf16>, vector<256x4xf32> -> vector<256x4xf32>
    %c0_3 = arith.constant 0 : index
    %c0_4 = arith.constant 0 : index
    %3 = vector.load %arg3[%c0_3, %c0_4] : memref<1x4xf32, #tpu.memory_space<vmem>>, vector<1x4xf32>
    %4 = vector.broadcast %3 : vector<1x4xf32> to vector<256x4xf32>
    %5 = arith.addf %2, %4 : vector<256x4xf32>
    %cst_5 = arith.constant 0.000000e+00 : f32
    %6 = vector.broadcast %cst_5 : f32 to vector<256x4xf32>
    %7 = arith.maximumf %5, %6 : vector<256x4xf32>
    %8 = arith.truncf %7 : vector<256x4xf32> to vector<256x4xbf16>
    %c0_6 = arith.constant 0 : index
    %c0_7 = arith.constant 0 : index
    %9 = vector.load %arg4[%c0_6, %c0_7] : memref<256x4xbf16, #tpu.memory_space<vmem>>, vector<256x4xbf16>
    tpu.vector_store %arg4[%c0_6, %c0_7], %8 {strides = array<i32>} : memref<256x4xbf16, #tpu.memory_space<vmem>>, vector<256x4xbf16>,
    return
  }
  func.func @transform_0(%arg0: i32) -> (i32, i32) {
    %c0_i32 = arith.constant 0 : i32
    %c0_i32_0 = arith.constant 0 : i32
    return %arg0, %c0_i32 : i32, i32
  }
  func.func @transform_1(%arg0: i32) -> (i32, i32) {
    %c0_i32 = arith.constant 0 : i32
    %c0_i32_0 = arith.constant 0 : i32
    %c0_i32_1 = arith.constant 0 : i32
    return %c0_i32, %c0_i32_0 : i32, i32
  }
  func.func @transform_2(%arg0: i32) -> (i32, i32) {
    %c0_i32 = arith.constant 0 : i32
    %c0_i32_0 = arith.constant 0 : i32
    %c0_i32_1 = arith.constant 0 : i32
    return %c0_i32, %c0_i32_0 : i32, i32
  }
  func.func @transform_3(%arg0: i32) -> (i32, i32) {
    %c0_i32 = arith.constant 0 : i32
    %c0_i32_0 = arith.constant 0 : i32
    return %arg0, %c0_i32 : i32, i32
  }
}

module attributes {stable_mosaic.version = 11 : i64} {
  func.func @_conv3x3_kernel(%arg0: i32, %arg1: i32, %arg2: memref<1x4x90x4xbf16, #tpu.memory_space<vmem>>, %arg3: memref<9x4x4xbf16, #tpu.memory_space<vmem>>, %arg4: memref<1x4xf32, #tpu.memory_space<vmem>>, %arg5: memref<1x8x8x4xbf16, #tpu.memory_space<vmem>>, %arg6: memref<72x4xf32, #tpu.memory_space<vmem>>) attributes {dimension_semantics = [#tpu.dimension_semantics<parallel>, #tpu.dimension_semantics<parallel>], iteration_bounds = array<i64: 2, 1>, scalar_prefetch = 0 : i64, scratch_operands = 1 : i64, tpu.core_type = #tpu.core_type<tc>, window_params = [{transform_indices = @transform_0, window_bounds = array<i64: 1, 4, 90, 4>}, {transform_indices = @transform_1, window_bounds = array<i64: 9, 4, 4>}, {transform_indices = @transform_2, window_bounds = array<i64: 1, 4>}, {transform_indices = @transform_3, window_bounds = array<i64: 1, 8, 8, 4>}]} {
    %c0 = arith.constant 0 : index
    %c0_0 = arith.constant 0 : index
    %c0_1 = arith.constant 0 : index
    %c0_2 = arith.constant 0 : index
    %0 = vector.load %arg2[%c0, %c0_0, %c0_1, %c0_2] : memref<1x4x90x4xbf16, #tpu.memory_space<vmem>>, vector<1x1x72x4xbf16>
    %1 = vector.shape_cast %0 : vector<1x1x72x4xbf16> to vector<72x4xbf16>
    %c0_3 = arith.constant 0 : index
    %c0_4 = arith.constant 0 : index
    %c0_5 = arith.constant 0 : index
    %2 = vector.load %arg3[%c0_3, %c0_4, %c0_5] : memref<9x4x4xbf16, #tpu.memory_space<vmem>>, vector<1x4x4xbf16>
    %3 = vector.shape_cast %2 : vector<1x4x4xbf16> to vector<4x4xbf16>
    %cst = arith.constant dense<0.000000e+00> : vector<72x4xf32>
    %4 = tpu.matmul %1, %3, %cst {dimension_numbers = #tpu.dot_dimension_numbers<[1], [0], [0], [1], [0, 0, 1, 1], [], []>} : vector<72x4xbf16>, vector<4x4xbf16>, vector<72x4xf32> -> vector<72x4xf32>
    %c0_6 = arith.constant 0 : index
    %c0_7 = arith.constant 0 : index
    %5 = vector.load %arg6[%c0_6, %c0_7] : memref<72x4xf32, #tpu.memory_space<vmem>>, vector<72x4xf32>
    tpu.vector_store %arg6[%c0_6, %c0_7], %4 {strides = array<i32>} : memref<72x4xf32, #tpu.memory_space<vmem>>, vector<72x4xf32>,
    %c0_8 = arith.constant 0 : index
    %c1 = arith.constant 1 : index
    %c0_9 = arith.constant 0 : index
    %c0_10 = arith.constant 0 : index
    %6 = vector.load %arg2[%c0_8, %c1, %c0_9, %c0_10] : memref<1x4x90x4xbf16, #tpu.memory_space<vmem>>, vector<1x1x72x4xbf16>
    %7 = vector.shape_cast %6 : vector<1x1x72x4xbf16> to vector<72x4xbf16>
    %c1_11 = arith.constant 1 : index
    %c0_12 = arith.constant 0 : index
    %c0_13 = arith.constant 0 : index
    %8 = vector.load %arg3[%c1_11, %c0_12, %c0_13] : memref<9x4x4xbf16, #tpu.memory_space<vmem>>, vector<1x4x4xbf16>
    %9 = vector.shape_cast %8 : vector<1x4x4xbf16> to vector<4x4xbf16>
    %cst_14 = arith.constant dense<0.000000e+00> : vector<72x4xf32>
    %10 = tpu.matmul %7, %9, %cst_14 {dimension_numbers = #tpu.dot_dimension_numbers<[1], [0], [0], [1], [0, 0, 1, 1], [], []>} : vector<72x4xbf16>, vector<4x4xbf16>, vector<72x4xf32> -> vector<72x4xf32>
    %c0_15 = arith.constant 0 : index
    %c0_16 = arith.constant 0 : index
    %11 = vector.load %arg6[%c0_15, %c0_16] : memref<72x4xf32, #tpu.memory_space<vmem>>, vector<72x4xf32>
    %12 = arith.addf %11, %10 : vector<72x4xf32>
    %c0_17 = arith.constant 0 : index
    %c0_18 = arith.constant 0 : index
    %13 = vector.load %arg6[%c0_17, %c0_18] : memref<72x4xf32, #tpu.memory_space<vmem>>, vector<72x4xf32>
    tpu.vector_store %arg6[%c0_17, %c0_18], %12 {strides = array<i32>} : memref<72x4xf32, #tpu.memory_space<vmem>>, vector<72x4xf32>,
    %c0_19 = arith.constant 0 : index
    %c0_20 = arith.constant 0 : index
    %c1_21 = arith.constant 1 : index
    %c0_22 = arith.constant 0 : index
    %14 = vector.load %arg2[%c0_19, %c0_20, %c1_21, %c0_22] : memref<1x4x90x4xbf16, #tpu.memory_space<vmem>>, vector<1x1x72x4xbf16>
    %15 = vector.shape_cast %14 : vector<1x1x72x4xbf16> to vector<72x4xbf16>
    %c2 = arith.constant 2 : index
    %c0_23 = arith.constant 0 : index
    %c0_24 = arith.constant 0 : index
    %16 = vector.load %arg3[%c2, %c0_23, %c0_24] : memref<9x4x4xbf16, #tpu.memory_space<vmem>>, vector<1x4x4xbf16>
    %17 = vector.shape_cast %16 : vector<1x4x4xbf16> to vector<4x4xbf16>
    %cst_25 = arith.constant dense<0.000000e+00> : vector<72x4xf32>
    %18 = tpu.matmul %15, %17, %cst_25 {dimension_numbers = #tpu.dot_dimension_numbers<[1], [0], [0], [1], [0, 0, 1, 1], [], []>} : vector<72x4xbf16>, vector<4x4xbf16>, vector<72x4xf32> -> vector<72x4xf32>
    %c0_26 = arith.constant 0 : index
    %c0_27 = arith.constant 0 : index
    %19 = vector.load %arg6[%c0_26, %c0_27] : memref<72x4xf32, #tpu.memory_space<vmem>>, vector<72x4xf32>
    %20 = arith.addf %19, %18 : vector<72x4xf32>
    %c0_28 = arith.constant 0 : index
    %c0_29 = arith.constant 0 : index
    %21 = vector.load %arg6[%c0_28, %c0_29] : memref<72x4xf32, #tpu.memory_space<vmem>>, vector<72x4xf32>
    tpu.vector_store %arg6[%c0_28, %c0_29], %20 {strides = array<i32>} : memref<72x4xf32, #tpu.memory_space<vmem>>, vector<72x4xf32>,
    %c0_30 = arith.constant 0 : index
    %c2_31 = arith.constant 2 : index
    %c0_32 = arith.constant 0 : index
    %c0_33 = arith.constant 0 : index
    %22 = vector.load %arg2[%c0_30, %c2_31, %c0_32, %c0_33] : memref<1x4x90x4xbf16, #tpu.memory_space<vmem>>, vector<1x1x72x4xbf16>
    %23 = vector.shape_cast %22 : vector<1x1x72x4xbf16> to vector<72x4xbf16>
    %c3 = arith.constant 3 : index
    %c0_34 = arith.constant 0 : index
    %c0_35 = arith.constant 0 : index
    %24 = vector.load %arg3[%c3, %c0_34, %c0_35] : memref<9x4x4xbf16, #tpu.memory_space<vmem>>, vector<1x4x4xbf16>
    %25 = vector.shape_cast %24 : vector<1x4x4xbf16> to vector<4x4xbf16>
    %cst_36 = arith.constant dense<0.000000e+00> : vector<72x4xf32>
    %26 = tpu.matmul %23, %25, %cst_36 {dimension_numbers = #tpu.dot_dimension_numbers<[1], [0], [0], [1], [0, 0, 1, 1], [], []>} : vector<72x4xbf16>, vector<4x4xbf16>, vector<72x4xf32> -> vector<72x4xf32>
    %c0_37 = arith.constant 0 : index
    %c0_38 = arith.constant 0 : index
    %27 = vector.load %arg6[%c0_37, %c0_38] : memref<72x4xf32, #tpu.memory_space<vmem>>, vector<72x4xf32>
    %28 = arith.addf %27, %26 : vector<72x4xf32>
    %c0_39 = arith.constant 0 : index
    %c0_40 = arith.constant 0 : index
    %29 = vector.load %arg6[%c0_39, %c0_40] : memref<72x4xf32, #tpu.memory_space<vmem>>, vector<72x4xf32>
    tpu.vector_store %arg6[%c0_39, %c0_40], %28 {strides = array<i32>} : memref<72x4xf32, #tpu.memory_space<vmem>>, vector<72x4xf32>,
    %c0_41 = arith.constant 0 : index
    %c3_42 = arith.constant 3 : index
    %c0_43 = arith.constant 0 : index
    %c0_44 = arith.constant 0 : index
    %30 = vector.load %arg2[%c0_41, %c3_42, %c0_43, %c0_44] : memref<1x4x90x4xbf16, #tpu.memory_space<vmem>>, vector<1x1x72x4xbf16>
    %31 = vector.shape_cast %30 : vector<1x1x72x4xbf16> to vector<72x4xbf16>
    %c4 = arith.constant 4 : index
    %c0_45 = arith.constant 0 : index
    %c0_46 = arith.constant 0 : index
    %32 = vector.load %arg3[%c4, %c0_45, %c0_46] : memref<9x4x4xbf16, #tpu.memory_space<vmem>>, vector<1x4x4xbf16>
    %33 = vector.shape_cast %32 : vector<1x4x4xbf16> to vector<4x4xbf16>
    %cst_47 = arith.constant dense<0.000000e+00> : vector<72x4xf32>
    %34 = tpu.matmul %31, %33, %cst_47 {dimension_numbers = #tpu.dot_dimension_numbers<[1], [0], [0], [1], [0, 0, 1, 1], [], []>} : vector<72x4xbf16>, vector<4x4xbf16>, vector<72x4xf32> -> vector<72x4xf32>
    %c0_48 = arith.constant 0 : index
    %c0_49 = arith.constant 0 : index
    %35 = vector.load %arg6[%c0_48, %c0_49] : memref<72x4xf32, #tpu.memory_space<vmem>>, vector<72x4xf32>
    %36 = arith.addf %35, %34 : vector<72x4xf32>
    %c0_50 = arith.constant 0 : index
    %c0_51 = arith.constant 0 : index
    %37 = vector.load %arg6[%c0_50, %c0_51] : memref<72x4xf32, #tpu.memory_space<vmem>>, vector<72x4xf32>
    tpu.vector_store %arg6[%c0_50, %c0_51], %36 {strides = array<i32>} : memref<72x4xf32, #tpu.memory_space<vmem>>, vector<72x4xf32>,
    %c0_52 = arith.constant 0 : index
    %c2_53 = arith.constant 2 : index
    %c1_54 = arith.constant 1 : index
    %c0_55 = arith.constant 0 : index
    %38 = vector.load %arg2[%c0_52, %c2_53, %c1_54, %c0_55] : memref<1x4x90x4xbf16, #tpu.memory_space<vmem>>, vector<1x1x72x4xbf16>
    %39 = vector.shape_cast %38 : vector<1x1x72x4xbf16> to vector<72x4xbf16>
    %c5 = arith.constant 5 : index
    %c0_56 = arith.constant 0 : index
    %c0_57 = arith.constant 0 : index
    %40 = vector.load %arg3[%c5, %c0_56, %c0_57] : memref<9x4x4xbf16, #tpu.memory_space<vmem>>, vector<1x4x4xbf16>
    %41 = vector.shape_cast %40 : vector<1x4x4xbf16> to vector<4x4xbf16>
    %cst_58 = arith.constant dense<0.000000e+00> : vector<72x4xf32>
    %42 = tpu.matmul %39, %41, %cst_58 {dimension_numbers = #tpu.dot_dimension_numbers<[1], [0], [0], [1], [0, 0, 1, 1], [], []>} : vector<72x4xbf16>, vector<4x4xbf16>, vector<72x4xf32> -> vector<72x4xf32>
    %c0_59 = arith.constant 0 : index
    %c0_60 = arith.constant 0 : index
    %43 = vector.load %arg6[%c0_59, %c0_60] : memref<72x4xf32, #tpu.memory_space<vmem>>, vector<72x4xf32>
    %44 = arith.addf %43, %42 : vector<72x4xf32>
    %c0_61 = arith.constant 0 : index
    %c0_62 = arith.constant 0 : index
    %45 = vector.load %arg6[%c0_61, %c0_62] : memref<72x4xf32, #tpu.memory_space<vmem>>, vector<72x4xf32>
    tpu.vector_store %arg6[%c0_61, %c0_62], %44 {strides = array<i32>} : memref<72x4xf32, #tpu.memory_space<vmem>>, vector<72x4xf32>,
    %c0_63 = arith.constant 0 : index
    %c0_64 = arith.constant 0 : index
    %c9 = arith.constant 9 : index
    %c0_65 = arith.constant 0 : index
    %46 = vector.load %arg2[%c0_63, %c0_64, %c9, %c0_65] : memref<1x4x90x4xbf16, #tpu.memory_space<vmem>>, vector<1x1x72x4xbf16>
    %47 = vector.shape_cast %46 : vector<1x1x72x4xbf16> to vector<72x4xbf16>
    %c6 = arith.constant 6 : index
    %c0_66 = arith.constant 0 : index
    %c0_67 = arith.constant 0 : index
    %48 = vector.load %arg3[%c6, %c0_66, %c0_67] : memref<9x4x4xbf16, #tpu.memory_space<vmem>>, vector<1x4x4xbf16>
    %49 = vector.shape_cast %48 : vector<1x4x4xbf16> to vector<4x4xbf16>
    %cst_68 = arith.constant dense<0.000000e+00> : vector<72x4xf32>
    %50 = tpu.matmul %47, %49, %cst_68 {dimension_numbers = #tpu.dot_dimension_numbers<[1], [0], [0], [1], [0, 0, 1, 1], [], []>} : vector<72x4xbf16>, vector<4x4xbf16>, vector<72x4xf32> -> vector<72x4xf32>
    %c0_69 = arith.constant 0 : index
    %c0_70 = arith.constant 0 : index
    %51 = vector.load %arg6[%c0_69, %c0_70] : memref<72x4xf32, #tpu.memory_space<vmem>>, vector<72x4xf32>
    %52 = arith.addf %51, %50 : vector<72x4xf32>
    %c0_71 = arith.constant 0 : index
    %c0_72 = arith.constant 0 : index
    %53 = vector.load %arg6[%c0_71, %c0_72] : memref<72x4xf32, #tpu.memory_space<vmem>>, vector<72x4xf32>
    tpu.vector_store %arg6[%c0_71, %c0_72], %52 {strides = array<i32>} : memref<72x4xf32, #tpu.memory_space<vmem>>, vector<72x4xf32>,
    %c0_73 = arith.constant 0 : index
    %c1_74 = arith.constant 1 : index
    %c9_75 = arith.constant 9 : index
    %c0_76 = arith.constant 0 : index
    %54 = vector.load %arg2[%c0_73, %c1_74, %c9_75, %c0_76] : memref<1x4x90x4xbf16, #tpu.memory_space<vmem>>, vector<1x1x72x4xbf16>
    %55 = vector.shape_cast %54 : vector<1x1x72x4xbf16> to vector<72x4xbf16>
    %c7 = arith.constant 7 : index
    %c0_77 = arith.constant 0 : index
    %c0_78 = arith.constant 0 : index
    %56 = vector.load %arg3[%c7, %c0_77, %c0_78] : memref<9x4x4xbf16, #tpu.memory_space<vmem>>, vector<1x4x4xbf16>
    %57 = vector.shape_cast %56 : vector<1x4x4xbf16> to vector<4x4xbf16>
    %cst_79 = arith.constant dense<0.000000e+00> : vector<72x4xf32>
    %58 = tpu.matmul %55, %57, %cst_79 {dimension_numbers = #tpu.dot_dimension_numbers<[1], [0], [0], [1], [0, 0, 1, 1], [], []>} : vector<72x4xbf16>, vector<4x4xbf16>, vector<72x4xf32> -> vector<72x4xf32>
    %c0_80 = arith.constant 0 : index
    %c0_81 = arith.constant 0 : index
    %59 = vector.load %arg6[%c0_80, %c0_81] : memref<72x4xf32, #tpu.memory_space<vmem>>, vector<72x4xf32>
    %60 = arith.addf %59, %58 : vector<72x4xf32>
    %c0_82 = arith.constant 0 : index
    %c0_83 = arith.constant 0 : index
    %61 = vector.load %arg6[%c0_82, %c0_83] : memref<72x4xf32, #tpu.memory_space<vmem>>, vector<72x4xf32>
    tpu.vector_store %arg6[%c0_82, %c0_83], %60 {strides = array<i32>} : memref<72x4xf32, #tpu.memory_space<vmem>>, vector<72x4xf32>,
    %c0_84 = arith.constant 0 : index
    %c0_85 = arith.constant 0 : index
    %c10 = arith.constant 10 : index
    %c0_86 = arith.constant 0 : index
    %62 = vector.load %arg2[%c0_84, %c0_85, %c10, %c0_86] : memref<1x4x90x4xbf16, #tpu.memory_space<vmem>>, vector<1x1x72x4xbf16>
    %63 = vector.shape_cast %62 : vector<1x1x72x4xbf16> to vector<72x4xbf16>
    %c8 = arith.constant 8 : index
    %c0_87 = arith.constant 0 : index
    %c0_88 = arith.constant 0 : index
    %64 = vector.load %arg3[%c8, %c0_87, %c0_88] : memref<9x4x4xbf16, #tpu.memory_space<vmem>>, vector<1x4x4xbf16>
    %65 = vector.shape_cast %64 : vector<1x4x4xbf16> to vector<4x4xbf16>
    %cst_89 = arith.constant dense<0.000000e+00> : vector<72x4xf32>
    %66 = tpu.matmul %63, %65, %cst_89 {dimension_numbers = #tpu.dot_dimension_numbers<[1], [0], [0], [1], [0, 0, 1, 1], [], []>} : vector<72x4xbf16>, vector<4x4xbf16>, vector<72x4xf32> -> vector<72x4xf32>
    %c0_90 = arith.constant 0 : index
    %c0_91 = arith.constant 0 : index
    %67 = vector.load %arg6[%c0_90, %c0_91] : memref<72x4xf32, #tpu.memory_space<vmem>>, vector<72x4xf32>
    %68 = arith.addf %67, %66 : vector<72x4xf32>
    %c0_92 = arith.constant 0 : index
    %c0_93 = arith.constant 0 : index
    %69 = vector.load %arg6[%c0_92, %c0_93] : memref<72x4xf32, #tpu.memory_space<vmem>>, vector<72x4xf32>
    tpu.vector_store %arg6[%c0_92, %c0_93], %68 {strides = array<i32>} : memref<72x4xf32, #tpu.memory_space<vmem>>, vector<72x4xf32>,
    %c0_94 = arith.constant 0 : index
    %c0_95 = arith.constant 0 : index
    %70 = vector.load %arg6[%c0_94, %c0_95] : memref<72x4xf32, #tpu.memory_space<vmem>>, vector<72x4xf32>
    %c0_96 = arith.constant 0 : index
    %c0_97 = arith.constant 0 : index
    %71 = vector.load %arg4[%c0_96, %c0_97] : memref<1x4xf32, #tpu.memory_space<vmem>>, vector<1x4xf32>
    %72 = vector.broadcast %71 : vector<1x4xf32> to vector<72x4xf32>
    %73 = arith.addf %70, %72 : vector<72x4xf32>
    %cst_98 = arith.constant 0.000000e+00 : f32
    %74 = vector.broadcast %cst_98 : f32 to vector<72x4xf32>
    %75 = arith.maximumf %73, %74 : vector<72x4xf32>
    %76 = vector.shape_cast %75 : vector<72x4xf32> to vector<8x9x4xf32>
    %77 = vector.extract_strided_slice %76 {offsets = [0, 0, 0], sizes = [8, 8, 4], strides = [1, 1, 1]} : vector<8x9x4xf32> to vector<8x8x4xf32>
    %78 = vector.shape_cast %77 : vector<8x8x4xf32> to vector<1x8x8x4xf32>
    %79 = arith.truncf %78 : vector<1x8x8x4xf32> to vector<1x8x8x4xbf16>
    %c0_99 = arith.constant 0 : index
    %c0_100 = arith.constant 0 : index
    %c0_101 = arith.constant 0 : index
    %c0_102 = arith.constant 0 : index
    %80 = vector.load %arg5[%c0_99, %c0_100, %c0_101, %c0_102] : memref<1x8x8x4xbf16, #tpu.memory_space<vmem>>, vector<1x8x8x4xbf16>
    tpu.vector_store %arg5[%c0_99, %c0_100, %c0_101, %c0_102], %79 {strides = array<i32>} : memref<1x8x8x4xbf16, #tpu.memory_space<vmem>>, vector<1x8x8x4xbf16>,
    return
  }
  func.func @transform_0(%arg0: i32, %arg1: i32) -> (i32, i32, i32, i32) {
    %c0_i32 = arith.constant 0 : i32
    %c0_i32_0 = arith.constant 0 : i32
    %c0_i32_1 = arith.constant 0 : i32
    %c0_i32_2 = arith.constant 0 : i32
    return %arg0, %c0_i32, %c0_i32_0, %c0_i32_1 : i32, i32, i32, i32
  }
  func.func @transform_1(%arg0: i32, %arg1: i32) -> (i32, i32, i32) {
    %c0_i32 = arith.constant 0 : i32
    %c0_i32_0 = arith.constant 0 : i32
    %c0_i32_1 = arith.constant 0 : i32
    return %c0_i32, %c0_i32_0, %arg1 : i32, i32, i32
  }
  func.func @transform_2(%arg0: i32, %arg1: i32) -> (i32, i32) {
    %c0_i32 = arith.constant 0 : i32
    %c0_i32_0 = arith.constant 0 : i32
    return %c0_i32, %arg1 : i32, i32
  }
  func.func @transform_3(%arg0: i32, %arg1: i32) -> (i32, i32, i32, i32) {
    %c0_i32 = arith.constant 0 : i32
    %c0_i32_0 = arith.constant 0 : i32
    %c0_i32_1 = arith.constant 0 : i32
    return %arg0, %c0_i32, %c0_i32_0, %arg1 : i32, i32, i32, i32
  }
}

module attributes {stable_mosaic.version = 11 : i64} {
  func.func @_mm_epilogue_kernel(%arg0: i32, %arg1: memref<64x4xbf16, #tpu.memory_space<vmem>>, %arg2: memref<4x16xbf16, #tpu.memory_space<vmem>>, %arg3: memref<1x16xf32, #tpu.memory_space<vmem>>, %arg4: memref<64x4xbf16, #tpu.memory_space<vmem>>, %arg5: memref<4x16xbf16, #tpu.memory_space<vmem>>, %arg6: memref<1x16xf32, #tpu.memory_space<vmem>>, %arg7: memref<64x16xf32, #tpu.memory_space<vmem>>) attributes {dimension_semantics = [#tpu.dimension_semantics<parallel>], iteration_bounds = array<i64: 2>, scalar_prefetch = 0 : i64, scratch_operands = 0 : i64, tpu.core_type = #tpu.core_type<tc>, window_params = [{transform_indices = @transform_0, window_bounds = array<i64: 64, 4>}, {pipeline_mode = #tpu.pipeline_mode<synchronous>, transform_indices = @transform_1, window_bounds = array<i64: 4, 16>}, {pipeline_mode = #tpu.pipeline_mode<synchronous>, transform_indices = @transform_2, window_bounds = array<i64: 1, 16>}, {transform_indices = @transform_3, window_bounds = array<i64: 64, 4>}, {pipeline_mode = #tpu.pipeline_mode<synchronous>, transform_indices = @transform_4, window_bounds = array<i64: 4, 16>}, {pipeline_mode = #tpu.pipeline_mode<synchronous>, transform_indices = @transform_5, window_bounds = array<i64: 1, 16>}, {transform_indices = @transform_6, window_bounds = array<i64: 64, 16>}]} {
    %c0 = arith.constant 0 : index
    %c0_0 = arith.constant 0 : index
    %0 = vector.load %arg1[%c0, %c0_0] : memref<64x4xbf16, #tpu.memory_space<vmem>>, vector<64x4xbf16>
    %c0_1 = arith.constant 0 : index
    %c0_2 = arith.constant 0 : index
    %1 = vector.load %arg2[%c0_1, %c0_2] : memref<4x16xbf16, #tpu.memory_space<vmem>>, vector<4x16xbf16>
    %cst = arith.constant dense<0.000000e+00> : vector<64x16xf32>
    %2 = tpu.matmul %0, %1, %cst {dimension_numbers = #tpu.dot_dimension_numbers<[1], [0], [0], [1], [0, 0, 1, 1], [], []>} : vector<64x4xbf16>, vector<4x16xbf16>, vector<64x16xf32> -> vector<64x16xf32>
    %c0_3 = arith.constant 0 : index
    %c0_4 = arith.constant 0 : index
    %3 = vector.load %arg3[%c0_3, %c0_4] : memref<1x16xf32, #tpu.memory_space<vmem>>, vector<1x16xf32>
    %4 = vector.broadcast %3 : vector<1x16xf32> to vector<64x16xf32>
    %5 = arith.addf %2, %4 : vector<64x16xf32>
    %c0_5 = arith.constant 0 : index
    %c0_6 = arith.constant 0 : index
    %6 = vector.load %arg4[%c0_5, %c0_6] : memref<64x4xbf16, #tpu.memory_space<vmem>>, vector<64x4xbf16>
    %c0_7 = arith.constant 0 : index
    %c0_8 = arith.constant 0 : index
    %7 = vector.load %arg5[%c0_7, %c0_8] : memref<4x16xbf16, #tpu.memory_space<vmem>>, vector<4x16xbf16>
    %cst_9 = arith.constant dense<0.000000e+00> : vector<64x16xf32>
    %8 = tpu.matmul %6, %7, %cst_9 {dimension_numbers = #tpu.dot_dimension_numbers<[1], [0], [0], [1], [0, 0, 1, 1], [], []>} : vector<64x4xbf16>, vector<4x16xbf16>, vector<64x16xf32> -> vector<64x16xf32>
    %9 = arith.addf %5, %8 : vector<64x16xf32>
    %c0_10 = arith.constant 0 : index
    %c0_11 = arith.constant 0 : index
    %10 = vector.load %arg6[%c0_10, %c0_11] : memref<1x16xf32, #tpu.memory_space<vmem>>, vector<1x16xf32>
    %11 = vector.broadcast %10 : vector<1x16xf32> to vector<64x16xf32>
    %12 = arith.addf %9, %11 : vector<64x16xf32>
    %cst_12 = arith.constant 0.000000e+00 : f32
    %13 = vector.broadcast %cst_12 : f32 to vector<64x16xf32>
    %14 = arith.maximumf %12, %13 : vector<64x16xf32>
    %c0_13 = arith.constant 0 : index
    %c0_14 = arith.constant 0 : index
    %15 = vector.load %arg7[%c0_13, %c0_14] : memref<64x16xf32, #tpu.memory_space<vmem>>, vector<64x16xf32>
    tpu.vector_store %arg7[%c0_13, %c0_14], %14 {strides = array<i32>} : memref<64x16xf32, #tpu.memory_space<vmem>>, vector<64x16xf32>,
    return
  }
  func.func @transform_0(%arg0: i32) -> (i32, i32) {
    %c0_i32 = arith.constant 0 : i32
    %c0_i32_0 = arith.constant 0 : i32
    return %arg0, %c0_i32 : i32, i32
  }
  func.func @transform_1(%arg0: i32) -> (i32, i32) {
    %c0_i32 = arith.constant 0 : i32
    %c0_i32_0 = arith.constant 0 : i32
    %c0_i32_1 = arith.constant 0 : i32
    return %c0_i32, %c0_i32_0 : i32, i32
  }
  func.func @transform_2(%arg0: i32) -> (i32, i32) {
    %c0_i32 = arith.constant 0 : i32
    %c0_i32_0 = arith.constant 0 : i32
    %c0_i32_1 = arith.constant 0 : i32
    return %c0_i32, %c0_i32_0 : i32, i32
  }
  func.func @transform_3(%arg0: i32) -> (i32, i32) {
    %c0_i32 = arith.constant 0 : i32
    %c0_i32_0 = arith.constant 0 : i32
    return %arg0, %c0_i32 : i32, i32
  }
  func.func @transform_4(%arg0: i32) -> (i32, i32) {
    %c0_i32 = arith.constant 0 : i32
    %c0_i32_0 = arith.constant 0 : i32
    %c0_i32_1 = arith.constant 0 : i32
    return %c0_i32, %c0_i32_0 : i32, i32
  }
  func.func @transform_5(%arg0: i32) -> (i32, i32) {
    %c0_i32 = arith.constant 0 : i32
    %c0_i32_0 = arith.constant 0 : i32
    %c0_i32_1 = arith.constant 0 : i32
    return %c0_i32, %c0_i32_0 : i32, i32
  }
  func.func @transform_6(%arg0: i32) -> (i32, i32) {
    %c0_i32 = arith.constant 0 : i32
    %c0_i32_0 = arith.constant 0 : i32
    return %arg0, %c0_i32 : i32, i32
  }
}

</mosaic_0001>

<llo_original>
// kernel: bottleneck_forward.3
$region0: #{bottleneck_forward.3}
  #allocation0 [shape = 'u32[]', space=smem, size = 0x4, offset = 0x4, fixed_abs, tag = 'smem constant byte address 0x4 - core index']
  #allocation1 [shape = 'u32[144,128]{1,0:T(1,128)}', space=vmem, size = 0x12000, scoped, tag = 'internal scratch']
  %s0 = inlined_call_operand.vmem [shape: bf16[512,4], index: 0, kind: input, shape index: {}]
  %s1 = inlined_call_operand.vmem [shape: bf16[4,4], index: 1, kind: input, shape index: {}]
  %s2 = inlined_call_operand.vmem [shape: f32[1,4], index: 2, kind: input, shape index: {}]
  %s3 = inlined_call_operand.vmem [shape: bf16[512,4], index: 3, kind: output, shape index: {}]
  %s4 = sld [smem:[#allocation0]]
  $region45: #{bottleneck_forward.3} parent=0
    _
  %s6 = ssub.s32 1, %s4
  %s7 = scalar_select 0, %s6, %s4
  loop: start=0, step=1, limit=4
  $region2: #{bottleneck_forward.3} parent=0 // loop_pre_header
    _
  $region3: #{bottleneck_forward.3} parent=0 // loop_header
    %s9 = sphi 0, %s13
    %p10 = scmp.ge.s32.totalorder %s9, 4
    %s19 = sphi 0, %s21
    %s22 = sphi 0, %s19
    %s23 = sphi 0, %s22
    %s39 = sphi 0, %s23
    %s43 = sphi 0, %s43
    %s45 = sphi 0, %s43
    %s46 = sphi 0, %s45
    %s60 = sphi 0, %s46
    %s64 = sphi 0, %s64
    %s66 = sphi 0, %s64
    %s67 = sphi 0, %s66
    %s81 = sphi 0, %s67
    %s87 = sphi 0, %s89
    %s90 = sphi 0, %s87
    %s91 = sphi 0, %s90
    %s107 = sphi 0, %s91
  $region4: #{bottleneck_forward.3} parent=0 // loop_header_branch
    %12 = sbr.rel (%p10) target = $region8
  $region5: #{bottleneck_forward.3} parent=0 // loop_body
    %s14 = ssub.s32 %s9, 1
    %s15 = ssub.s32 %s9, 2
    %s16 = sadd.s32 %s9, 1
    %s17 = ssub.s32 %s9, %s16
    %p18 = scmp.eq.s32.totalorder %s17, 0
    %s20 = sadd.s32 %s19, 1
    %s21 = scalar_select %p18, %s19, %s20
    %p24 = pneg %p18
    %p25 = scmp.eq.s32.totalorder %s9, 1
    %p26 = por %p24, %p25
    %p27 = scmp.ne.s32.totalorder %s19, %s22
    %p28 = scmp.eq.s32.totalorder %s9, 0
    %p29 = por %p27, %p28
    %p30 = scmp.ne.s32.totalorder %s19, %s22
    %p31 = scmp.eq.s32.totalorder %s14, 1
    %p32 = por %p30, %p31
    %p33 = scmp.ne.s32.totalorder %s22, %s23
    %p34 = scmp.eq.s32.totalorder %s14, 0
    %p35 = por %p33, %p34
    %p36 = scmp.ne.s32.totalorder %s22, %s23
    %p37 = scmp.eq.s32.totalorder %s15, 1
    %p38 = por %p36, %p37
    %p40 = scmp.ne.s32.totalorder %s23, %s39
    %p41 = scmp.eq.s32.totalorder %s15, 0
    %p42 = por %p40, %p41
    %s44 = sadd.s32 %s43, 1
    %p47 = scmp.eq.s32.totalorder %s9, 1
    %p48 = scmp.ne.s32.totalorder %s43, %s45
    %p49 = scmp.eq.s32.totalorder %s9, 0
    %p50 = por %p48, %p49
    %p51 = scmp.ne.s32.totalorder %s43, %s45
    %p52 = scmp.eq.s32.totalorder %s14, 1
    %p53 = por %p51, %p52
    %p54 = scmp.ne.s32.totalorder %s45, %s46
    %p55 = scmp.eq.s32.totalorder %s14, 0
    %p56 = por %p54, %p55
    %p57 = scmp.ne.s32.totalorder %s45, %s46
    %p58 = scmp.eq.s32.totalorder %s15, 1
    %p59 = por %p57, %p58
    %p61 = scmp.ne.s32.totalorder %s46, %s60
    %p62 = scmp.eq.s32.totalorder %s15, 0
    %p63 = por %p61, %p62
    %s65 = sadd.s32 %s64, 1
    %p68 = scmp.eq.s32.totalorder %s9, 1
    %p69 = scmp.ne.s32.totalorder %s64, %s66
    %p70 = scmp.eq.s32.totalorder %s9, 0
    %p71 = por %p69, %p70
    %p72 = scmp.ne.s32.totalorder %s64, %s66
    %p73 = scmp.eq.s32.totalorder %s14, 1
    %p74 = por %p72, %p73
    %p75 = scmp.ne.s32.totalorder %s66, %s67
    %p76 = scmp.eq.s32.totalorder %s14, 0
    %p77 = por %p75, %p76
    %p78 = scmp.ne.s32.totalorder %s66, %s67
    %p79 = scmp.eq.s32.totalorder %s15, 1
    %p80 = por %p78, %p79
    %p82 = scmp.ne.s32.totalorder %s67, %s81
    %p83 = scmp.eq.s32.totalorder %s15, 0
    %p84 = por %p82, %p83
    %s85 = ssub.s32 %s9, %s16
    %p86 = scmp.eq.s32.totalorder %s85, 0
    %s88 = sadd.s32 %s87, 1
    %s89 = scalar_select %p86, %s87, %s88
    %p92 = pneg %p86
    %p93 = scmp.eq.s32.totalorder %s9, 1
    %p94 = por %p92, %p93
    %p95 = scmp.ne.s32.totalorder %s87, %s90
    %p96 = scmp.eq.s32.totalorder %s9, 0
    %p97 = por %p95, %p96
    %p98 = scmp.ne.s32.totalorder %s87, %s90
    %p99 = scmp.eq.s32.totalorder %s14, 1
    %p100 = por %p98, %p99
    %p101 = scmp.ne.s32.totalorder %s90, %s91
    %p102 = scmp.eq.s32.totalorder %s14, 0
    %p103 = por %p101, %p102
    %p104 = scmp.ne.s32.totalorder %s90, %s91
    %p105 = scmp.eq.s32.totalorder %s15, 1
    %p106 = por %p104, %p105
    %p108 = scmp.ne.s32.totalorder %s91, %s107
    %p109 = scmp.eq.s32.totalorder %s15, 0
    %p110 = por %p108, %p109
    %p111 = scmp.le.s32.totalorder 1, %s9
    %p112 = scmp.lt.s32.totalorder %s9, 3
    %p113 = pnand %p111, %p112
    %p114 = pneg %p113
    // Predicated region
    $region9: #{bottleneck_forward.3} parent=5 // pred_check
      _
    $region10: #{bottleneck_forward.3} parent=5 // pred_check_branch
      %116 = sbr.rel (%p113) target = $region12
    $region11: #{bottleneck_forward.3} parent=5 // pred_region
      %s117 = ssub.s32 %s9, 1
      // Predicated region
      $region13: #{bottleneck_forward.3} parent=11 // pred_check
        %p118 = pneg %p56
      $region14: #{bottleneck_forward.3} parent=11 // pred_check_branch
        %120 = sbr.rel (%p118) target = $region16
      $region15: #{bottleneck_forward.3} parent=11 // pred_region
        _
      $region16: #{bottleneck_forward.3} parent=11 // pred_fallthru
        _
      // Predicated region
      $region17: #{bottleneck_forward.3} parent=11 // pred_check
        %p121 = pneg %p77
      $region18: #{bottleneck_forward.3} parent=11 // pred_check_branch
        %123 = sbr.rel (%p121) target = $region20
      $region19: #{bottleneck_forward.3} parent=11 // pred_region
        _
      $region20: #{bottleneck_forward.3} parent=11 // pred_fallthru
        _
    $region12: #{bottleneck_forward.3} parent=5 // pred_fallthru
      _
    %p124 = scmp.lt.s32.totalorder %s9, 2
    // Predicated region
    $region21: #{bottleneck_forward.3} parent=5 // pred_check
      %p125 = pneg %p124
    $region22: #{bottleneck_forward.3} parent=5 // pred_check_branch
      %127 = sbr.rel (%p125) target = $region24
    $region23: #{bottleneck_forward.3} parent=5 // pred_region
      // Predicated region
      $region25: #{bottleneck_forward.3} parent=23 // pred_check
        %p128 = pneg %p29
      $region26: #{bottleneck_forward.3} parent=23 // pred_check_branch
        %130 = sbr.rel (%p128) target = $region28
      $region27: #{bottleneck_forward.3} parent=23 // pred_region
        %s131 = smul.u32 32, %s9
        %p132 = scmp.lt.s32.totalorder %s131, 63
        %s133 = scalar_select %p132, %s131, 63
        %s134 = smul.addr %s133, 4
        %s135 = scalar_lea.vmem %s0, %s134
        %s136 = smul.u32 32, %s9
      $region28: #{bottleneck_forward.3} parent=23 // pred_fallthru
        _
    $region24: #{bottleneck_forward.3} parent=5 // pred_fallthru
      _
    %p137 = scmp.le.s32.totalorder 1, %s9
    %p138 = scmp.lt.s32.totalorder %s9, 3
    %p139 = pnand %p137, %p138
    %p140 = pneg %p139
    // Predicated region
    $region29: #{bottleneck_forward.3} parent=5 // pred_check
      _
    $region30: #{bottleneck_forward.3} parent=5 // pred_check_branch
      %142 = sbr.rel (%p139) target = $region32
    $region31: #{bottleneck_forward.3} parent=5 // pred_region
      %s143 = ssub.s32 %s9, 1
      %s144 = smul.u32 32, %s14
      %p145 = scmp.lt.s32.totalorder %s144, 63
      %s146 = scalar_select %p145, %s144, 63
      %s147 = smul.addr %s146, 4
      %s148 = scalar_lea.vmem %s0, %s147
      %p149 = pneg %p35
      %p150 = pneg %p32
      %p151 = pneg %p56
      %p152 = pneg %p53
      %p153 = pneg %p77
      %p154 = pneg %p74
      %p155 = pneg %p103
      %p156 = pneg %p100
      %s157 = smul.u32 32, %s14
      %p158 = scmp.lt.s32.totalorder %s157, 63
      %s159 = scalar_select %p158, %s157, 63
      %s160 = smul.addr %s159, 4
      %s161 = scalar_lea.vmem %s3, %s160
      %s162 = smul.u32 32, %s14
      %p163 = scmp.lt.s32.totalorder %s162, 63
      %s164 = scalar_select %p163, %s162, 63
      %s165 = smul.addr %s164, 4
      %s166 = scalar_lea.vmem %s0, %s165
      %s167 = smul.u32 32, %s14
      %s168 = smul.u32 32, %s14
      %p169 = scmp.lt.s32.totalorder %s168, 63
      %s170 = scalar_select %p169, %s168, 63
      %s171 = smul.addr %s170, 4
      %s172 = scalar_lea.vmem %s3, %s171
      %s173 = smul.u32 32, %s14
      %v175 = vld [vmem:[%s166] sm:$0xf]
      %v176 = vld [vmem:[%s166 + $0x4] sm:$0xf]
      %v177 = vld [vmem:[%s166 + $0x8] sm:$0xf]
      %v178 = vld [vmem:[%s166 + $0xc] sm:$0xf]
      %v179 = vld [vmem:[%s166 + $0x10] sm:$0xf]
      %v180 = vld [vmem:[%s166 + $0x14] sm:$0xf]
      %v181 = vld [vmem:[%s166 + $0x18] sm:$0xf]
      %v182 = vld [vmem:[%s166 + $0x1c] sm:$0xf]
      %v183 = vld [vmem:[%s166 + $0x20] sm:$0xf]
      %v184 = vld [vmem:[%s166 + $0x24] sm:$0xf]
      %v185 = vld [vmem:[%s166 + $0x28] sm:$0xf]
      %v186 = vld [vmem:[%s166 + $0x2c] sm:$0xf]
      %v187 = vld [vmem:[%s166 + $0x30] sm:$0xf]
      %v188 = vld [vmem:[%s166 + $0x34] sm:$0xf]
      %v189 = vld [vmem:[%s166 + $0x38] sm:$0xf]
      %v190 = vld [vmem:[%s166 + $0x3c] sm:$0xf]
      %v191 = vld [vmem:[%s166 + $0x40] sm:$0xf]
      %v192 = vld [vmem:[%s166 + $0x44] sm:$0xf]
      %v193 = vld [vmem:[%s166 + $0x48] sm:$0xf]
      %v194 = vld [vmem:[%s166 + $0x4c] sm:$0xf]
      %v195 = vld [vmem:[%s166 + $0x50] sm:$0xf]
      %v196 = vld [vmem:[%s166 + $0x54] sm:$0xf]
      %v197 = vld [vmem:[%s166 + $0x58] sm:$0xf]
      %v198 = vld [vmem:[%s166 + $0x5c] sm:$0xf]
      %v199 = vld [vmem:[%s166 + $0x60] sm:$0xf]
      %v200 = vld [vmem:[%s166 + $0x64] sm:$0xf]
      %v201 = vld [vmem:[%s166 + $0x68] sm:$0xf]
      %v202 = vld [vmem:[%s166 + $0x6c] sm:$0xf]
      %v203 = vld [vmem:[%s166 + $0x70] sm:$0xf]
      %v204 = vld [vmem:[%s166 + $0x74] sm:$0xf]
      %v205 = vld [vmem:[%s166 + $0x78] sm:$0xf]
      %v206 = vld [vmem:[%s166 + $0x7c] sm:$0xf]
      %v207 = vld [vmem:[%s1] sm:$0x3]
      %v208 = vld [vmem:[%s2] sm:$0x1]
      %v210 = vlaneseq
      %v211 = vshrl.u32 %v210, 7
      %v212 = vsub.s32 0, %v211
      %v213 = vrot.slane %v208, %v212
      %v247 = vunpack.c.l.b16 %v175
      %v248 = vunpack.c.l.b16 %v176
      %v249 = vunpack.c.l.b16 %v177
      %v250 = vunpack.c.l.b16 %v178
      %v251 = vunpack.c.l.b16 %v179
      %v252 = vunpack.c.l.b16 %v180
      %v253 = vunpack.c.l.b16 %v181
      %v254 = vunpack.c.l.b16 %v182
      %v255 = vunpack.c.l.b16 %v183
      %v256 = vunpack.c.l.b16 %v184
      %v257 = vunpack.c.l.b16 %v185
      %v258 = vunpack.c.l.b16 %v186
      %v259 = vunpack.c.l.b16 %v187
      %v260 = vunpack.c.l.b16 %v188
      %v261 = vunpack.c.l.b16 %v189
      %v262 = vunpack.c.l.b16 %v190
      %v263 = vunpack.c.l.b16 %v191
      %v264 = vunpack.c.l.b16 %v192
      %v265 = vunpack.c.l.b16 %v193
      %v266 = vunpack.c.l.b16 %v194
      %v267 = vunpack.c.l.b16 %v195
      %v268 = vunpack.c.l.b16 %v196
      %v269 = vunpack.c.l.b16 %v197
      %v270 = vunpack.c.l.b16 %v198
      %v271 = vunpack.c.l.b16 %v199
      %v272 = vunpack.c.l.b16 %v200
      %v273 = vunpack.c.l.b16 %v201
      %v274 = vunpack.c.l.b16 %v202
      %v275 = vunpack.c.l.b16 %v203
      %v276 = vunpack.c.l.b16 %v204
      %v277 = vunpack.c.l.b16 %v205
      %v278 = vunpack.c.l.b16 %v206
      %v279 = vpack.c.b16 %v248, %v247
      %v280 = vpack.c.b16 %v250, %v249
      %v281 = vpack.c.b16 %v252, %v251
      %v282 = vpack.c.b16 %v254, %v253
      %v283 = vpack.c.b16 %v256, %v255
      %v284 = vpack.c.b16 %v258, %v257
      %v285 = vpack.c.b16 %v260, %v259
      %v286 = vpack.c.b16 %v262, %v261
      %v287 = vpack.c.b16 %v264, %v263
      %v288 = vpack.c.b16 %v266, %v265
      %v289 = vpack.c.b16 %v268, %v267
      %v290 = vpack.c.b16 %v270, %v269
      %v291 = vpack.c.b16 %v272, %v271
      %v292 = vpack.c.b16 %v274, %v273
      %v293 = vpack.c.b16 %v276, %v275
      %v294 = vpack.c.b16 %v278, %v277
      %vm295 = vcmask 31744
      %v297 = vsel %vm295, %v279, 0
      %v300 = vsel %vm295, %v280, 0
      %v303 = vsel %vm295, %v281, 0
      %v306 = vsel %vm295, %v282, 0
      %v309 = vsel %vm295, %v283, 0
      %v312 = vsel %vm295, %v284, 0
      %v315 = vsel %vm295, %v285, 0
      %v318 = vsel %vm295, %v286, 0
      %v321 = vsel %vm295, %v287, 0
      %v324 = vsel %vm295, %v288, 0
      %v327 = vsel %vm295, %v289, 0
      %v330 = vsel %vm295, %v290, 0
      %v333 = vsel %vm295, %v291, 0
      %v336 = vsel %vm295, %v292, 0
      %v339 = vsel %vm295, %v293, 0
      %v342 = vsel %vm295, %v294, 0
      %vm344 = vcmask 1041408
      %v346 = vsel %vm344, %v207, 0
      %348 = vmatprep.subr.bf16.mxu0 0
      %349 = vmatpush1.bf16.msra.mxu0 0
      %350 = vmatprep.subr.bf16.mxu0 0
      %351 = vmatpush1.bf16.msra.mxu0 0
      %352 = vmatprep.subr.bf16.mxu0 0
      %353 = vmatpush1.bf16.msra.mxu0 0
      %354 = vmatprep.subr.bf16.mxu0 0
      %355 = vmatpush1.bf16.msra.mxu0 0
      %356 = vmatprep.subr.bf16.mxu0 0
      %357 = vmatpush1.bf16.msra.mxu0 0
      %358 = vmatprep.subr.bf16.mxu0 0
      %359 = vmatpush1.bf16.msra.mxu0 0
      %360 = vmatprep.subr.bf16.mxu0 0
      %361 = vmatpush1.bf16.msra.mxu0 0
      %362 = vmatprep.subr.bf16.mxu0 0
      %363 = vmatpush1.bf16.msra.mxu0 %v346
      %364 = vmatprep.subr.bf16.mxu0 0
      %365 = vmatpush2.bf16.msra.mxu0 0
      %366 = vmatprep.subr.bf16.mxu0 0
      %367 = vmatpush2.bf16.msra.mxu0 0
      %368 = vmatprep.subr.bf16.mxu0 0
      %369 = vmatpush2.bf16.msra.mxu0 0
      %370 = vmatprep.subr.bf16.mxu0 0
      %371 = vmatpush2.bf16.msra.mxu0 0
      %372 = vmatprep.subr.bf16.mxu0 0
      %373 = vmatpush2.bf16.msra.mxu0 0
      %374 = vmatprep.subr.bf16.mxu0 0
      %375 = vmatpush2.bf16.msra.mxu0 0
      %376 = vmatprep.subr.bf16.mxu0 0
      %377 = vmatpush2.bf16.msra.mxu0 0
      %378 = vmatprep.subr.bf16.mxu0 0
      %379 = vmatpush2.bf16.msra.mxu0 0
      %380 = vmatprep.mubr.bf16.mxu0 0
      %381 = vmatmul.mubr.bf16.gmra.mxu0 %v297
      %v382 = vpop.f32.mrf.mxu0
      %v383 = vadd.f32 %v213, %v382
      %v384 = vpop.f32.mrf.mxu0
      %v385 = vpop.f32.mrf.mxu0
      %v386 = vadd.f32 %v213, %v385
      %v387 = vpop.f32.mrf.mxu0
      %388 = vmatprep.mubr.bf16.mxu0 0
      %389 = vmatmul.mubr.bf16.gmra.mxu0 %v300
      %v390 = vpop.f32.mrf.mxu0
      %v391 = vadd.f32 %v213, %v390
      %v392 = vpop.f32.mrf.mxu0
      %v393 = vpop.f32.mrf.mxu0
      %v394 = vadd.f32 %v213, %v393
      %v395 = vpop.f32.mrf.mxu0
      %396 = vmatprep.mubr.bf16.mxu0 0
      %397 = vmatmul.mubr.bf16.gmra.mxu0 %v303
      %v398 = vpop.f32.mrf.mxu0
      %v399 = vadd.f32 %v213, %v398
      %v400 = vpop.f32.mrf.mxu0
      %v401 = vpop.f32.mrf.mxu0
      %v402 = vadd.f32 %v213, %v401
      %v403 = vpop.f32.mrf.mxu0
      %404 = vmatprep.mubr.bf16.mxu0 0
      %405 = vmatmul.mubr.bf16.gmra.mxu0 %v306
      %v406 = vpop.f32.mrf.mxu0
      %v407 = vadd.f32 %v213, %v406
      %v408 = vpop.f32.mrf.mxu0
      %v409 = vpop.f32.mrf.mxu0
      %v410 = vadd.f32 %v213, %v409
      %v411 = vpop.f32.mrf.mxu0
      %412 = vmatprep.mubr.bf16.mxu0 0
      %413 = vmatmul.mubr.bf16.gmra.mxu0 %v309
      %v414 = vpop.f32.mrf.mxu0
      %v415 = vadd.f32 %v213, %v414
      %v416 = vpop.f32.mrf.mxu0
      %v417 = vpop.f32.mrf.mxu0
      %v418 = vadd.f32 %v213, %v417
      %v419 = vpop.f32.mrf.mxu0
      %420 = vmatprep.mubr.bf16.mxu0 0
      %421 = vmatmul.mubr.bf16.gmra.mxu0 %v312
      %v422 = vpop.f32.mrf.mxu0
      %v423 = vadd.f32 %v213, %v422
      %v424 = vpop.f32.mrf.mxu0
      %v425 = vpop.f32.mrf.mxu0
      %v426 = vadd.f32 %v213, %v425
      %v427 = vpop.f32.mrf.mxu0
      %428 = vmatprep.mubr.bf16.mxu0 0
      %429 = vmatmul.mubr.bf16.gmra.mxu0 %v315
      %v430 = vpop.f32.mrf.mxu0
      %v431 = vadd.f32 %v213, %v430
      %v432 = vpop.f32.mrf.mxu0
      %v433 = vpop.f32.mrf.mxu0
      %v434 = vadd.f32 %v213, %v433
      %v435 = vpop.f32.mrf.mxu0
      %436 = vmatprep.mubr.bf16.mxu0 0
      %437 = vmatmul.mubr.bf16.gmra.mxu0 %v318
      %v438 = vpop.f32.mrf.mxu0
      %v439 = vadd.f32 %v213, %v438
      %v440 = vpop.f32.mrf.mxu0
      %v441 = vpop.f32.mrf.mxu0
      %v442 = vadd.f32 %v213, %v441
      %v443 = vpop.f32.mrf.mxu0
      %444 = vmatprep.mubr.bf16.mxu0 0
      %445 = vmatmul.mubr.bf16.gmra.mxu0 %v321
      %v446 = vpop.f32.mrf.mxu0
      %v447 = vadd.f32 %v213, %v446
      %v448 = vpop.f32.mrf.mxu0
      %v449 = vpop.f32.mrf.mxu0
      %v450 = vadd.f32 %v213, %v449
      %v451 = vpop.f32.mrf.mxu0
      %452 = vmatprep.mubr.bf16.mxu0 0
      %453 = vmatmul.mubr.bf16.gmra.mxu0 %v324
      %v454 = vpop.f32.mrf.mxu0
      %v455 = vadd.f32 %v213, %v454
      %v456 = vpop.f32.mrf.mxu0
      %v457 = vpop.f32.mrf.mxu0
      %v458 = vadd.f32 %v213, %v457
      %v459 = vpop.f32.mrf.mxu0
      %460 = vmatprep.mubr.bf16.mxu0 0
      %461 = vmatmul.mubr.bf16.gmra.mxu0 %v327
      %v462 = vpop.f32.mrf.mxu0
      %v463 = vadd.f32 %v213, %v462
      %v464 = vpop.f32.mrf.mxu0
      %v465 = vpop.f32.mrf.mxu0
      %v466 = vadd.f32 %v213, %v465
      %v467 = vpop.f32.mrf.mxu0
      %468 = vmatprep.mubr.bf16.mxu0 0
      %469 = vmatmul.mubr.bf16.gmra.mxu0 %v330
      %v470 = vpop.f32.mrf.mxu0
      %v471 = vadd.f32 %v213, %v470
      %v472 = vpop.f32.mrf.mxu0
      %v473 = vpop.f32.mrf.mxu0
      %v474 = vadd.f32 %v213, %v473
      %v475 = vpop.f32.mrf.mxu0
      %476 = vmatprep.mubr.bf16.mxu0 0
      %477 = vmatmul.mubr.bf16.gmra.mxu0 %v333
      %v478 = vpop.f32.mrf.mxu0
      %v479 = vadd.f32 %v213, %v478
      %v480 = vpop.f32.mrf.mxu0
      %v481 = vpop.f32.mrf.mxu0
      %v482 = vadd.f32 %v213, %v481
      %v483 = vpop.f32.mrf.mxu0
      %484 = vmatprep.mubr.bf16.mxu0 0
      %485 = vmatmul.mubr.bf16.gmra.mxu0 %v336
      %v486 = vpop.f32.mrf.mxu0
      %v487 = vadd.f32 %v213, %v486
      %v488 = vpop.f32.mrf.mxu0
      %v489 = vpop.f32.mrf.mxu0
      %v490 = vadd.f32 %v213, %v489
      %v491 = vpop.f32.mrf.mxu0
      %492 = vmatprep.mubr.bf16.mxu0 0
      %493 = vmatmul.mubr.bf16.gmra.mxu0 %v339
      %v494 = vpop.f32.mrf.mxu0
      %v495 = vadd.f32 %v213, %v494
      %v496 = vpop.f32.mrf.mxu0
      %v497 = vpop.f32.mrf.mxu0
      %v498 = vadd.f32 %v213, %v497
      %v499 = vpop.f32.mrf.mxu0
      %500 = vmatprep.mubr.bf16.mxu0 0
      %501 = vmatmul.mubr.bf16.gmra.mxu0 %v342
      %v502 = vpop.f32.mrf.mxu0
      %v503 = vadd.f32 %v213, %v502
      %v504 = vpop.f32.mrf.mxu0
      %v505 = vpop.f32.mrf.mxu0
      %v506 = vadd.f32 %v213, %v505
      %v507 = vpop.f32.mrf.mxu0
      %508 = vdwg.mxu0
      %v509 = vmax.f32 %v383, 0.0
      %v510 = vmax.f32 %v386, 0.0
      %v511 = vmax.f32 %v391, 0.0
      %v512 = vmax.f32 %v394, 0.0
      %v513 = vmax.f32 %v399, 0.0
      %v514 = vmax.f32 %v402, 0.0
      %v515 = vmax.f32 %v407, 0.0
      %v516 = vmax.f32 %v410, 0.0
      %v517 = vmax.f32 %v415, 0.0
      %v518 = vmax.f32 %v418, 0.0
      %v519 = vmax.f32 %v423, 0.0
      %v520 = vmax.f32 %v426, 0.0
      %v521 = vmax.f32 %v431, 0.0
      %v522 = vmax.f32 %v434, 0.0
      %v523 = vmax.f32 %v439, 0.0
      %v524 = vmax.f32 %v442, 0.0
      %v525 = vmax.f32 %v447, 0.0
      %v526 = vmax.f32 %v450, 0.0
      %v527 = vmax.f32 %v455, 0.0
      %v528 = vmax.f32 %v458, 0.0
      %v529 = vmax.f32 %v463, 0.0
      %v530 = vmax.f32 %v466, 0.0
      %v531 = vmax.f32 %v471, 0.0
      %v532 = vmax.f32 %v474, 0.0
      %v533 = vmax.f32 %v479, 0.0
      %v534 = vmax.f32 %v482, 0.0
      %v535 = vmax.f32 %v487, 0.0
      %v536 = vmax.f32 %v490, 0.0
      %v537 = vmax.f32 %v495, 0.0
      %v538 = vmax.f32 %v498, 0.0
      %v539 = vmax.f32 %v503, 0.0
      %v540 = vmax.f32 %v506, 0.0
      %v541 = vpack.c.bf16 %v510, %v509
      %v542 = vpack.c.bf16 %v512, %v511
      %v543 = vpack.c.bf16 %v514, %v513
      %v544 = vpack.c.bf16 %v516, %v515
      %v545 = vpack.c.bf16 %v518, %v517
      %v546 = vpack.c.bf16 %v520, %v519
      %v547 = vpack.c.bf16 %v522, %v521
      %v548 = vpack.c.bf16 %v524, %v523
      %v549 = vpack.c.bf16 %v526, %v525
      %v550 = vpack.c.bf16 %v528, %v527
      %v551 = vpack.c.bf16 %v530, %v529
      %v552 = vpack.c.bf16 %v532, %v531
      %v553 = vpack.c.bf16 %v534, %v533
      %v554 = vpack.c.bf16 %v536, %v535
      %v555 = vpack.c.bf16 %v538, %v537
      %v556 = vpack.c.bf16 %v540, %v539
      %v573 = vunpack.c.l.b16 %v541
      %v574 = vunpack.c.h.b16 %v541
      %v575 = vunpack.c.l.b16 %v542
      %v576 = vunpack.c.h.b16 %v542
      %v577 = vunpack.c.l.b16 %v543
      %v578 = vunpack.c.h.b16 %v543
      %v579 = vunpack.c.l.b16 %v544
      %v580 = vunpack.c.h.b16 %v544
      %v581 = vunpack.c.l.b16 %v545
      %v582 = vunpack.c.h.b16 %v545
      %v583 = vunpack.c.l.b16 %v546
      %v584 = vunpack.c.h.b16 %v546
      %v585 = vunpack.c.l.b16 %v547
      %v586 = vunpack.c.h.b16 %v547
      %v587 = vunpack.c.l.b16 %v548
      %v588 = vunpack.c.h.b16 %v548
      %v589 = vunpack.c.l.b16 %v549
      %v590 = vunpack.c.h.b16 %v549
      %v591 = vunpack.c.l.b16 %v550
      %v592 = vunpack.c.h.b16 %v550
      %v593 = vunpack.c.l.b16 %v551
      %v594 = vunpack.c.h.b16 %v551
      %v595 = vunpack.c.l.b16 %v552
      %v596 = vunpack.c.h.b16 %v552
      %v597 = vunpack.c.l.b16 %v553
      %v598 = vunpack.c.h.b16 %v553
      %v599 = vunpack.c.l.b16 %v554
      %v600 = vunpack.c.h.b16 %v554
      %v601 = vunpack.c.l.b16 %v555
      %v602 = vunpack.c.h.b16 %v555
      %v603 = vunpack.c.l.b16 %v556
      %v604 = vunpack.c.h.b16 %v556
      %v605 = vpack.c.b16 %v573, %v573
      %v606 = vpack.c.b16 %v574, %v574
      %v607 = vpack.c.b16 %v575, %v575
      %v608 = vpack.c.b16 %v576, %v576
      %v609 = vpack.c.b16 %v577, %v577
      %v610 = vpack.c.b16 %v578, %v578
      %v611 = vpack.c.b16 %v579, %v579
      %v612 = vpack.c.b16 %v580, %v580
      %v613 = vpack.c.b16 %v581, %v581
      %v614 = vpack.c.b16 %v582, %v582
      %v615 = vpack.c.b16 %v583, %v583
      %v616 = vpack.c.b16 %v584, %v584
      %v617 = vpack.c.b16 %v585, %v585
      %v618 = vpack.c.b16 %v586, %v586
      %v619 = vpack.c.b16 %v587, %v587
      %v620 = vpack.c.b16 %v588, %v588
      %v621 = vpack.c.b16 %v589, %v589
      %v622 = vpack.c.b16 %v590, %v590
      %v623 = vpack.c.b16 %v591, %v591
      %v624 = vpack.c.b16 %v592, %v592
      %v625 = vpack.c.b16 %v593, %v593
      %v626 = vpack.c.b16 %v594, %v594
      %v627 = vpack.c.b16 %v595, %v595
      %v628 = vpack.c.b16 %v596, %v596
      %v629 = vpack.c.b16 %v597, %v597
      %v630 = vpack.c.b16 %v598, %v598
      %v631 = vpack.c.b16 %v599, %v599
      %v632 = vpack.c.b16 %v600, %v600
      %v633 = vpack.c.b16 %v601, %v601
      %v634 = vpack.c.b16 %v602, %v602
      %v635 = vpack.c.b16 %v603, %v603
      %v636 = vpack.c.b16 %v604, %v604
      %vm669 = vcmask 27648
      %670 = vst.msk [vmem:[%s172] sm:$0xf] %vm669, %v605
      %671 = vst.msk [vmem:[%s172 + $0x4] sm:$0xf] %vm669, %v606
      %672 = vst.msk [vmem:[%s172 + $0x8] sm:$0xf] %vm669, %v607
      %673 = vst.msk [vmem:[%s172 + $0xc] sm:$0xf] %vm669, %v608
      %674 = vst.msk [vmem:[%s172 + $0x10] sm:$0xf] %vm669, %v609
      %675 = vst.msk [vmem:[%s172 + $0x14] sm:$0xf] %vm669, %v610
      %676 = vst.msk [vmem:[%s172 + $0x18] sm:$0xf] %vm669, %v611
      %677 = vst.msk [vmem:[%s172 + $0x1c] sm:$0xf] %vm669, %v612
      %678 = vst.msk [vmem:[%s172 + $0x20] sm:$0xf] %vm669, %v613
      %679 = vst.msk [vmem:[%s172 + $0x24] sm:$0xf] %vm669, %v614
      %680 = vst.msk [vmem:[%s172 + $0x28] sm:$0xf] %vm669, %v615
      %681 = vst.msk [vmem:[%s172 + $0x2c] sm:$0xf] %vm669, %v616
      %682 = vst.msk [vmem:[%s172 + $0x30] sm:$0xf] %vm669, %v617
      %683 = vst.msk [vmem:[%s172 + $0x34] sm:$0xf] %vm669, %v618
      %684 = vst.msk [vmem:[%s172 + $0x38] sm:$0xf] %vm669, %v619
      %685 = vst.msk [vmem:[%s172 + $0x3c] sm:$0xf] %vm669, %v620
      %686 = vst.msk [vmem:[%s172 + $0x40] sm:$0xf] %vm669, %v621
      %687 = vst.msk [vmem:[%s172 + $0x44] sm:$0xf] %vm669, %v622
      %688 = vst.msk [vmem:[%s172 + $0x48] sm:$0xf] %vm669, %v623
      %689 = vst.msk [vmem:[%s172 + $0x4c] sm:$0xf] %vm669, %v624
      %690 = vst.msk [vmem:[%s172 + $0x50] sm:$0xf] %vm669, %v625
      %691 = vst.msk [vmem:[%s172 + $0x54] sm:$0xf] %vm669, %v626
      %692 = vst.msk [vmem:[%s172 + $0x58] sm:$0xf] %vm669, %v627
      %693 = vst.msk [vmem:[%s172 + $0x5c] sm:$0xf] %vm669, %v628
      %694 = vst.msk [vmem:[%s172 + $0x60] sm:$0xf] %vm669, %v629
      %695 = vst.msk [vmem:[%s172 + $0x64] sm:$0xf] %vm669, %v630
      %696 = vst.msk [vmem:[%s172 + $0x68] sm:$0xf] %vm669, %v631
      %697 = vst.msk [vmem:[%s172 + $0x6c] sm:$0xf] %vm669, %v632
      %698 = vst.msk [vmem:[%s172 + $0x70] sm:$0xf] %vm669, %v633
      %699 = vst.msk [vmem:[%s172 + $0x74] sm:$0xf] %vm669, %v634
      %700 = vst.msk [vmem:[%s172 + $0x78] sm:$0xf] %vm669, %v635
      %701 = vst.msk [vmem:[%s172 + $0x7c] sm:$0xf] %vm669, %v636
      %s702 = smul.u32 32, %s14
      %p703 = scmp.lt.s32.totalorder %s702, 63
      %s704 = scalar_select %p703, %s702, 63
      %s705 = smul.addr %s704, 4
      %s706 = scalar_lea.vmem %s3, %s705
      // Predicated region
      $region33: #{bottleneck_forward.3} parent=31 // pred_check
        %p707 = pneg %p100
      $region34: #{bottleneck_forward.3} parent=31 // pred_check_branch
        %709 = sbr.rel (%p707) target = $region36
      $region35: #{bottleneck_forward.3} parent=31 // pred_region
        %s710 = smul.u32 32, %s14
      $region36: #{bottleneck_forward.3} parent=31 // pred_fallthru
        _
    $region32: #{bottleneck_forward.3} parent=5 // pred_fallthru
      _
    %p711 = scmp.le.s32.totalorder 2, %s9
    // Predicated region
    $region37: #{bottleneck_forward.3} parent=5 // pred_check
      %p712 = pneg %p711
    $region38: #{bottleneck_forward.3} parent=5 // pred_check_branch
      %714 = sbr.rel (%p712) target = $region40
    $region39: #{bottleneck_forward.3} parent=5 // pred_region
      %s715 = ssub.s32 %s9, 2
      // Predicated region
      $region41: #{bottleneck_forward.3} parent=39 // pred_check
        %p716 = pneg %p106
      $region42: #{bottleneck_forward.3} parent=39 // pred_check_branch
        %718 = sbr.rel (%p716) target = $region44
      $region43: #{bottleneck_forward.3} parent=39 // pred_region
        %s719 = smul.u32 32, %s15
        %p720 = scmp.lt.s32.totalorder %s719, 63
        %s721 = scalar_select %p720, %s719, 63
        %s722 = smul.addr %s721, 4
        %s723 = scalar_lea.vmem %s3, %s722
      $region44: #{bottleneck_forward.3} parent=39 // pred_fallthru
        _
    $region40: #{bottleneck_forward.3} parent=5 // pred_fallthru
      _
  $region6: #{bottleneck_forward.3} parent=0 // loop_footer
    %s13 = sadd.s32 1, %s9
  $region7: #{bottleneck_forward.3} parent=0 // loop_footer_branch
    %8 = sbr.rel target = $region3
  $region8: #{bottleneck_forward.3} parent=0 // loop_exit
    _

// kernel: bottleneck_forward.5
$region0: #{bottleneck_forward.5}
  #allocation0 [shape = 'u32[]', space=smem, size = 0x4, offset = 0x4, fixed_abs, tag = 'smem constant byte address 0x4 - core index']
  #allocation1 [shape = 'u32[144,128]{1,0:T(1,128)}', space=vmem, size = 0x12000, scoped, tag = 'internal scratch']
  %s0 = inlined_call_operand.vmem [shape: bf16[128,4], index: 0, kind: input, shape index: {}]
  %s1 = inlined_call_operand.vmem [shape: bf16[4,16], index: 1, kind: input, shape index: {}]
  %s2 = inlined_call_operand.vmem [shape: f32[1,16], index: 2, kind: input, shape index: {}]
  %s3 = inlined_call_operand.vmem [shape: bf16[128,4], index: 3, kind: input, shape index: {}]
  %s4 = inlined_call_operand.vmem [shape: bf16[4,16], index: 4, kind: input, shape index: {}]
  %s5 = inlined_call_operand.vmem [shape: f32[1,16], index: 5, kind: input, shape index: {}]
  %s6 = inlined_call_operand.hbm [shape: f32[128,16], index: 6, kind: output, shape index: {}]
  %s7 = sld [smem:[#allocation0]]
  $region57: #{bottleneck_forward.5} parent=0
    _
  %s9 = ssub.s32 1, %s7
  %s10 = scalar_select 0, %s9, %s7
  $region1: #{bottleneck_forward.5} parent=0
    #allocation2 [shape = 'u8[65536]{0}', space=vmem, size = 0x10000, scoped, tag = 'output window, operand 0']
    #allocation3 [shape = 's32[2]{0}', space=sflag, size = 0x8, scoped, tag = 'scoped memory for bottleneck_forward.5']
    %11 = vsyncpa [#allocation3], 0
    %s12 = scalar_lea.sflag [#allocation3], 1
    %13 = vsyncpa %s12, 0
    loop: start=0, step=1, limit=4
    $region2: #{bottleneck_forward.5} parent=1 // loop_pre_header
      _
    $region3: #{bottleneck_forward.5} parent=1 // loop_header
      %s15 = sphi 0, %s19
      %p16 = scmp.ge.s32.totalorder %s15, 4
      %s25 = sphi 0, %s27
      %s28 = sphi 0, %s25
      %s29 = sphi 0, %s28
      %s45 = sphi 0, %s29
      %s49 = sphi 0, %s49
      %s51 = sphi 0, %s49
      %s52 = sphi 0, %s51
      %s66 = sphi 0, %s52
      %s70 = sphi 0, %s70
      %s72 = sphi 0, %s70
      %s73 = sphi 0, %s72
      %s87 = sphi 0, %s73
      %s93 = sphi 0, %s95
      %s96 = sphi 0, %s93
      %s97 = sphi 0, %s96
      %s113 = sphi 0, %s97
      %s117 = sphi 0, %s117
      %s119 = sphi 0, %s117
      %s120 = sphi 0, %s119
      %s134 = sphi 0, %s120
      %s138 = sphi 0, %s138
      %s140 = sphi 0, %s138
      %s141 = sphi 0, %s140
      %s155 = sphi 0, %s141
      %s161 = sphi 0, %s163
      %s164 = sphi 0, %s161
      %s165 = sphi 0, %s164
      %s181 = sphi 0, %s165
    $region4: #{bottleneck_forward.5} parent=1 // loop_header_branch
      %18 = sbr.rel (%p16) target = $region8
    $region5: #{bottleneck_forward.5} parent=1 // loop_body
      %s20 = ssub.s32 %s15, 1
      %s21 = ssub.s32 %s15, 2
      %s22 = sadd.s32 %s15, 1
      %s23 = ssub.s32 %s15, %s22
      %p24 = scmp.eq.s32.totalorder %s23, 0
      %s26 = sadd.s32 %s25, 1
      %s27 = scalar_select %p24, %s25, %s26
      %p30 = pneg %p24
      %p31 = scmp.eq.s32.totalorder %s15, 1
      %p32 = por %p30, %p31
      %p33 = scmp.ne.s32.totalorder %s25, %s28
      %p34 = scmp.eq.s32.totalorder %s15, 0
      %p35 = por %p33, %p34
      %p36 = scmp.ne.s32.totalorder %s25, %s28
      %p37 = scmp.eq.s32.totalorder %s20, 1
      %p38 = por %p36, %p37
      %p39 = scmp.ne.s32.totalorder %s28, %s29
      %p40 = scmp.eq.s32.totalorder %s20, 0
      %p41 = por %p39, %p40
      %p42 = scmp.ne.s32.totalorder %s28, %s29
      %p43 = scmp.eq.s32.totalorder %s21, 1
      %p44 = por %p42, %p43
      %p46 = scmp.ne.s32.totalorder %s29, %s45
      %p47 = scmp.eq.s32.totalorder %s21, 0
      %p48 = por %p46, %p47
      %s50 = sadd.s32 %s49, 1
      %p53 = scmp.eq.s32.totalorder %s15, 1
      %p54 = scmp.ne.s32.totalorder %s49, %s51
      %p55 = scmp.eq.s32.totalorder %s15, 0
      %p56 = por %p54, %p55
      %p57 = scmp.ne.s32.totalorder %s49, %s51
      %p58 = scmp.eq.s32.totalorder %s20, 1
      %p59 = por %p57, %p58
      %p60 = scmp.ne.s32.totalorder %s51, %s52
      %p61 = scmp.eq.s32.totalorder %s20, 0
      %p62 = por %p60, %p61
      %p63 = scmp.ne.s32.totalorder %s51, %s52
      %p64 = scmp.eq.s32.totalorder %s21, 1
      %p65 = por %p63, %p64
      %p67 = scmp.ne.s32.totalorder %s52, %s66
      %p68 = scmp.eq.s32.totalorder %s21, 0
      %p69 = por %p67, %p68
      %s71 = sadd.s32 %s70, 1
      %p74 = scmp.eq.s32.totalorder %s15, 1
      %p75 = scmp.ne.s32.totalorder %s70, %s72
      %p76 = scmp.eq.s32.totalorder %s15, 0
      %p77 = por %p75, %p76
      %p78 = scmp.ne.s32.totalorder %s70, %s72
      %p79 = scmp.eq.s32.totalorder %s20, 1
      %p80 = por %p78, %p79
      %p81 = scmp.ne.s32.totalorder %s72, %s73
      %p82 = scmp.eq.s32.totalorder %s20, 0
      %p83 = por %p81, %p82
      %p84 = scmp.ne.s32.totalorder %s72, %s73
      %p85 = scmp.eq.s32.totalorder %s21, 1
      %p86 = por %p84, %p85
      %p88 = scmp.ne.s32.totalorder %s73, %s87
      %p89 = scmp.eq.s32.totalorder %s21, 0
      %p90 = por %p88, %p89
      %s91 = ssub.s32 %s15, %s22
      %p92 = scmp.eq.s32.totalorder %s91, 0
      %s94 = sadd.s32 %s93, 1
      %s95 = scalar_select %p92, %s93, %s94
      %p98 = pneg %p92
      %p99 = scmp.eq.s32.totalorder %s15, 1
      %p100 = por %p98, %p99
      %p101 = scmp.ne.s32.totalorder %s93, %s96
      %p102 = scmp.eq.s32.totalorder %s15, 0
      %p103 = por %p101, %p102
      %p104 = scmp.ne.s32.totalorder %s93, %s96
      %p105 = scmp.eq.s32.totalorder %s20, 1
      %p106 = por %p104, %p105
      %p107 = scmp.ne.s32.totalorder %s96, %s97
      %p108 = scmp.eq.s32.totalorder %s20, 0
      %p109 = por %p107, %p108
      %p110 = scmp.ne.s32.totalorder %s96, %s97
      %p111 = scmp.eq.s32.totalorder %s21, 1
      %p112 = por %p110, %p111
      %p114 = scmp.ne.s32.totalorder %s97, %s113
      %p115 = scmp.eq.s32.totalorder %s21, 0
      %p116 = por %p114, %p115
      %s118 = sadd.s32 %s117, 1
      %p121 = scmp.eq.s32.totalorder %s15, 1
      %p122 = scmp.ne.s32.totalorder %s117, %s119
      %p123 = scmp.eq.s32.totalorder %s15, 0
      %p124 = por %p122, %p123
      %p125 = scmp.ne.s32.totalorder %s117, %s119
      %p126 = scmp.eq.s32.totalorder %s20, 1
      %p127 = por %p125, %p126
      %p128 = scmp.ne.s32.totalorder %s119, %s120
      %p129 = scmp.eq.s32.totalorder %s20, 0
      %p130 = por %p128, %p129
      %p131 = scmp.ne.s32.totalorder %s119, %s120
      %p132 = scmp.eq.s32.totalorder %s21, 1
      %p133 = por %p131, %p132
      %p135 = scmp.ne.s32.totalorder %s120, %s134
      %p136 = scmp.eq.s32.totalorder %s21, 0
      %p137 = por %p135, %p136
      %s139 = sadd.s32 %s138, 1
      %p142 = scmp.eq.s32.totalorder %s15, 1
      %p143 = scmp.ne.s32.totalorder %s138, %s140
      %p144 = scmp.eq.s32.totalorder %s15, 0
      %p145 = por %p143, %p144
      %p146 = scmp.ne.s32.totalorder %s138, %s140
      %p147 = scmp.eq.s32.totalorder %s20, 1
      %p148 = por %p146, %p147
      %p149 = scmp.ne.s32.totalorder %s140, %s141
      %p150 = scmp.eq.s32.totalorder %s20, 0
      %p151 = por %p149, %p150
      %p152 = scmp.ne.s32.totalorder %s140, %s141
      %p153 = scmp.eq.s32.totalorder %s21, 1
      %p154 = por %p152, %p153
      %p156 = scmp.ne.s32.totalorder %s141, %s155
      %p157 = scmp.eq.s32.totalorder %s21, 0
      %p158 = por %p156, %p157
      %s159 = ssub.s32 %s15, %s22
      %p160 = scmp.eq.s32.totalorder %s159, 0
      %s162 = sadd.s32 %s161, 1
      %s163 = scalar_select %p160, %s161, %s162
      %p166 = pneg %p160
      %p167 = scmp.eq.s32.totalorder %s15, 1
      %p168 = por %p166, %p167
      %p169 = scmp.ne.s32.totalorder %s161, %s164
      %p170 = scmp.eq.s32.totalorder %s15, 0
      %p171 = por %p169, %p170
      %p172 = scmp.ne.s32.totalorder %s161, %s164
      %p173 = scmp.eq.s32.totalorder %s20, 1
      %p174 = por %p172, %p173
      %p175 = scmp.ne.s32.totalorder %s164, %s165
      %p176 = scmp.eq.s32.totalorder %s20, 0
      %p177 = por %p175, %p176
      %p178 = scmp.ne.s32.totalorder %s164, %s165
      %p179 = scmp.eq.s32.totalorder %s21, 1
      %p180 = por %p178, %p179
      %p182 = scmp.ne.s32.totalorder %s165, %s181
      %p183 = scmp.eq.s32.totalorder %s21, 0
      %p184 = por %p182, %p183
      %p185 = scmp.le.s32.totalorder 1, %s15
      %p186 = scmp.lt.s32.totalorder %s15, 3
      %p187 = pnand %p185, %p186
      %p188 = pneg %p187
      // Predicated region
      $region9: #{bottleneck_forward.5} parent=5 // pred_check
        _
      $region10: #{bottleneck_forward.5} parent=5 // pred_check_branch
        %190 = sbr.rel (%p187) target = $region12
      $region11: #{bottleneck_forward.5} parent=5 // pred_region
        %s191 = ssub.s32 %s15, 1
        // Predicated region
        $region13: #{bottleneck_forward.5} parent=11 // pred_check
          %p192 = pneg %p62
        $region14: #{bottleneck_forward.5} parent=11 // pred_check_branch
          %194 = sbr.rel (%p192) target = $region16
        $region15: #{bottleneck_forward.5} parent=11 // pred_region
          _
        $region16: #{bottleneck_forward.5} parent=11 // pred_fallthru
          _
        // Predicated region
        $region17: #{bottleneck_forward.5} parent=11 // pred_check
          %p195 = pneg %p83
        $region18: #{bottleneck_forward.5} parent=11 // pred_check_branch
          %197 = sbr.rel (%p195) target = $region20
        $region19: #{bottleneck_forward.5} parent=11 // pred_region
          _
        $region20: #{bottleneck_forward.5} parent=11 // pred_fallthru
          _
        // Predicated region
        $region21: #{bottleneck_forward.5} parent=11 // pred_check
          %p198 = pneg %p130
        $region22: #{bottleneck_forward.5} parent=11 // pred_check_branch
          %200 = sbr.rel (%p198) target = $region24
        $region23: #{bottleneck_forward.5} parent=11 // pred_region
          _
        $region24: #{bottleneck_forward.5} parent=11 // pred_fallthru
          _
        // Predicated region
        $region25: #{bottleneck_forward.5} parent=11 // pred_check
          %p201 = pneg %p151
        $region26: #{bottleneck_forward.5} parent=11 // pred_check_branch
          %203 = sbr.rel (%p201) target = $region28
        $region27: #{bottleneck_forward.5} parent=11 // pred_region
          _
        $region28: #{bottleneck_forward.5} parent=11 // pred_fallthru
          _
      $region12: #{bottleneck_forward.5} parent=5 // pred_fallthru
        _
      %p204 = scmp.lt.s32.totalorder %s15, 2
      // Predicated region
      $region29: #{bottleneck_forward.5} parent=5 // pred_check
        %p205 = pneg %p204
      $region30: #{bottleneck_forward.5} parent=5 // pred_check_branch
        %207 = sbr.rel (%p205) target = $region32
      $region31: #{bottleneck_forward.5} parent=5 // pred_region
        // Predicated region
        $region33: #{bottleneck_forward.5} parent=31 // pred_check
          %p208 = pneg %p35
        $region34: #{bottleneck_forward.5} parent=31 // pred_check_branch
          %210 = sbr.rel (%p208) target = $region36
        $region35: #{bottleneck_forward.5} parent=31 // pred_region
          %s211 = smul.u32 8, %s15
          %p212 = scmp.lt.s32.totalorder %s211, 15
          %s213 = scalar_select %p212, %s211, 15
          %s214 = smul.addr %s213, 4
          %s215 = scalar_lea.vmem %s0, %s214
          %s216 = smul.u32 8, %s15
        $region36: #{bottleneck_forward.5} parent=31 // pred_fallthru
          _
        // Predicated region
        $region37: #{bottleneck_forward.5} parent=31 // pred_check
          %p217 = pneg %p103
        $region38: #{bottleneck_forward.5} parent=31 // pred_check_branch
          %219 = sbr.rel (%p217) target = $region40
        $region39: #{bottleneck_forward.5} parent=31 // pred_region
          %s220 = smul.u32 8, %s15
          %p221 = scmp.lt.s32.totalorder %s220, 15
          %s222 = scalar_select %p221, %s220, 15
          %s223 = smul.addr %s222, 4
          %s224 = scalar_lea.vmem %s3, %s223
          %s225 = smul.u32 8, %s15
        $region40: #{bottleneck_forward.5} parent=31 // pred_fallthru
          _
      $region32: #{bottleneck_forward.5} parent=5 // pred_fallthru
        _
      %p226 = scmp.le.s32.totalorder 1, %s15
      %p227 = scmp.lt.s32.totalorder %s15, 3
      %p228 = pnand %p226, %p227
      %p229 = pneg %p228
      // Predicated region
      $region41: #{bottleneck_forward.5} parent=5 // pred_check
        _
      $region42: #{bottleneck_forward.5} parent=5 // pred_check_branch
        %231 = sbr.rel (%p228) target = $region44
      $region43: #{bottleneck_forward.5} parent=5 // pred_region
        %s232 = ssub.s32 %s15, 1
        %s233 = smul.u32 8, %s20
        %p234 = scmp.lt.s32.totalorder %s233, 15
        %s235 = scalar_select %p234, %s233, 15
        %s236 = smul.addr %s235, 4
        %s237 = scalar_lea.vmem %s0, %s236
        %p238 = pneg %p41
        %p239 = pneg %p38
        %p240 = pneg %p62
        %p241 = pneg %p59
        %p242 = pneg %p83
        %p243 = pneg %p80
        %s244 = smul.u32 8, %s20
        %p245 = scmp.lt.s32.totalorder %s244, 15
        %s246 = scalar_select %p245, %s244, 15
        %s247 = smul.addr %s246, 4
        %s248 = scalar_lea.vmem %s3, %s247
        %p249 = pneg %p109
        %p250 = pneg %p106
        %p251 = pneg %p130
        %p252 = pneg %p127
        %p253 = pneg %p151
        %p254 = pneg %p148
        %p255 = pneg %p177
        %p256 = pneg %p174
        %s257 = sand.u32 %s164, 1
        %s258 = scalar_lea.sflag [#allocation3], %s257
        %s259 = sand.u32 %s164, 1
        %s260 = smul.addr %s259, 64
        %s261 = scalar_lea.vmem [#allocation2], %s260
        %s262 = smul.u32 8, %s20
        %p263 = scmp.lt.s32.totalorder %s262, 15
        %s264 = scalar_select %p263, %s262, 15
        %s265 = smul.addr %s264, 4
        %s266 = scalar_lea.vmem %s0, %s265
        %s267 = smul.u32 8, %s20
        %s268 = smul.u32 8, %s20
        %p269 = scmp.lt.s32.totalorder %s268, 15
        %s270 = scalar_select %p269, %s268, 15
        %s271 = smul.addr %s270, 4
        %s272 = scalar_lea.vmem %s3, %s271
        %s273 = smul.u32 8, %s20
        %s274 = smul.u32 8, %s20
        %v276 = vld [vmem:[%s266] sm:$0xf]
        %v277 = vld [vmem:[%s266 + $0x4] sm:$0xf]
        %v278 = vld [vmem:[%s266 + $0x8] sm:$0xf]
        %v279 = vld [vmem:[%s266 + $0xc] sm:$0xf]
        %v280 = vld [vmem:[%s266 + $0x10] sm:$0xf]
        %v281 = vld [vmem:[%s266 + $0x14] sm:$0xf]
        %v282 = vld [vmem:[%s266 + $0x18] sm:$0xf]
        %v283 = vld [vmem:[%s266 + $0x1c] sm:$0xf]
        %v284 = vld [vmem:[%s1] sm:$0x3]
        %v285 = vld [vmem:[%s2] sm:$0x1]
        %v287 = vlaneseq
        %v288 = vshrl.u32 %v287, 7
        %v289 = vsub.s32 0, %v288
        %v290 = vrot.slane %v285, %v289
        %v300 = vunpack.c.l.b16 %v276
        %v301 = vunpack.c.l.b16 %v277
        %v302 = vunpack.c.l.b16 %v278
        %v303 = vunpack.c.l.b16 %v279
        %v304 = vunpack.c.l.b16 %v280
        %v305 = vunpack.c.l.b16 %v281
        %v306 = vunpack.c.l.b16 %v282
        %v307 = vunpack.c.l.b16 %v283
        %v308 = vpack.c.b16 %v301, %v300
        %v309 = vpack.c.b16 %v303, %v302
        %v310 = vpack.c.b16 %v305, %v304
        %v311 = vpack.c.b16 %v307, %v306
        %vm312 = vcmask 31744
        %v314 = vsel %vm312, %v308, 0
        %v317 = vsel %vm312, %v309, 0
        %v320 = vsel %vm312, %v310, 0
        %v323 = vsel %vm312, %v311, 0
        %vm325 = vcmask 1041408
        %v327 = vsel %vm325, %v284, 0
        %329 = vmatprep.subr.bf16.mxu0 0
        %330 = vmatpush1.bf16.msra.mxu0 0
        %331 = vmatprep.subr.bf16.mxu0 0
        %332 = vmatpush1.bf16.msra.mxu0 0
        %333 = vmatprep.subr.bf16.mxu0 0
        %334 = vmatpush1.bf16.msra.mxu0 0
        %335 = vmatprep.subr.bf16.mxu0 0
        %336 = vmatpush1.bf16.msra.mxu0 0
        %337 = vmatprep.subr.bf16.mxu0 0
        %338 = vmatpush1.bf16.msra.mxu0 0
        %339 = vmatprep.subr.bf16.mxu0 0
        %340 = vmatpush1.bf16.msra.mxu0 0
        %341 = vmatprep.subr.bf16.mxu0 0
        %342 = vmatpush1.bf16.msra.mxu0 0
        %343 = vmatprep.subr.bf16.mxu0 0
        %344 = vmatpush1.bf16.msra.mxu0 %v327
        %345 = vmatprep.subr.bf16.mxu0 0
        %346 = vmatpush2.bf16.msra.mxu0 0
        %347 = vmatprep.subr.bf16.mxu0 0
        %348 = vmatpush2.bf16.msra.mxu0 0
        %349 = vmatprep.subr.bf16.mxu0 0
        %350 = vmatpush2.bf16.msra.mxu0 0
        %351 = vmatprep.subr.bf16.mxu0 0
        %352 = vmatpush2.bf16.msra.mxu0 0
        %353 = vmatprep.subr.bf16.mxu0 0
        %354 = vmatpush2.bf16.msra.mxu0 0
        %355 = vmatprep.subr.bf16.mxu0 0
        %356 = vmatpush2.bf16.msra.mxu0 0
        %357 = vmatprep.subr.bf16.mxu0 0
        %358 = vmatpush2.bf16.msra.mxu0 0
        %359 = vmatprep.subr.bf16.mxu0 0
        %360 = vmatpush2.bf16.msra.mxu0 0
        %361 = vmatprep.mubr.bf16.mxu0 0
        %362 = vmatmul.mubr.bf16.gmra.mxu0 %v314
        %v363 = vpop.f32.mrf.mxu0
        %v364 = vadd.f32 %v290, %v363
        %v365 = vpop.f32.mrf.mxu0
        %v366 = vpop.f32.mrf.mxu0
        %v367 = vadd.f32 %v290, %v366
        %v368 = vpop.f32.mrf.mxu0
        %369 = vmatprep.mubr.bf16.mxu0 0
        %370 = vmatmul.mubr.bf16.gmra.mxu0 %v317
        %v371 = vpop.f32.mrf.mxu0
        %v372 = vadd.f32 %v290, %v371
        %v373 = vpop.f32.mrf.mxu0
        %v374 = vpop.f32.mrf.mxu0
        %v375 = vadd.f32 %v290, %v374
        %v376 = vpop.f32.mrf.mxu0
        %377 = vmatprep.mubr.bf16.mxu0 0
        %378 = vmatmul.mubr.bf16.gmra.mxu0 %v320
        %v379 = vpop.f32.mrf.mxu0
        %v380 = vadd.f32 %v290, %v379
        %v381 = vpop.f32.mrf.mxu0
        %v382 = vpop.f32.mrf.mxu0
        %v383 = vadd.f32 %v290, %v382
        %v384 = vpop.f32.mrf.mxu0
        %385 = vmatprep.mubr.bf16.mxu0 0
        %386 = vmatmul.mubr.bf16.gmra.mxu0 %v323
        %v387 = vpop.f32.mrf.mxu0
        %v388 = vadd.f32 %v290, %v387
        %v389 = vpop.f32.mrf.mxu0
        %v390 = vpop.f32.mrf.mxu0
        %v391 = vadd.f32 %v290, %v390
        %v392 = vpop.f32.mrf.mxu0
        %393 = vdwg.mxu0
        %v394 = vld [vmem:[%s272] sm:$0xf]
        %v395 = vld [vmem:[%s272 + $0x4] sm:$0xf]
        %v396 = vld [vmem:[%s272 + $0x8] sm:$0xf]
        %v397 = vld [vmem:[%s272 + $0xc] sm:$0xf]
        %v398 = vld [vmem:[%s272 + $0x10] sm:$0xf]
        %v399 = vld [vmem:[%s272 + $0x14] sm:$0xf]
        %v400 = vld [vmem:[%s272 + $0x18] sm:$0xf]
        %v401 = vld [vmem:[%s272 + $0x1c] sm:$0xf]
        %v402 = vld [vmem:[%s4] sm:$0x3]
        %v411 = vunpack.c.l.b16 %v394
        %v412 = vunpack.c.l.b16 %v395
        %v413 = vunpack.c.l.b16 %v396
        %v414 = vunpack.c.l.b16 %v397
        %v415 = vunpack.c.l.b16 %v398
        %v416 = vunpack.c.l.b16 %v399
        %v417 = vunpack.c.l.b16 %v400
        %v418 = vunpack.c.l.b16 %v401
        %v419 = vpack.c.b16 %v412, %v411
        %v420 = vpack.c.b16 %v414, %v413
        %v421 = vpack.c.b16 %v416, %v415
        %v422 = vpack.c.b16 %v418, %v417
        %v424 = vsel %vm312, %v419, 0
        %v427 = vsel %vm312, %v420, 0
        %v430 = vsel %vm312, %v421, 0
        %v433 = vsel %vm312, %v422, 0
        %v436 = vsel %vm325, %v402, 0
        %438 = vmatprep.subr.bf16.mxu0 0
        %439 = vmatpush1.bf16.msra.mxu0 0
        %440 = vmatprep.subr.bf16.mxu0 0
        %441 = vmatpush1.bf16.msra.mxu0 0
        %442 = vmatprep.subr.bf16.mxu0 0
        %443 = vmatpush1.bf16.msra.mxu0 0
        %444 = vmatprep.subr.bf16.mxu0 0
        %445 = vmatpush1.bf16.msra.mxu0 0
        %446 = vmatprep.subr.bf16.mxu0 0
        %447 = vmatpush1.bf16.msra.mxu0 0
        %448 = vmatprep.subr.bf16.mxu0 0
        %449 = vmatpush1.bf16.msra.mxu0 0
        %450 = vmatprep.subr.bf16.mxu0 0
        %451 = vmatpush1.bf16.msra.mxu0 0
        %452 = vmatprep.subr.bf16.mxu0 0
        %453 = vmatpush1.bf16.msra.mxu0 %v436
        %454 = vmatprep.subr.bf16.mxu0 0
        %455 = vmatpush2.bf16.msra.mxu0 0
        %456 = vmatprep.subr.bf16.mxu0 0
        %457 = vmatpush2.bf16.msra.mxu0 0
        %458 = vmatprep.subr.bf16.mxu0 0
        %459 = vmatpush2.bf16.msra.mxu0 0
        %460 = vmatprep.subr.bf16.mxu0 0
        %461 = vmatpush2.bf16.msra.mxu0 0
        %462 = vmatprep.subr.bf16.mxu0 0
        %463 = vmatpush2.bf16.msra.mxu0 0
        %464 = vmatprep.subr.bf16.mxu0 0
        %465 = vmatpush2.bf16.msra.mxu0 0
        %466 = vmatprep.subr.bf16.mxu0 0
        %467 = vmatpush2.bf16.msra.mxu0 0
        %468 = vmatprep.subr.bf16.mxu0 0
        %469 = vmatpush2.bf16.msra.mxu0 0
        %470 = vmatprep.mubr.bf16.mxu0 0
        %471 = vmatmul.mubr.bf16.gmra.mxu0 %v424
        %v472 = vpop.f32.mrf.mxu0
        %v473 = vadd.f32 0.0, %v472
        %v474 = vpop.f32.mrf.mxu0
        %v475 = vpop.f32.mrf.mxu0
        %v476 = vadd.f32 0.0, %v475
        %v477 = vpop.f32.mrf.mxu0
        %478 = vmatprep.mubr.bf16.mxu0 0
        %479 = vmatmul.mubr.bf16.gmra.mxu0 %v427
        %v480 = vpop.f32.mrf.mxu0
        %v481 = vadd.f32 0.0, %v480
        %v482 = vpop.f32.mrf.mxu0
        %v483 = vpop.f32.mrf.mxu0
        %v484 = vadd.f32 0.0, %v483
        %v485 = vpop.f32.mrf.mxu0
        %486 = vmatprep.mubr.bf16.mxu0 0
        %487 = vmatmul.mubr.bf16.gmra.mxu0 %v430
        %v488 = vpop.f32.mrf.mxu0
        %v489 = vadd.f32 0.0, %v488
        %v490 = vpop.f32.mrf.mxu0
        %v491 = vpop.f32.mrf.mxu0
        %v492 = vadd.f32 0.0, %v491
        %v493 = vpop.f32.mrf.mxu0
        %494 = vmatprep.mubr.bf16.mxu0 0
        %495 = vmatmul.mubr.bf16.gmra.mxu0 %v433
        %v496 = vpop.f32.mrf.mxu0
        %v497 = vadd.f32 0.0, %v496
        %v498 = vpop.f32.mrf.mxu0
        %v499 = vpop.f32.mrf.mxu0
        %v500 = vadd.f32 0.0, %v499
        %v501 = vpop.f32.mrf.mxu0
        %502 = vdwg.mxu0
        %v503 = vadd.f32 %v364, %v473
        %v504 = vadd.f32 %v367, %v476
        %v505 = vadd.f32 %v372, %v481
        %v506 = vadd.f32 %v375, %v484
        %v507 = vadd.f32 %v380, %v489
        %v508 = vadd.f32 %v383, %v492
        %v509 = vadd.f32 %v388, %v497
        %v510 = vadd.f32 %v391, %v500
        %v511 = vld [vmem:[%s5] sm:$0x1]
        %v513 = vlaneseq
        %v514 = vshrl.u32 %v513, 7
        %v515 = vsub.s32 0, %v514
        %v516 = vrot.slane %v511, %v515
        %v518 = vadd.f32 %v503, %v516
        %v519 = vadd.f32 %v504, %v516
        %v520 = vadd.f32 %v505, %v516
        %v521 = vadd.f32 %v506, %v516
        %v522 = vadd.f32 %v507, %v516
        %v523 = vadd.f32 %v508, %v516
        %v524 = vadd.f32 %v509, %v516
        %v525 = vadd.f32 %v510, %v516
        %v526 = vmax.f32 %v518, 0.0
        %v527 = vmax.f32 %v519, 0.0
        %v528 = vmax.f32 %v520, 0.0
        %v529 = vmax.f32 %v521, 0.0
        %v530 = vmax.f32 %v522, 0.0
        %v531 = vmax.f32 %v523, 0.0
        %v532 = vmax.f32 %v524, 0.0
        %v533 = vmax.f32 %v525, 0.0
        %vm534 = vcmask 130048
        %535 = vst.msk [vmem:[%s261] sm:$0xff] %vm534, %v526
        %536 = vst.msk [vmem:[%s261 + $0x8] sm:$0xff] %vm534, %v527
        %537 = vst.msk [vmem:[%s261 + $0x10] sm:$0xff] %vm534, %v528
        %538 = vst.msk [vmem:[%s261 + $0x18] sm:$0xff] %vm534, %v529
        %539 = vst.msk [vmem:[%s261 + $0x20] sm:$0xff] %vm534, %v530
        %540 = vst.msk [vmem:[%s261 + $0x28] sm:$0xff] %vm534, %v531
        %541 = vst.msk [vmem:[%s261 + $0x30] sm:$0xff] %vm534, %v532
        %542 = vst.msk [vmem:[%s261 + $0x38] sm:$0xff] %vm534, %v533
        %s543 = sand.u32 %s164, 1
        %s544 = scalar_lea.sflag [#allocation3], %s543
        %s545 = sand.u32 %s164, 1
        %s546 = smul.addr %s545, 64
        %s547 = scalar_lea.vmem [#allocation2], %s546
        // Predicated region
        $region45: #{bottleneck_forward.5} parent=43 // pred_check
          %p548 = pneg %p174
        $region46: #{bottleneck_forward.5} parent=43 // pred_check_branch
          %550 = sbr.rel (%p548) target = $region48
        $region47: #{bottleneck_forward.5} parent=43 // pred_region
          %s551 = smul.u32 8, %s20
          %s553 = ssub.s32 1024, 1024
          %554 = vsyncadd %s544, %s553
          %s555 = smul.addr %s551, 128
          %s556 = scalar_lea.hbm %s6, %s555
          %s557 = sshll.u32 %s547, 4
          %s558 = int_to_ptr.vmem [resolvable:$true] %s557
          %563 = dma.vmem_to_hbm [thread:$0]  %s558, 1024, %s556, %s544, 128, 128, 8
        $region48: #{bottleneck_forward.5} parent=43 // pred_fallthru
          _
      $region44: #{bottleneck_forward.5} parent=5 // pred_fallthru
        _
      %p564 = scmp.le.s32.totalorder 2, %s15
      // Predicated region
      $region49: #{bottleneck_forward.5} parent=5 // pred_check
        %p565 = pneg %p564
      $region50: #{bottleneck_forward.5} parent=5 // pred_check_branch
        %567 = sbr.rel (%p565) target = $region52
      $region51: #{bottleneck_forward.5} parent=5 // pred_region
        %s568 = ssub.s32 %s15, 2
        // Predicated region
        $region53: #{bottleneck_forward.5} parent=51 // pred_check
          %p569 = pneg %p180
        $region54: #{bottleneck_forward.5} parent=51 // pred_check_branch
          %571 = sbr.rel (%p569) target = $region56
        $region55: #{bottleneck_forward.5} parent=51 // pred_region
          %s572 = sand.u32 %s165, 1
          %s573 = scalar_lea.sflag [#allocation3], %s572
          %s574 = sand.u32 %s165, 1
          %s575 = smul.addr %s574, 64
          %s576 = scalar_lea.vmem [#allocation2], %s575
          %577 = dma.done %s573, 1024
        $region56: #{bottleneck_forward.5} parent=51 // pred_fallthru
          _
      $region52: #{bottleneck_forward.5} parent=5 // pred_fallthru
        _
    $region6: #{bottleneck_forward.5} parent=1 // loop_footer
      %s19 = sadd.s32 1, %s15
    $region7: #{bottleneck_forward.5} parent=1 // loop_footer_branch
      %14 = sbr.rel target = $region3
    $region8: #{bottleneck_forward.5} parent=1 // loop_exit
      _
    %578 = vsyncpa [#allocation3], 1
    %s579 = scalar_lea.sflag [#allocation3], 1
    %580 = vsyncpa %s579, 1

// kernel: bottleneck_forward.4
$region0: #{bottleneck_forward.4}
  #allocation0 [shape = 'u32[]', space=smem, size = 0x4, offset = 0x4, fixed_abs, tag = 'smem constant byte address 0x4 - core index']
  #allocation1 [shape = 'u32[144,128]{1,0:T(1,128)}', space=vmem, size = 0x12000, scoped, tag = 'internal scratch']
  #allocation2 [shape = 'f32[72,4]{1,0:T(8,128)}', space=vmem, size = 0x9000, scoped, tag = 'scratch operand']
  %s0 = inlined_call_operand.vmem [shape: bf16[2,4,90,4], index: 0, kind: input, shape index: {}]
  %s1 = inlined_call_operand.vmem [shape: bf16[9,4,4], index: 1, kind: input, shape index: {}]
  %s2 = inlined_call_operand.vmem [shape: f32[1,4], index: 2, kind: input, shape index: {}]
  %s3 = inlined_call_operand.vmem [shape: bf16[2,8,8,4], index: 3, kind: output, shape index: {}]
  %s4 = sld [smem:[#allocation0]]
  $region45: #{bottleneck_forward.4} parent=0
    _
  %s6 = ssub.s32 1, %s4
  %s7 = scalar_select 0, %s6, %s4
  loop: start=0, step=1, limit=4
  $region2: #{bottleneck_forward.4} parent=0 // loop_pre_header
    _
  $region3: #{bottleneck_forward.4} parent=0 // loop_header
    %s9 = sphi 0, %s13
    %p10 = scmp.ge.s32.totalorder %s9, 4
    %s16 = sphi 0, %s28
    %s17 = sphi 0, %s24
    %s18 = sphi 0, %s16
    %s19 = sphi 0, %s17
    %s20 = sphi 0, %s18
    %s21 = sphi 0, %s19
    %s31 = sphi 0, %s33
    %s34 = sphi 0, %s31
    %s35 = sphi 0, %s34
    %s51 = sphi 0, %s35
    %s57 = sphi 0, %s59
    %s60 = sphi 0, %s57
    %s61 = sphi 0, %s60
    %s77 = sphi 0, %s61
    %s83 = sphi 0, %s85
    %s86 = sphi 0, %s83
    %s87 = sphi 0, %s86
    %s103 = sphi 0, %s87
    %s111 = sphi 0, %s113
    %s114 = sphi 0, %s111
    %s115 = sphi 0, %s114
    %s131 = sphi 0, %s115
  $region4: #{bottleneck_forward.4} parent=0 // loop_header_branch
    %12 = sbr.rel (%p10) target = $region8
  $region5: #{bottleneck_forward.4} parent=0 // loop_body
    %s14 = ssub.s32 %s9, 1
    %s15 = ssub.s32 %s9, 2
    %s22 = sadd.s32 1, %s17
    %p23 = scmp.ge.s32.totalorder %s22, 1
    %s24 = scalar_select %p23, 0, %s22
    %s25 = sadd.s32 1, %s16
    %s26 = scalar_select %p23, %s25, %s16
    %p27 = scmp.ge.s32.totalorder %s26, 2
    %s28 = scalar_select %p27, 0, %s26
    %s29 = ssub.s32 %s16, %s28
    %p30 = scmp.eq.s32.totalorder %s29, 0
    %s32 = sadd.s32 %s31, 1
    %s33 = scalar_select %p30, %s31, %s32
    %p36 = pneg %p30
    %p37 = scmp.eq.s32.totalorder %s9, 1
    %p38 = por %p36, %p37
    %p39 = scmp.ne.s32.totalorder %s31, %s34
    %p40 = scmp.eq.s32.totalorder %s9, 0
    %p41 = por %p39, %p40
    %p42 = scmp.ne.s32.totalorder %s31, %s34
    %p43 = scmp.eq.s32.totalorder %s14, 1
    %p44 = por %p42, %p43
    %p45 = scmp.ne.s32.totalorder %s34, %s35
    %p46 = scmp.eq.s32.totalorder %s14, 0
    %p47 = por %p45, %p46
    %p48 = scmp.ne.s32.totalorder %s34, %s35
    %p49 = scmp.eq.s32.totalorder %s15, 1
    %p50 = por %p48, %p49
    %p52 = scmp.ne.s32.totalorder %s35, %s51
    %p53 = scmp.eq.s32.totalorder %s15, 0
    %p54 = por %p52, %p53
    %s55 = ssub.s32 %s17, %s24
    %p56 = scmp.eq.s32.totalorder %s55, 0
    %s58 = sadd.s32 %s57, 1
    %s59 = scalar_select %p56, %s57, %s58
    %p62 = pneg %p56
    %p63 = scmp.eq.s32.totalorder %s9, 1
    %p64 = por %p62, %p63
    %p65 = scmp.ne.s32.totalorder %s57, %s60
    %p66 = scmp.eq.s32.totalorder %s9, 0
    %p67 = por %p65, %p66
    %p68 = scmp.ne.s32.totalorder %s57, %s60
    %p69 = scmp.eq.s32.totalorder %s14, 1
    %p70 = por %p68, %p69
    %p71 = scmp.ne.s32.totalorder %s60, %s61
    %p72 = scmp.eq.s32.totalorder %s14, 0
    %p73 = por %p71, %p72
    %p74 = scmp.ne.s32.totalorder %s60, %s61
    %p75 = scmp.eq.s32.totalorder %s15, 1
    %p76 = por %p74, %p75
    %p78 = scmp.ne.s32.totalorder %s61, %s77
    %p79 = scmp.eq.s32.totalorder %s15, 0
    %p80 = por %p78, %p79
    %s81 = ssub.s32 %s17, %s24
    %p82 = scmp.eq.s32.totalorder %s81, 0
    %s84 = sadd.s32 %s83, 1
    %s85 = scalar_select %p82, %s83, %s84
    %p88 = pneg %p82
    %p89 = scmp.eq.s32.totalorder %s9, 1
    %p90 = por %p88, %p89
    %p91 = scmp.ne.s32.totalorder %s83, %s86
    %p92 = scmp.eq.s32.totalorder %s9, 0
    %p93 = por %p91, %p92
    %p94 = scmp.ne.s32.totalorder %s83, %s86
    %p95 = scmp.eq.s32.totalorder %s14, 1
    %p96 = por %p94, %p95
    %p97 = scmp.ne.s32.totalorder %s86, %s87
    %p98 = scmp.eq.s32.totalorder %s14, 0
    %p99 = por %p97, %p98
    %p100 = scmp.ne.s32.totalorder %s86, %s87
    %p101 = scmp.eq.s32.totalorder %s15, 1
    %p102 = por %p100, %p101
    %p104 = scmp.ne.s32.totalorder %s87, %s103
    %p105 = scmp.eq.s32.totalorder %s15, 0
    %p106 = por %p104, %p105
    %s107 = ssub.s32 %s16, %s28
    %s108 = ssub.s32 %s17, %s24
    %s109 = sor.u32 %s107, %s108
    %p110 = scmp.eq.s32.totalorder %s109, 0
    %s112 = sadd.s32 %s111, 1
    %s113 = scalar_select %p110, %s111, %s112
    %p116 = pneg %p110
    %p117 = scmp.eq.s32.totalorder %s9, 1
    %p118 = por %p116, %p117
    %p119 = scmp.ne.s32.totalorder %s111, %s114
    %p120 = scmp.eq.s32.totalorder %s9, 0
    %p121 = por %p119, %p120
    %p122 = scmp.ne.s32.totalorder %s111, %s114
    %p123 = scmp.eq.s32.totalorder %s14, 1
    %p124 = por %p122, %p123
    %p125 = scmp.ne.s32.totalorder %s114, %s115
    %p126 = scmp.eq.s32.totalorder %s14, 0
    %p127 = por %p125, %p126
    %p128 = scmp.ne.s32.totalorder %s114, %s115
    %p129 = scmp.eq.s32.totalorder %s15, 1
    %p130 = por %p128, %p129
    %p132 = scmp.ne.s32.totalorder %s115, %s131
    %p133 = scmp.eq.s32.totalorder %s15, 0
    %p134 = por %p132, %p133
    %p135 = scmp.le.s32.totalorder 1, %s9
    %p136 = scmp.lt.s32.totalorder %s9, 3
    %p137 = pnand %p135, %p136
    %p138 = pneg %p137
    // Predicated region
    $region9: #{bottleneck_forward.4} parent=5 // pred_check
      _
    $region10: #{bottleneck_forward.4} parent=5 // pred_check_branch
      %140 = sbr.rel (%p137) target = $region12
    $region11: #{bottleneck_forward.4} parent=5 // pred_region
      %s141 = ssub.s32 %s9, 1
      // Predicated region
      $region13: #{bottleneck_forward.4} parent=11 // pred_check
        %p142 = pneg %p73
      $region14: #{bottleneck_forward.4} parent=11 // pred_check_branch
        %144 = sbr.rel (%p142) target = $region16
      $region15: #{bottleneck_forward.4} parent=11 // pred_region
        %p145 = scmp.lt.s32.totalorder %s19, 0
        %s146 = scalar_select %p145, %s19, 0
        %s147 = smul.addr %s146, 2
        %s148 = scalar_lea.vmem %s1, %s147
      $region16: #{bottleneck_forward.4} parent=11 // pred_fallthru
        _
      // Predicated region
      $region17: #{bottleneck_forward.4} parent=11 // pred_check
        %p149 = pneg %p99
      $region18: #{bottleneck_forward.4} parent=11 // pred_check_branch
        %151 = sbr.rel (%p149) target = $region20
      $region19: #{bottleneck_forward.4} parent=11 // pred_region
        %p152 = scmp.lt.s32.totalorder %s19, 0
        %s153 = scalar_select %p152, %s19, 0
        %s154 = scalar_lea.vmem %s2, %s153
      $region20: #{bottleneck_forward.4} parent=11 // pred_fallthru
        _
    $region12: #{bottleneck_forward.4} parent=5 // pred_fallthru
      _
    %p155 = scmp.lt.s32.totalorder %s9, 2
    // Predicated region
    $region21: #{bottleneck_forward.4} parent=5 // pred_check
      %p156 = pneg %p155
    $region22: #{bottleneck_forward.4} parent=5 // pred_check_branch
      %158 = sbr.rel (%p156) target = $region24
    $region23: #{bottleneck_forward.4} parent=5 // pred_region
      // Predicated region
      $region25: #{bottleneck_forward.4} parent=23 // pred_check
        %p159 = pneg %p41
      $region26: #{bottleneck_forward.4} parent=23 // pred_check_branch
        %161 = sbr.rel (%p159) target = $region28
      $region27: #{bottleneck_forward.4} parent=23 // pred_region
        %p162 = scmp.lt.s32.totalorder %s16, 1
        %s163 = scalar_select %p162, %s16, 1
        %s164 = smul.addr %s163, 48
        %s165 = smul.addr %s164, 4
        %s166 = scalar_lea.vmem %s0, %s165
      $region28: #{bottleneck_forward.4} parent=23 // pred_fallthru
        _
    $region24: #{bottleneck_forward.4} parent=5 // pred_fallthru
      _
    %p167 = scmp.le.s32.totalorder 1, %s9
    %p168 = scmp.lt.s32.totalorder %s9, 3
    %p169 = pnand %p167, %p168
    %p170 = pneg %p169
    // Predicated region
    $region29: #{bottleneck_forward.4} parent=5 // pred_check
      _
    $region30: #{bottleneck_forward.4} parent=5 // pred_check_branch
      %172 = sbr.rel (%p169) target = $region32
    $region31: #{bottleneck_forward.4} parent=5 // pred_region
      %s173 = ssub.s32 %s9, 1
      %p174 = scmp.lt.s32.totalorder %s18, 1
      %s175 = scalar_select %p174, %s18, 1
      %s176 = smul.addr %s175, 48
      %s177 = smul.addr %s176, 4
      %s178 = scalar_lea.vmem %s0, %s177
      %p179 = pneg %p47
      %p180 = pneg %p44
      %p181 = scmp.lt.s32.totalorder %s19, 0
      %s182 = scalar_select %p181, %s19, 0
      %s183 = smul.addr %s182, 2
      %s184 = scalar_lea.vmem %s1, %s183
      %p185 = pneg %p73
      %p186 = pneg %p70
      %p187 = scmp.lt.s32.totalorder %s19, 0
      %s188 = scalar_select %p187, %s19, 0
      %s189 = scalar_lea.vmem %s2, %s188
      %p190 = pneg %p99
      %p191 = pneg %p96
      %p192 = pneg %p127
      %p193 = pneg %p124
      %p194 = scmp.lt.s32.totalorder %s18, 1
      %s195 = scalar_select %p194, %s18, 1
      %p196 = scmp.lt.s32.totalorder %s19, 0
      %s197 = scalar_select %p196, %s19, 0
      %s198 = smul.addr %s195, 8
      %s199 = sadd.s32 %s197, %s198
      %s200 = smul.addr %s199, 4
      %s201 = scalar_lea.vmem %s3, %s200
      %p202 = scmp.lt.s32.totalorder %s18, 1
      %s203 = scalar_select %p202, %s18, 1
      %s204 = smul.addr %s203, 48
      %s205 = smul.addr %s204, 4
      %s206 = scalar_lea.vmem %s0, %s205
      %p207 = scmp.lt.s32.totalorder %s19, 0
      %s208 = scalar_select %p207, %s19, 0
      %s209 = smul.addr %s208, 2
      %s210 = scalar_lea.vmem %s1, %s209
      %p211 = scmp.lt.s32.totalorder %s19, 0
      %s212 = scalar_select %p211, %s19, 0
      %s213 = scalar_lea.vmem %s2, %s212
      %p214 = scmp.lt.s32.totalorder %s18, 1
      %s215 = scalar_select %p214, %s18, 1
      %p216 = scmp.lt.s32.totalorder %s19, 0
      %s217 = scalar_select %p216, %s19, 0
      %s218 = smul.addr %s215, 8
      %s219 = sadd.s32 %s217, %s218
      %s220 = smul.addr %s219, 4
      %s221 = scalar_lea.vmem %s3, %s220
      %v223 = vld [vmem:[%s206] sm:$0xf]
      %v224 = vld [vmem:[%s206 + $0x4] sm:$0xf]
      %v225 = vld [vmem:[%s206 + $0x8] sm:$0xf]
      %v226 = vld [vmem:[%s206 + $0xc] sm:$0xf]
      %v227 = vld [vmem:[%s206 + $0x10] sm:$0xf]
      %v228 = vld [vmem:[%s206 + $0x14] sm:$0xf]
      %v229 = vld [vmem:[%s206 + $0x18] sm:$0xf]
      %v230 = vld [vmem:[%s206 + $0x1c] sm:$0xf]
      %v231 = vld [vmem:[%s206 + $0x20] sm:$0xf]
      %v232 = vld [vmem:[%s210] sm:$0x3]
      %v242 = vunpack.c.l.b16 %v223
      %v243 = vunpack.c.l.b16 %v224
      %v244 = vunpack.c.l.b16 %v225
      %v245 = vunpack.c.l.b16 %v226
      %v246 = vunpack.c.l.b16 %v227
      %v247 = vunpack.c.l.b16 %v228
      %v248 = vunpack.c.l.b16 %v229
      %v249 = vunpack.c.l.b16 %v230
      %v250 = vunpack.c.l.b16 %v231
      %v251 = vpack.c.b16 %v243, %v242
      %v252 = vpack.c.b16 %v245, %v244
      %v253 = vpack.c.b16 %v247, %v246
      %v254 = vpack.c.b16 %v249, %v248
      %v255 = vpack.c.b16 %v250, %v250
      %vm256 = vcmask 31744
      %v258 = vsel %vm256, %v251, 0
      %v261 = vsel %vm256, %v252, 0
      %v264 = vsel %vm256, %v253, 0
      %v267 = vsel %vm256, %v254, 0
      %v270 = vsel %vm256, %v255, 0
      %vm272 = vcmask 1041408
      %v274 = vsel %vm272, %v232, 0
      %276 = vmatprep.subr.bf16.mxu0 0
      %277 = vmatpush1.bf16.msra.mxu0 0
      %278 = vmatprep.subr.bf16.mxu0 0
      %279 = vmatpush1.bf16.msra.mxu0 0
      %280 = vmatprep.subr.bf16.mxu0 0
      %281 = vmatpush1.bf16.msra.mxu0 0
      %282 = vmatprep.subr.bf16.mxu0 0
      %283 = vmatpush1.bf16.msra.mxu0 0
      %284 = vmatprep.subr.bf16.mxu0 0
      %285 = vmatpush1.bf16.msra.mxu0 0
      %286 = vmatprep.subr.bf16.mxu0 0
      %287 = vmatpush1.bf16.msra.mxu0 0
      %288 = vmatprep.subr.bf16.mxu0 0
      %289 = vmatpush1.bf16.msra.mxu0 0
      %290 = vmatprep.subr.bf16.mxu0 0
      %291 = vmatpush1.bf16.msra.mxu0 %v274
      %292 = vmatprep.subr.bf16.mxu0 0
      %293 = vmatpush2.bf16.msra.mxu0 0
      %294 = vmatprep.subr.bf16.mxu0 0
      %295 = vmatpush2.bf16.msra.mxu0 0
      %296 = vmatprep.subr.bf16.mxu0 0
      %297 = vmatpush2.bf16.msra.mxu0 0
      %298 = vmatprep.subr.bf16.mxu0 0
      %299 = vmatpush2.bf16.msra.mxu0 0
      %300 = vmatprep.subr.bf16.mxu0 0
      %301 = vmatpush2.bf16.msra.mxu0 0
      %302 = vmatprep.subr.bf16.mxu0 0
      %303 = vmatpush2.bf16.msra.mxu0 0
      %304 = vmatprep.subr.bf16.mxu0 0
      %305 = vmatpush2.bf16.msra.mxu0 0
      %306 = vmatprep.subr.bf16.mxu0 0
      %307 = vmatpush2.bf16.msra.mxu0 0
      %308 = vmatprep.mubr.bf16.mxu0 0
      %309 = vmatmul.mubr.bf16.gmra.mxu0 %v258
      %v310 = vpop.f32.mrf.mxu0
      %v311 = vadd.f32 0.0, %v310
      %v312 = vpop.f32.mrf.mxu0
      %v313 = vpop.f32.mrf.mxu0
      %v314 = vadd.f32 0.0, %v313
      %v315 = vpop.f32.mrf.mxu0
      %316 = vmatprep.mubr.bf16.mxu0 0
      %317 = vmatmul.mubr.bf16.gmra.mxu0 %v261
      %v318 = vpop.f32.mrf.mxu0
      %v319 = vadd.f32 0.0, %v318
      %v320 = vpop.f32.mrf.mxu0
      %v321 = vpop.f32.mrf.mxu0
      %v322 = vadd.f32 0.0, %v321
      %v323 = vpop.f32.mrf.mxu0
      %324 = vmatprep.mubr.bf16.mxu0 0
      %325 = vmatmul.mubr.bf16.gmra.mxu0 %v264
      %v326 = vpop.f32.mrf.mxu0
      %v327 = vadd.f32 0.0, %v326
      %v328 = vpop.f32.mrf.mxu0
      %v329 = vpop.f32.mrf.mxu0
      %v330 = vadd.f32 0.0, %v329
      %v331 = vpop.f32.mrf.mxu0
      %332 = vmatprep.mubr.bf16.mxu0 0
      %333 = vmatmul.mubr.bf16.gmra.mxu0 %v267
      %v334 = vpop.f32.mrf.mxu0
      %v335 = vadd.f32 0.0, %v334
      %v336 = vpop.f32.mrf.mxu0
      %v337 = vpop.f32.mrf.mxu0
      %v338 = vadd.f32 0.0, %v337
      %v339 = vpop.f32.mrf.mxu0
      %340 = vmatprep.mubr.bf16.mxu0 0
      %341 = vmatmul.mubr.bf16.gmra.mxu0 %v270
      %v342 = vpop.f32.mrf.mxu0
      %v343 = vadd.f32 0.0, %v342
      %v344 = vpop.f32.mrf.mxu0
      %v345 = vpop.f32.mrf.mxu0
      %v346 = vpop.f32.mrf.mxu0
      %347 = vdwg.mxu0
      %348 = vst.msk [vmem:[#allocation2] sm:$0xff] %vm256, %v311
      %349 = vst.msk [vmem:[#allocation2 + $0x8] sm:$0xff] %vm256, %v314
      %350 = vst.msk [vmem:[#allocation2 + $0x10] sm:$0xff] %vm256, %v319
      %351 = vst.msk [vmem:[#allocation2 + $0x18] sm:$0xff] %vm256, %v322
      %352 = vst.msk [vmem:[#allocation2 + $0x20] sm:$0xff] %vm256, %v327
      %353 = vst.msk [vmem:[#allocation2 + $0x28] sm:$0xff] %vm256, %v330
      %354 = vst.msk [vmem:[#allocation2 + $0x30] sm:$0xff] %vm256, %v335
      %355 = vst.msk [vmem:[#allocation2 + $0x38] sm:$0xff] %vm256, %v338
      %356 = vst.msk [vmem:[#allocation2 + $0x40] sm:$0xff] %vm256, %v343
      %s357 = scalar_lea.vmem %s206, 48
      %v358 = vld [vmem:[%s357] sm:$0xf]
      %v359 = vld [vmem:[%s357 + $0x4] sm:$0xf]
      %v360 = vld [vmem:[%s357 + $0x8] sm:$0xf]
      %v361 = vld [vmem:[%s357 + $0xc] sm:$0xf]
      %v362 = vld [vmem:[%s357 + $0x10] sm:$0xf]
      %v363 = vld [vmem:[%s357 + $0x14] sm:$0xf]
      %v364 = vld [vmem:[%s357 + $0x18] sm:$0xf]
      %v365 = vld [vmem:[%s357 + $0x1c] sm:$0xf]
      %v366 = vld [vmem:[%s357 + $0x20] sm:$0xf]
      %s367 = scalar_lea.vmem %s210, 2
      %v368 = vld [vmem:[%s367] sm:$0x3]
      %v378 = vunpack.c.l.b16 %v358
      %v379 = vunpack.c.l.b16 %v359
      %v380 = vunpack.c.l.b16 %v360
      %v381 = vunpack.c.l.b16 %v361
      %v382 = vunpack.c.l.b16 %v362
      %v383 = vunpack.c.l.b16 %v363
      %v384 = vunpack.c.l.b16 %v364
      %v385 = vunpack.c.l.b16 %v365
      %v386 = vunpack.c.l.b16 %v366
      %v387 = vpack.c.b16 %v379, %v378
      %v388 = vpack.c.b16 %v381, %v380
      %v389 = vpack.c.b16 %v383, %v382
      %v390 = vpack.c.b16 %v385, %v384
      %v391 = vpack.c.b16 %v386, %v386
      %v393 = vsel %vm256, %v387, 0
      %v396 = vsel %vm256, %v388, 0
      %v399 = vsel %vm256, %v389, 0
      %v402 = vsel %vm256, %v390, 0
      %v405 = vsel %vm256, %v391, 0
      %v408 = vsel %vm272, %v368, 0
      %410 = vmatprep.subr.bf16.mxu0 0
      %411 = vmatpush1.bf16.msra.mxu0 0
      %412 = vmatprep.subr.bf16.mxu0 0
      %413 = vmatpush1.bf16.msra.mxu0 0
      %414 = vmatprep.subr.bf16.mxu0 0
      %415 = vmatpush1.bf16.msra.mxu0 0
      %416 = vmatprep.subr.bf16.mxu0 0
      %417 = vmatpush1.bf16.msra.mxu0 0
      %418 = vmatprep.subr.bf16.mxu0 0
      %419 = vmatpush1.bf16.msra.mxu0 0
      %420 = vmatprep.subr.bf16.mxu0 0
      %421 = vmatpush1.bf16.msra.mxu0 0
      %422 = vmatprep.subr.bf16.mxu0 0
      %423 = vmatpush1.bf16.msra.mxu0 0
      %424 = vmatprep.subr.bf16.mxu0 0
      %425 = vmatpush1.bf16.msra.mxu0 %v408
      %426 = vmatprep.subr.bf16.mxu0 0
      %427 = vmatpush2.bf16.msra.mxu0 0
      %428 = vmatprep.subr.bf16.mxu0 0
      %429 = vmatpush2.bf16.msra.mxu0 0
      %430 = vmatprep.subr.bf16.mxu0 0
      %431 = vmatpush2.bf16.msra.mxu0 0
      %432 = vmatprep.subr.bf16.mxu0 0
      %433 = vmatpush2.bf16.msra.mxu0 0
      %434 = vmatprep.subr.bf16.mxu0 0
      %435 = vmatpush2.bf16.msra.mxu0 0
      %436 = vmatprep.subr.bf16.mxu0 0
      %437 = vmatpush2.bf16.msra.mxu0 0
      %438 = vmatprep.subr.bf16.mxu0 0
      %439 = vmatpush2.bf16.msra.mxu0 0
      %440 = vmatprep.subr.bf16.mxu0 0
      %441 = vmatpush2.bf16.msra.mxu0 0
      %442 = vmatprep.mubr.bf16.mxu0 0
      %443 = vmatmul.mubr.bf16.gmra.mxu0 %v393
      %v444 = vpop.f32.mrf.mxu0
      %v445 = vadd.f32 0.0, %v444
      %v446 = vpop.f32.mrf.mxu0
      %v447 = vpop.f32.mrf.mxu0
      %v448 = vadd.f32 0.0, %v447
      %v449 = vpop.f32.mrf.mxu0
      %450 = vmatprep.mubr.bf16.mxu0 0
      %451 = vmatmul.mubr.bf16.gmra.mxu0 %v396
      %v452 = vpop.f32.mrf.mxu0
      %v453 = vadd.f32 0.0, %v452
      %v454 = vpop.f32.mrf.mxu0
      %v455 = vpop.f32.mrf.mxu0
      %v456 = vadd.f32 0.0, %v455
      %v457 = vpop.f32.mrf.mxu0
      %458 = vmatprep.mubr.bf16.mxu0 0
      %459 = vmatmul.mubr.bf16.gmra.mxu0 %v399
      %v460 = vpop.f32.mrf.mxu0
      %v461 = vadd.f32 0.0, %v460
      %v462 = vpop.f32.mrf.mxu0
      %v463 = vpop.f32.mrf.mxu0
      %v464 = vadd.f32 0.0, %v463
      %v465 = vpop.f32.mrf.mxu0
      %466 = vmatprep.mubr.bf16.mxu0 0
      %467 = vmatmul.mubr.bf16.gmra.mxu0 %v402
      %v468 = vpop.f32.mrf.mxu0
      %v469 = vadd.f32 0.0, %v468
      %v470 = vpop.f32.mrf.mxu0
      %v471 = vpop.f32.mrf.mxu0
      %v472 = vadd.f32 0.0, %v471
      %v473 = vpop.f32.mrf.mxu0
      %474 = vmatprep.mubr.bf16.mxu0 0
      %475 = vmatmul.mubr.bf16.gmra.mxu0 %v405
      %v476 = vpop.f32.mrf.mxu0
      %v477 = vadd.f32 0.0, %v476
      %v478 = vpop.f32.mrf.mxu0
      %v479 = vpop.f32.mrf.mxu0
      %v480 = vpop.f32.mrf.mxu0
      %481 = vdwg.mxu0
      %v482 = vld [vmem:[#allocation2] sm:$0xff]
      %v483 = vld [vmem:[#allocation2 + $0x8] sm:$0xff]
      %v484 = vld [vmem:[#allocation2 + $0x10] sm:$0xff]
      %v485 = vld [vmem:[#allocation2 + $0x18] sm:$0xff]
      %v486 = vld [vmem:[#allocation2 + $0x20] sm:$0xff]
      %v487 = vld [vmem:[#allocation2 + $0x28] sm:$0xff]
      %v488 = vld [vmem:[#allocation2 + $0x30] sm:$0xff]
      %v489 = vld [vmem:[#allocation2 + $0x38] sm:$0xff]
      %v490 = vld [vmem:[#allocation2 + $0x40] sm:$0xff]
      %v491 = vadd.f32 %v482, %v445
      %v492 = vadd.f32 %v483, %v448
      %v493 = vadd.f32 %v484, %v453
      %v494 = vadd.f32 %v485, %v456
      %v495 = vadd.f32 %v486, %v461
      %v496 = vadd.f32 %v487, %v464
      %v497 = vadd.f32 %v488, %v469
      %v498 = vadd.f32 %v489, %v472
      %v499 = vadd.f32 %v490, %v477
      %500 = vst.msk [vmem:[#allocation2] sm:$0xff] %vm256, %v491
      %501 = vst.msk [vmem:[#allocation2 + $0x8] sm:$0xff] %vm256, %v492
      %502 = vst.msk [vmem:[#allocation2 + $0x10] sm:$0xff] %vm256, %v493
      %503 = vst.msk [vmem:[#allocation2 + $0x18] sm:$0xff] %vm256, %v494
      %504 = vst.msk [vmem:[#allocation2 + $0x20] sm:$0xff] %vm256, %v495
      %505 = vst.msk [vmem:[#allocation2 + $0x28] sm:$0xff] %vm256, %v496
      %506 = vst.msk [vmem:[#allocation2 + $0x30] sm:$0xff] %vm256, %v497
      %507 = vst.msk [vmem:[#allocation2 + $0x38] sm:$0xff] %vm256, %v498
      %508 = vst.msk [vmem:[#allocation2 + $0x40] sm:$0xff] %vm256, %v499
      %v509 = vld [vmem:[%s206] sm:$0xf]
      %v510 = vld [vmem:[%s206 + $0x4] sm:$0xf]
      %v511 = vld [vmem:[%s206 + $0x8] sm:$0xf]
      %v512 = vld [vmem:[%s206 + $0xc] sm:$0xf]
      %v513 = vld [vmem:[%s206 + $0x10] sm:$0xf]
      %v514 = vld [vmem:[%s206 + $0x14] sm:$0xf]
      %v515 = vld [vmem:[%s206 + $0x18] sm:$0xf]
      %v516 = vld [vmem:[%s206 + $0x1c] sm:$0xf]
      %v517 = vld [vmem:[%s206 + $0x20] sm:$0xf]
      %v518 = vld [vmem:[%s206 + $0x24] sm:$0x1]
      %s519 = scalar_lea.vmem %s210, 4
      %v520 = vld [vmem:[%s519] sm:$0x3]
      %v531 = vunpack.c.l.b16 %v509
      %v532 = vunpack.c.l.b16 %v510
      %v533 = vunpack.c.l.b16 %v511
      %v534 = vunpack.c.l.b16 %v512
      %v535 = vunpack.c.l.b16 %v513
      %v536 = vunpack.c.l.b16 %v514
      %v537 = vunpack.c.l.b16 %v515
      %v538 = vunpack.c.l.b16 %v516
      %v539 = vunpack.c.l.b16 %v517
      %v540 = vunpack.c.l.b16 %v518
      %v541 = vpack.c.b16 %v532, %v531
      %v542 = vpack.c.b16 %v534, %v533
      %v543 = vpack.c.b16 %v536, %v535
      %v544 = vpack.c.b16 %v538, %v537
      %v545 = vpack.c.b16 %v540, %v539
      %vm546 = vsmask.f32 7424
      %v548 = vshrl.u32 %v541, 16
      %v550 = vshll.u32 %v541, 16
      %v552 = vrot.slane %v550, 1
      %v553 = vor.u32 %v548, %v552
      %v555 = vshll.u32 %v542, 16
      %v557 = vrot.slane %v555, 1
      %v558 = vsel %vm546, %v553, %v557
      %v559 = vshrl.u32 %v542, 16
      %v561 = vor.u32 %v559, %v557
      %v563 = vshll.u32 %v543, 16
      %v565 = vrot.slane %v563, 1
      %v566 = vsel %vm546, %v561, %v565
      %v567 = vshrl.u32 %v543, 16
      %v569 = vor.u32 %v567, %v565
      %v571 = vshll.u32 %v544, 16
      %v573 = vrot.slane %v571, 1
      %v574 = vsel %vm546, %v569, %v573
      %v575 = vshrl.u32 %v544, 16
      %v577 = vor.u32 %v575, %v573
      %v579 = vshll.u32 %v545, 16
      %v581 = vrot.slane %v579, 1
      %v582 = vsel %vm546, %v577, %v581
      %v583 = vshrl.u32 %v545, 16
      %v585 = vor.u32 %v583, %v581
      %v587 = vsel %vm256, %v558, 0
      %v590 = vsel %vm256, %v566, 0
      %v593 = vsel %vm256, %v574, 0
      %v596 = vsel %vm256, %v582, 0
      %v599 = vsel %vm256, %v585, 0
      %v602 = vsel %vm272, %v520, 0
      %604 = vmatprep.subr.bf16.mxu0 0
      %605 = vmatpush1.bf16.msra.mxu0 0
      %606 = vmatprep.subr.bf16.mxu0 0
      %607 = vmatpush1.bf16.msra.mxu0 0
      %608 = vmatprep.subr.bf16.mxu0 0
      %609 = vmatpush1.bf16.msra.mxu0 0
      %610 = vmatprep.subr.bf16.mxu0 0
      %611 = vmatpush1.bf16.msra.mxu0 0
      %612 = vmatprep.subr.bf16.mxu0 0
      %613 = vmatpush1.bf16.msra.mxu0 0
      %614 = vmatprep.subr.bf16.mxu0 0
      %615 = vmatpush1.bf16.msra.mxu0 0
      %616 = vmatprep.subr.bf16.mxu0 0
      %617 = vmatpush1.bf16.msra.mxu0 0
      %618 = vmatprep.subr.bf16.mxu0 0
      %619 = vmatpush1.bf16.msra.mxu0 %v602
      %620 = vmatprep.subr.bf16.mxu0 0
      %621 = vmatpush2.bf16.msra.mxu0 0
      %622 = vmatprep.subr.bf16.mxu0 0
      %623 = vmatpush2.bf16.msra.mxu0 0
      %624 = vmatprep.subr.bf16.mxu0 0
      %625 = vmatpush2.bf16.msra.mxu0 0
      %626 = vmatprep.subr.bf16.mxu0 0
      %627 = vmatpush2.bf16.msra.mxu0 0
      %628 = vmatprep.subr.bf16.mxu0 0
      %629 = vmatpush2.bf16.msra.mxu0 0
      %630 = vmatprep.subr.bf16.mxu0 0
      %631 = vmatpush2.bf16.msra.mxu0 0
      %632 = vmatprep.subr.bf16.mxu0 0
      %633 = vmatpush2.bf16.msra.mxu0 0
      %634 = vmatprep.subr.bf16.mxu0 0
      %635 = vmatpush2.bf16.msra.mxu0 0
      %636 = vmatprep.mubr.bf16.mxu0 0
      %637 = vmatmul.mubr.bf16.gmra.mxu0 %v587
      %v638 = vpop.f32.mrf.mxu0
      %v639 = vadd.f32 0.0, %v638
      %v640 = vpop.f32.mrf.mxu0
      %v641 = vpop.f32.mrf.mxu0
      %v642 = vadd.f32 0.0, %v641
      %v643 = vpop.f32.mrf.mxu0
      %644 = vmatprep.mubr.bf16.mxu0 0
      %645 = vmatmul.mubr.bf16.gmra.mxu0 %v590
      %v646 = vpop.f32.mrf.mxu0
      %v647 = vadd.f32 0.0, %v646
      %v648 = vpop.f32.mrf.mxu0
      %v649 = vpop.f32.mrf.mxu0
      %v650 = vadd.f32 0.0, %v649
      %v651 = vpop.f32.mrf.mxu0
      %652 = vmatprep.mubr.bf16.mxu0 0
      %653 = vmatmul.mubr.bf16.gmra.mxu0 %v593
      %v654 = vpop.f32.mrf.mxu0
      %v655 = vadd.f32 0.0, %v654
      %v656 = vpop.f32.mrf.mxu0
      %v657 = vpop.f32.mrf.mxu0
      %v658 = vadd.f32 0.0, %v657
      %v659 = vpop.f32.mrf.mxu0
      %660 = vmatprep.mubr.bf16.mxu0 0
      %661 = vmatmul.mubr.bf16.gmra.mxu0 %v596
      %v662 = vpop.f32.mrf.mxu0
      %v663 = vadd.f32 0.0, %v662
      %v664 = vpop.f32.mrf.mxu0
      %v665 = vpop.f32.mrf.mxu0
      %v666 = vadd.f32 0.0, %v665
      %v667 = vpop.f32.mrf.mxu0
      %668 = vmatprep.mubr.bf16.mxu0 0
      %669 = vmatmul.mubr.bf16.gmra.mxu0 %v599
      %v670 = vpop.f32.mrf.mxu0
      %v671 = vadd.f32 0.0, %v670
      %v672 = vpop.f32.mrf.mxu0
      %v673 = vpop.f32.mrf.mxu0
      %v674 = vpop.f32.mrf.mxu0
      %675 = vdwg.mxu0
      %v676 = vld [vmem:[#allocation2] sm:$0xff]
      %v677 = vld [vmem:[#allocation2 + $0x8] sm:$0xff]
      %v678 = vld [vmem:[#allocation2 + $0x10] sm:$0xff]
      %v679 = vld [vmem:[#allocation2 + $0x18] sm:$0xff]
      %v680 = vld [vmem:[#allocation2 + $0x20] sm:$0xff]
      %v681 = vld [vmem:[#allocation2 + $0x28] sm:$0xff]
      %v682 = vld [vmem:[#allocation2 + $0x30] sm:$0xff]
      %v683 = vld [vmem:[#allocation2 + $0x38] sm:$0xff]
      %v684 = vld [vmem:[#allocation2 + $0x40] sm:$0xff]
      %v685 = vadd.f32 %v676, %v639
      %v686 = vadd.f32 %v677, %v642
      %v687 = vadd.f32 %v678, %v647
      %v688 = vadd.f32 %v679, %v650
      %v689 = vadd.f32 %v680, %v655
      %v690 = vadd.f32 %v681, %v658
      %v691 = vadd.f32 %v682, %v663
      %v692 = vadd.f32 %v683, %v666
      %v693 = vadd.f32 %v684, %v671
      %694 = vst.msk [vmem:[#allocation2] sm:$0xff] %vm256, %v685
      %695 = vst.msk [vmem:[#allocation2 + $0x8] sm:$0xff] %vm256, %v686
      %696 = vst.msk [vmem:[#allocation2 + $0x10] sm:$0xff] %vm256, %v687
      %697 = vst.msk [vmem:[#allocation2 + $0x18] sm:$0xff] %vm256, %v688
      %698 = vst.msk [vmem:[#allocation2 + $0x20] sm:$0xff] %vm256, %v689
      %699 = vst.msk [vmem:[#allocation2 + $0x28] sm:$0xff] %vm256, %v690
      %700 = vst.msk [vmem:[#allocation2 + $0x30] sm:$0xff] %vm256, %v691
      %701 = vst.msk [vmem:[#allocation2 + $0x38] sm:$0xff] %vm256, %v692
      %702 = vst.msk [vmem:[#allocation2 + $0x40] sm:$0xff] %vm256, %v693
      %s703 = scalar_lea.vmem %s206, 96
      %v704 = vld [vmem:[%s703] sm:$0xf]
      %v705 = vld [vmem:[%s703 + $0x4] sm:$0xf]
      %v706 = vld [vmem:[%s703 + $0x8] sm:$0xf]
      %v707 = vld [vmem:[%s703 + $0xc] sm:$0xf]
      %v708 = vld [vmem:[%s703 + $0x10] sm:$0xf]
      %v709 = vld [vmem:[%s703 + $0x14] sm:$0xf]
      %v710 = vld [vmem:[%s703 + $0x18] sm:$0xf]
      %v711 = vld [vmem:[%s703 + $0x1c] sm:$0xf]
      %v712 = vld [vmem:[%s703 + $0x20] sm:$0xf]
      %s713 = scalar_lea.vmem %s210, 6
      %v714 = vld [vmem:[%s713] sm:$0x3]
      %v724 = vunpack.c.l.b16 %v704
      %v725 = vunpack.c.l.b16 %v705
      %v726 = vunpack.c.l.b16 %v706
      %v727 = vunpack.c.l.b16 %v707
      %v728 = vunpack.c.l.b16 %v708
      %v729 = vunpack.c.l.b16 %v709
      %v730 = vunpack.c.l.b16 %v710
      %v731 = vunpack.c.l.b16 %v711
      %v732 = vunpack.c.l.b16 %v712
      %v733 = vpack.c.b16 %v725, %v724
      %v734 = vpack.c.b16 %v727, %v726
      %v735 = vpack.c.b16 %v729, %v728
      %v736 = vpack.c.b16 %v731, %v730
      %v737 = vpack.c.b16 %v732, %v732
      %v739 = vsel %vm256, %v733, 0
      %v742 = vsel %vm256, %v734, 0
      %v745 = vsel %vm256, %v735, 0
      %v748 = vsel %vm256, %v736, 0
      %v751 = vsel %vm256, %v737, 0
      %v754 = vsel %vm272, %v714, 0
      %756 = vmatprep.subr.bf16.mxu0 0
      %757 = vmatpush1.bf16.msra.mxu0 0
      %758 = vmatprep.subr.bf16.mxu0 0
      %759 = vmatpush1.bf16.msra.mxu0 0
      %760 = vmatprep.subr.bf16.mxu0 0
      %761 = vmatpush1.bf16.msra.mxu0 0
      %762 = vmatprep.subr.bf16.mxu0 0
      %763 = vmatpush1.bf16.msra.mxu0 0
      %764 = vmatprep.subr.bf16.mxu0 0
      %765 = vmatpush1.bf16.msra.mxu0 0
      %766 = vmatprep.subr.bf16.mxu0 0
      %767 = vmatpush1.bf16.msra.mxu0 0
      %768 = vmatprep.subr.bf16.mxu0 0
      %769 = vmatpush1.bf16.msra.mxu0 0
      %770 = vmatprep.subr.bf16.mxu0 0
      %771 = vmatpush1.bf16.msra.mxu0 %v754
      %772 = vmatprep.subr.bf16.mxu0 0
      %773 = vmatpush2.bf16.msra.mxu0 0
      %774 = vmatprep.subr.bf16.mxu0 0
      %775 = vmatpush2.bf16.msra.mxu0 0
      %776 = vmatprep.subr.bf16.mxu0 0
      %777 = vmatpush2.bf16.msra.mxu0 0
      %778 = vmatprep.subr.bf16.mxu0 0
      %779 = vmatpush2.bf16.msra.mxu0 0
      %780 = vmatprep.subr.bf16.mxu0 0
      %781 = vmatpush2.bf16.msra.mxu0 0
      %782 = vmatprep.subr.bf16.mxu0 0
      %783 = vmatpush2.bf16.msra.mxu0 0
      %784 = vmatprep.subr.bf16.mxu0 0
      %785 = vmatpush2.bf16.msra.mxu0 0
      %786 = vmatprep.subr.bf16.mxu0 0
      %787 = vmatpush2.bf16.msra.mxu0 0
      %788 = vmatprep.mubr.bf16.mxu0 0
      %789 = vmatmul.mubr.bf16.gmra.mxu0 %v739
      %v790 = vpop.f32.mrf.mxu0
      %v791 = vadd.f32 0.0, %v790
      %v792 = vpop.f32.mrf.mxu0
      %v793 = vpop.f32.mrf.mxu0
      %v794 = vadd.f32 0.0, %v793
      %v795 = vpop.f32.mrf.mxu0
      %796 = vmatprep.mubr.bf16.mxu0 0
      %797 = vmatmul.mubr.bf16.gmra.mxu0 %v742
      %v798 = vpop.f32.mrf.mxu0
      %v799 = vadd.f32 0.0, %v798
      %v800 = vpop.f32.mrf.mxu0
      %v801 = vpop.f32.mrf.mxu0
      %v802 = vadd.f32 0.0, %v801
      %v803 = vpop.f32.mrf.mxu0
      %804 = vmatprep.mubr.bf16.mxu0 0
      %805 = vmatmul.mubr.bf16.gmra.mxu0 %v745
      %v806 = vpop.f32.mrf.mxu0
      %v807 = vadd.f32 0.0, %v806
      %v808 = vpop.f32.mrf.mxu0
      %v809 = vpop.f32.mrf.mxu0
      %v810 = vadd.f32 0.0, %v809
      %v811 = vpop.f32.mrf.mxu0
      %812 = vmatprep.mubr.bf16.mxu0 0
      %813 = vmatmul.mubr.bf16.gmra.mxu0 %v748
      %v814 = vpop.f32.mrf.mxu0
      %v815 = vadd.f32 0.0, %v814
      %v816 = vpop.f32.mrf.mxu0
      %v817 = vpop.f32.mrf.mxu0
      %v818 = vadd.f32 0.0, %v817
      %v819 = vpop.f32.mrf.mxu0
      %820 = vmatprep.mubr.bf16.mxu0 0
      %821 = vmatmul.mubr.bf16.gmra.mxu0 %v751
      %v822 = vpop.f32.mrf.mxu0
      %v823 = vadd.f32 0.0, %v822
      %v824 = vpop.f32.mrf.mxu0
      %v825 = vpop.f32.mrf.mxu0
      %v826 = vpop.f32.mrf.mxu0
      %827 = vdwg.mxu0
      %v828 = vld [vmem:[#allocation2] sm:$0xff]
      %v829 = vld [vmem:[#allocation2 + $0x8] sm:$0xff]
      %v830 = vld [vmem:[#allocation2 + $0x10] sm:$0xff]
      %v831 = vld [vmem:[#allocation2 + $0x18] sm:$0xff]
      %v832 = vld [vmem:[#allocation2 + $0x20] sm:$0xff]
      %v833 = vld [vmem:[#allocation2 + $0x28] sm:$0xff]
      %v834 = vld [vmem:[#allocation2 + $0x30] sm:$0xff]
      %v835 = vld [vmem:[#allocation2 + $0x38] sm:$0xff]
      %v836 = vld [vmem:[#allocation2 + $0x40] sm:$0xff]
      %v837 = vadd.f32 %v828, %v791
      %v838 = vadd.f32 %v829, %v794
      %v839 = vadd.f32 %v830, %v799
      %v840 = vadd.f32 %v831, %v802
      %v841 = vadd.f32 %v832, %v807
      %v842 = vadd.f32 %v833, %v810
      %v843 = vadd.f32 %v834, %v815
      %v844 = vadd.f32 %v835, %v818
      %v845 = vadd.f32 %v836, %v823
      %846 = vst.msk [vmem:[#allocation2] sm:$0xff] %vm256, %v837
      %847 = vst.msk [vmem:[#allocation2 + $0x8] sm:$0xff] %vm256, %v838
      %848 = vst.msk [vmem:[#allocation2 + $0x10] sm:$0xff] %vm256, %v839
      %849 = vst.msk [vmem:[#allocation2 + $0x18] sm:$0xff] %vm256, %v840
      %850 = vst.msk [vmem:[#allocation2 + $0x20] sm:$0xff] %vm256, %v841
      %851 = vst.msk [vmem:[#allocation2 + $0x28] sm:$0xff] %vm256, %v842
      %852 = vst.msk [vmem:[#allocation2 + $0x30] sm:$0xff] %vm256, %v843
      %853 = vst.msk [vmem:[#allocation2 + $0x38] sm:$0xff] %vm256, %v844
      %854 = vst.msk [vmem:[#allocation2 + $0x40] sm:$0xff] %vm256, %v845
      %s855 = scalar_lea.vmem %s206, 144
      %v856 = vld [vmem:[%s855] sm:$0xf]
      %v857 = vld [vmem:[%s855 + $0x4] sm:$0xf]
      %v858 = vld [vmem:[%s855 + $0x8] sm:$0xf]
      %v859 = vld [vmem:[%s855 + $0xc] sm:$0xf]
      %v860 = vld [vmem:[%s855 + $0x10] sm:$0xf]
      %v861 = vld [vmem:[%s855 + $0x14] sm:$0xf]
      %v862 = vld [vmem:[%s855 + $0x18] sm:$0xf]
      %v863 = vld [vmem:[%s855 + $0x1c] sm:$0xf]
      %v864 = vld [vmem:[%s855 + $0x20] sm:$0xf]
      %s865 = scalar_lea.vmem %s210, 8
      %v866 = vld [vmem:[%s865] sm:$0x3]
      %v876 = vunpack.c.l.b16 %v856
      %v877 = vunpack.c.l.b16 %v857
      %v878 = vunpack.c.l.b16 %v858
      %v879 = vunpack.c.l.b16 %v859
      %v880 = vunpack.c.l.b16 %v860
      %v881 = vunpack.c.l.b16 %v861
      %v882 = vunpack.c.l.b16 %v862
      %v883 = vunpack.c.l.b16 %v863
      %v884 = vunpack.c.l.b16 %v864
      %v885 = vpack.c.b16 %v877, %v876
      %v886 = vpack.c.b16 %v879, %v878
      %v887 = vpack.c.b16 %v881, %v880
      %v888 = vpack.c.b16 %v883, %v882
      %v889 = vpack.c.b16 %v884, %v884
      %v891 = vsel %vm256, %v885, 0
      %v894 = vsel %vm256, %v886, 0
      %v897 = vsel %vm256, %v887, 0
      %v900 = vsel %vm256, %v888, 0
      %v903 = vsel %vm256, %v889, 0
      %v906 = vsel %vm272, %v866, 0
      %908 = vmatprep.subr.bf16.mxu0 0
      %909 = vmatpush1.bf16.msra.mxu0 0
      %910 = vmatprep.subr.bf16.mxu0 0
      %911 = vmatpush1.bf16.msra.mxu0 0
      %912 = vmatprep.subr.bf16.mxu0 0
      %913 = vmatpush1.bf16.msra.mxu0 0
      %914 = vmatprep.subr.bf16.mxu0 0
      %915 = vmatpush1.bf16.msra.mxu0 0
      %916 = vmatprep.subr.bf16.mxu0 0
      %917 = vmatpush1.bf16.msra.mxu0 0
      %918 = vmatprep.subr.bf16.mxu0 0
      %919 = vmatpush1.bf16.msra.mxu0 0
      %920 = vmatprep.subr.bf16.mxu0 0
      %921 = vmatpush1.bf16.msra.mxu0 0
      %922 = vmatprep.subr.bf16.mxu0 0
      %923 = vmatpush1.bf16.msra.mxu0 %v906
      %924 = vmatprep.subr.bf16.mxu0 0
      %925 = vmatpush2.bf16.msra.mxu0 0
      %926 = vmatprep.subr.bf16.mxu0 0
      %927 = vmatpush2.bf16.msra.mxu0 0
      %928 = vmatprep.subr.bf16.mxu0 0
      %929 = vmatpush2.bf16.msra.mxu0 0
      %930 = vmatprep.subr.bf16.mxu0 0
      %931 = vmatpush2.bf16.msra.mxu0 0
      %932 = vmatprep.subr.bf16.mxu0 0
      %933 = vmatpush2.bf16.msra.mxu0 0
      %934 = vmatprep.subr.bf16.mxu0 0
      %935 = vmatpush2.bf16.msra.mxu0 0
      %936 = vmatprep.subr.bf16.mxu0 0
      %937 = vmatpush2.bf16.msra.mxu0 0
      %938 = vmatprep.subr.bf16.mxu0 0
      %939 = vmatpush2.bf16.msra.mxu0 0
      %940 = vmatprep.mubr.bf16.mxu0 0
      %941 = vmatmul.mubr.bf16.gmra.mxu0 %v891
      %v942 = vpop.f32.mrf.mxu0
      %v943 = vadd.f32 0.0, %v942
      %v944 = vpop.f32.mrf.mxu0
      %v945 = vpop.f32.mrf.mxu0
      %v946 = vadd.f32 0.0, %v945
      %v947 = vpop.f32.mrf.mxu0
      %948 = vmatprep.mubr.bf16.mxu0 0
      %949 = vmatmul.mubr.bf16.gmra.mxu0 %v894
      %v950 = vpop.f32.mrf.mxu0
      %v951 = vadd.f32 0.0, %v950
      %v952 = vpop.f32.mrf.mxu0
      %v953 = vpop.f32.mrf.mxu0
      %v954 = vadd.f32 0.0, %v953
      %v955 = vpop.f32.mrf.mxu0
      %956 = vmatprep.mubr.bf16.mxu0 0
      %957 = vmatmul.mubr.bf16.gmra.mxu0 %v897
      %v958 = vpop.f32.mrf.mxu0
      %v959 = vadd.f32 0.0, %v958
      %v960 = vpop.f32.mrf.mxu0
      %v961 = vpop.f32.mrf.mxu0
      %v962 = vadd.f32 0.0, %v961
      %v963 = vpop.f32.mrf.mxu0
      %964 = vmatprep.mubr.bf16.mxu0 0
      %965 = vmatmul.mubr.bf16.gmra.mxu0 %v900
      %v966 = vpop.f32.mrf.mxu0
      %v967 = vadd.f32 0.0, %v966
      %v968 = vpop.f32.mrf.mxu0
      %v969 = vpop.f32.mrf.mxu0
      %v970 = vadd.f32 0.0, %v969
      %v971 = vpop.f32.mrf.mxu0
      %972 = vmatprep.mubr.bf16.mxu0 0
      %973 = vmatmul.mubr.bf16.gmra.mxu0 %v903
      %v974 = vpop.f32.mrf.mxu0
      %v975 = vadd.f32 0.0, %v974
      %v976 = vpop.f32.mrf.mxu0
      %v977 = vpop.f32.mrf.mxu0
      %v978 = vpop.f32.mrf.mxu0
      %979 = vdwg.mxu0
      %v980 = vld [vmem:[#allocation2] sm:$0xff]
      %v981 = vld [vmem:[#allocation2 + $0x8] sm:$0xff]
      %v982 = vld [vmem:[#allocation2 + $0x10] sm:$0xff]
      %v983 = vld [vmem:[#allocation2 + $0x18] sm:$0xff]
      %v984 = vld [vmem:[#allocation2 + $0x20] sm:$0xff]
      %v985 = vld [vmem:[#allocation2 + $0x28] sm:$0xff]
      %v986 = vld [vmem:[#allocation2 + $0x30] sm:$0xff]
      %v987 = vld [vmem:[#allocation2 + $0x38] sm:$0xff]
      %v988 = vld [vmem:[#allocation2 + $0x40] sm:$0xff]
      %v989 = vadd.f32 %v980, %v943
      %v990 = vadd.f32 %v981, %v946
      %v991 = vadd.f32 %v982, %v951
      %v992 = vadd.f32 %v983, %v954
      %v993 = vadd.f32 %v984, %v959
      %v994 = vadd.f32 %v985, %v962
      %v995 = vadd.f32 %v986, %v967
      %v996 = vadd.f32 %v987, %v970
      %v997 = vadd.f32 %v988, %v975
      %998 = vst.msk [vmem:[#allocation2] sm:$0xff] %vm256, %v989
      %999 = vst.msk [vmem:[#allocation2 + $0x8] sm:$0xff] %vm256, %v990
      %1000 = vst.msk [vmem:[#allocation2 + $0x10] sm:$0xff] %vm256, %v991
      %1001 = vst.msk [vmem:[#allocation2 + $0x18] sm:$0xff] %vm256, %v992
      %1002 = vst.msk [vmem:[#allocation2 + $0x20] sm:$0xff] %vm256, %v993
      %1003 = vst.msk [vmem:[#allocation2 + $0x28] sm:$0xff] %vm256, %v994
      %1004 = vst.msk [vmem:[#allocation2 + $0x30] sm:$0xff] %vm256, %v995
      %1005 = vst.msk [vmem:[#allocation2 + $0x38] sm:$0xff] %vm256, %v996
      %1006 = vst.msk [vmem:[#allocation2 + $0x40] sm:$0xff] %vm256, %v997
      %v1007 = vld [vmem:[%s703] sm:$0xf]
      %v1008 = vld [vmem:[%s703 + $0x4] sm:$0xf]
      %v1009 = vld [vmem:[%s703 + $0x8] sm:$0xf]
      %v1010 = vld [vmem:[%s703 + $0xc] sm:$0xf]
      %v1011 = vld [vmem:[%s703 + $0x10] sm:$0xf]
      %v1012 = vld [vmem:[%s703 + $0x14] sm:$0xf]
      %v1013 = vld [vmem:[%s703 + $0x18] sm:$0xf]
      %v1014 = vld [vmem:[%s703 + $0x1c] sm:$0xf]
      %v1015 = vld [vmem:[%s703 + $0x20] sm:$0xf]
      %v1016 = vld [vmem:[%s703 + $0x24] sm:$0x1]
      %s1017 = scalar_lea.vmem %s210, 10
      %v1018 = vld [vmem:[%s1017] sm:$0x3]
      %v1029 = vunpack.c.l.b16 %v1007
      %v1030 = vunpack.c.l.b16 %v1008
      %v1031 = vunpack.c.l.b16 %v1009
      %v1032 = vunpack.c.l.b16 %v1010
      %v1033 = vunpack.c.l.b16 %v1011
      %v1034 = vunpack.c.l.b16 %v1012
      %v1035 = vunpack.c.l.b16 %v1013
      %v1036 = vunpack.c.l.b16 %v1014
      %v1037 = vunpack.c.l.b16 %v1015
      %v1038 = vunpack.c.l.b16 %v1016
      %v1039 = vpack.c.b16 %v1030, %v1029
      %v1040 = vpack.c.b16 %v1032, %v1031
      %v1041 = vpack.c.b16 %v1034, %v1033
      %v1042 = vpack.c.b16 %v1036, %v1035
      %v1043 = vpack.c.b16 %v1038, %v1037
      %v1045 = vshrl.u32 %v1039, 16
      %v1047 = vshll.u32 %v1039, 16
      %v1049 = vrot.slane %v1047, 1
      %v1050 = vor.u32 %v1045, %v1049
      %v1052 = vshll.u32 %v1040, 16
      %v1054 = vrot.slane %v1052, 1
      %v1055 = vsel %vm546, %v1050, %v1054
      %v1056 = vshrl.u32 %v1040, 16
      %v1058 = vor.u32 %v1056, %v1054
      %v1060 = vshll.u32 %v1041, 16
      %v1062 = vrot.slane %v1060, 1
      %v1063 = vsel %vm546, %v1058, %v1062
      %v1064 = vshrl.u32 %v1041, 16
      %v1066 = vor.u32 %v1064, %v1062
      %v1068 = vshll.u32 %v1042, 16
      %v1070 = vrot.slane %v1068, 1
      %v1071 = vsel %vm546, %v1066, %v1070
      %v1072 = vshrl.u32 %v1042, 16
      %v1074 = vor.u32 %v1072, %v1070
      %v1076 = vshll.u32 %v1043, 16
      %v1078 = vrot.slane %v1076, 1
      %v1079 = vsel %vm546, %v1074, %v1078
      %v1080 = vshrl.u32 %v1043, 16
      %v1082 = vor.u32 %v1080, %v1078
      %v1084 = vsel %vm256, %v1055, 0
      %v1087 = vsel %vm256, %v1063, 0
      %v1090 = vsel %vm256, %v1071, 0
      %v1093 = vsel %vm256, %v1079, 0
      %v1096 = vsel %vm256, %v1082, 0
      %v1099 = vsel %vm272, %v1018, 0
      %1101 = vmatprep.subr.bf16.mxu0 0
      %1102 = vmatpush1.bf16.msra.mxu0 0
      %1103 = vmatprep.subr.bf16.mxu0 0
      %1104 = vmatpush1.bf16.msra.mxu0 0
      %1105 = vmatprep.subr.bf16.mxu0 0
      %1106 = vmatpush1.bf16.msra.mxu0 0
      %1107 = vmatprep.subr.bf16.mxu0 0
      %1108 = vmatpush1.bf16.msra.mxu0 0
      %1109 = vmatprep.subr.bf16.mxu0 0
      %1110 = vmatpush1.bf16.msra.mxu0 0
      %1111 = vmatprep.subr.bf16.mxu0 0
      %1112 = vmatpush1.bf16.msra.mxu0 0
      %1113 = vmatprep.subr.bf16.mxu0 0
      %1114 = vmatpush1.bf16.msra.mxu0 0
      %1115 = vmatprep.subr.bf16.mxu0 0
      %1116 = vmatpush1.bf16.msra.mxu0 %v1099
      %1117 = vmatprep.subr.bf16.mxu0 0
      %1118 = vmatpush2.bf16.msra.mxu0 0
      %1119 = vmatprep.subr.bf16.mxu0 0
      %1120 = vmatpush2.bf16.msra.mxu0 0
      %1121 = vmatprep.subr.bf16.mxu0 0
      %1122 = vmatpush2.bf16.msra.mxu0 0
      %1123 = vmatprep.subr.bf16.mxu0 0
      %1124 = vmatpush2.bf16.msra.mxu0 0
      %1125 = vmatprep.subr.bf16.mxu0 0
      %1126 = vmatpush2.bf16.msra.mxu0 0
      %1127 = vmatprep.subr.bf16.mxu0 0
      %1128 = vmatpush2.bf16.msra.mxu0 0
      %1129 = vmatprep.subr.bf16.mxu0 0
      %1130 = vmatpush2.bf16.msra.mxu0 0
      %1131 = vmatprep.subr.bf16.mxu0 0
      %1132 = vmatpush2.bf16.msra.mxu0 0
      %1133 = vmatprep.mubr.bf16.mxu0 0
      %1134 = vmatmul.mubr.bf16.gmra.mxu0 %v1084
      %v1135 = vpop.f32.mrf.mxu0
      %v1136 = vadd.f32 0.0, %v1135
      %v1137 = vpop.f32.mrf.mxu0
      %v1138 = vpop.f32.mrf.mxu0
      %v1139 = vadd.f32 0.0, %v1138
      %v1140 = vpop.f32.mrf.mxu0
      %1141 = vmatprep.mubr.bf16.mxu0 0
      %1142 = vmatmul.mubr.bf16.gmra.mxu0 %v1087
      %v1143 = vpop.f32.mrf.mxu0
      %v1144 = vadd.f32 0.0, %v1143
      %v1145 = vpop.f32.mrf.mxu0
      %v1146 = vpop.f32.mrf.mxu0
      %v1147 = vadd.f32 0.0, %v1146
      %v1148 = vpop.f32.mrf.mxu0
      %1149 = vmatprep.mubr.bf16.mxu0 0
      %1150 = vmatmul.mubr.bf16.gmra.mxu0 %v1090
      %v1151 = vpop.f32.mrf.mxu0
      %v1152 = vadd.f32 0.0, %v1151
      %v1153 = vpop.f32.mrf.mxu0
      %v1154 = vpop.f32.mrf.mxu0
      %v1155 = vadd.f32 0.0, %v1154
      %v1156 = vpop.f32.mrf.mxu0
      %1157 = vmatprep.mubr.bf16.mxu0 0
      %1158 = vmatmul.mubr.bf16.gmra.mxu0 %v1093
      %v1159 = vpop.f32.mrf.mxu0
      %v1160 = vadd.f32 0.0, %v1159
      %v1161 = vpop.f32.mrf.mxu0
      %v1162 = vpop.f32.mrf.mxu0
      %v1163 = vadd.f32 0.0, %v1162
      %v1164 = vpop.f32.mrf.mxu0
      %1165 = vmatprep.mubr.bf16.mxu0 0
      %1166 = vmatmul.mubr.bf16.gmra.mxu0 %v1096
      %v1167 = vpop.f32.mrf.mxu0
      %v1168 = vadd.f32 0.0, %v1167
      %v1169 = vpop.f32.mrf.mxu0
      %v1170 = vpop.f32.mrf.mxu0
      %v1171 = vpop.f32.mrf.mxu0
      %1172 = vdwg.mxu0
      %v1173 = vld [vmem:[#allocation2] sm:$0xff]
      %v1174 = vld [vmem:[#allocation2 + $0x8] sm:$0xff]
      %v1175 = vld [vmem:[#allocation2 + $0x10] sm:$0xff]
      %v1176 = vld [vmem:[#allocation2 + $0x18] sm:$0xff]
      %v1177 = vld [vmem:[#allocation2 + $0x20] sm:$0xff]
      %v1178 = vld [vmem:[#allocation2 + $0x28] sm:$0xff]
      %v1179 = vld [vmem:[#allocation2 + $0x30] sm:$0xff]
      %v1180 = vld [vmem:[#allocation2 + $0x38] sm:$0xff]
      %v1181 = vld [vmem:[#allocation2 + $0x40] sm:$0xff]
      %v1182 = vadd.f32 %v1173, %v1136
      %v1183 = vadd.f32 %v1174, %v1139
      %v1184 = vadd.f32 %v1175, %v1144
      %v1185 = vadd.f32 %v1176, %v1147
      %v1186 = vadd.f32 %v1177, %v1152
      %v1187 = vadd.f32 %v1178, %v1155
      %v1188 = vadd.f32 %v1179, %v1160
      %v1189 = vadd.f32 %v1180, %v1163
      %v1190 = vadd.f32 %v1181, %v1168
      %1191 = vst.msk [vmem:[#allocation2] sm:$0xff] %vm256, %v1182
      %1192 = vst.msk [vmem:[#allocation2 + $0x8] sm:$0xff] %vm256, %v1183
      %1193 = vst.msk [vmem:[#allocation2 + $0x10] sm:$0xff] %vm256, %v1184
      %1194 = vst.msk [vmem:[#allocation2 + $0x18] sm:$0xff] %vm256, %v1185
      %1195 = vst.msk [vmem:[#allocation2 + $0x20] sm:$0xff] %vm256, %v1186
      %1196 = vst.msk [vmem:[#allocation2 + $0x28] sm:$0xff] %vm256, %v1187
      %1197 = vst.msk [vmem:[#allocation2 + $0x30] sm:$0xff] %vm256, %v1188
      %1198 = vst.msk [vmem:[#allocation2 + $0x38] sm:$0xff] %vm256, %v1189
      %1199 = vst.msk [vmem:[#allocation2 + $0x40] sm:$0xff] %vm256, %v1190
      %v1200 = vld [vmem:[%s206 + $0x4] sm:$0xf]
      %v1201 = vld [vmem:[%s206 + $0x8] sm:$0xf]
      %v1202 = vld [vmem:[%s206 + $0xc] sm:$0xf]
      %v1203 = vld [vmem:[%s206 + $0x10] sm:$0xf]
      %v1204 = vld [vmem:[%s206 + $0x14] sm:$0xf]
      %v1205 = vld [vmem:[%s206 + $0x18] sm:$0xf]
      %v1206 = vld [vmem:[%s206 + $0x1c] sm:$0xf]
      %v1207 = vld [vmem:[%s206 + $0x20] sm:$0xf]
      %v1208 = vld [vmem:[%s206 + $0x24] sm:$0xf]
      %v1209 = vld [vmem:[%s206 + $0x28] sm:$0x1]
      %s1210 = scalar_lea.vmem %s210, 12
      %v1211 = vld [vmem:[%s1210] sm:$0x3]
      %v1222 = vunpack.c.l.b16 %v1200
      %v1223 = vunpack.c.l.b16 %v1201
      %v1224 = vunpack.c.l.b16 %v1202
      %v1225 = vunpack.c.l.b16 %v1203
      %v1226 = vunpack.c.l.b16 %v1204
      %v1227 = vunpack.c.l.b16 %v1205
      %v1228 = vunpack.c.l.b16 %v1206
      %v1229 = vunpack.c.l.b16 %v1207
      %v1230 = vunpack.c.l.b16 %v1208
      %v1231 = vunpack.c.l.b16 %v1209
      %v1232 = vpack.c.b16 %v1223, %v1222
      %v1233 = vpack.c.b16 %v1225, %v1224
      %v1234 = vpack.c.b16 %v1227, %v1226
      %v1235 = vpack.c.b16 %v1229, %v1228
      %v1236 = vpack.c.b16 %v1231, %v1230
      %v1238 = vshrl.u32 %v1232, 16
      %v1240 = vshll.u32 %v1232, 16
      %v1242 = vrot.slane %v1240, 1
      %v1243 = vor.u32 %v1238, %v1242
      %v1245 = vshll.u32 %v1233, 16
      %v1247 = vrot.slane %v1245, 1
      %v1248 = vsel %vm546, %v1243, %v1247
      %v1249 = vshrl.u32 %v1233, 16
      %v1251 = vor.u32 %v1249, %v1247
      %v1253 = vshll.u32 %v1234, 16
      %v1255 = vrot.slane %v1253, 1
      %v1256 = vsel %vm546, %v1251, %v1255
      %v1257 = vshrl.u32 %v1234, 16
      %v1259 = vor.u32 %v1257, %v1255
      %v1261 = vshll.u32 %v1235, 16
      %v1263 = vrot.slane %v1261, 1
      %v1264 = vsel %vm546, %v1259, %v1263
      %v1265 = vshrl.u32 %v1235, 16
      %v1267 = vor.u32 %v1265, %v1263
      %v1269 = vshll.u32 %v1236, 16
      %v1271 = vrot.slane %v1269, 1
      %v1272 = vsel %vm546, %v1267, %v1271
      %v1273 = vshrl.u32 %v1236, 16
      %v1275 = vor.u32 %v1273, %v1271
      %v1277 = vsel %vm256, %v1248, 0
      %v1280 = vsel %vm256, %v1256, 0
      %v1283 = vsel %vm256, %v1264, 0
      %v1286 = vsel %vm256, %v1272, 0
      %v1289 = vsel %vm256, %v1275, 0
      %v1292 = vsel %vm272, %v1211, 0
      %1294 = vmatprep.subr.bf16.mxu0 0
      %1295 = vmatpush1.bf16.msra.mxu0 0
      %1296 = vmatprep.subr.bf16.mxu0 0
      %1297 = vmatpush1.bf16.msra.mxu0 0
      %1298 = vmatprep.subr.bf16.mxu0 0
      %1299 = vmatpush1.bf16.msra.mxu0 0
      %1300 = vmatprep.subr.bf16.mxu0 0
      %1301 = vmatpush1.bf16.msra.mxu0 0
      %1302 = vmatprep.subr.bf16.mxu0 0
      %1303 = vmatpush1.bf16.msra.mxu0 0
      %1304 = vmatprep.subr.bf16.mxu0 0
      %1305 = vmatpush1.bf16.msra.mxu0 0
      %1306 = vmatprep.subr.bf16.mxu0 0
      %1307 = vmatpush1.bf16.msra.mxu0 0
      %1308 = vmatprep.subr.bf16.mxu0 0
      %1309 = vmatpush1.bf16.msra.mxu0 %v1292
      %1310 = vmatprep.subr.bf16.mxu0 0
      %1311 = vmatpush2.bf16.msra.mxu0 0
      %1312 = vmatprep.subr.bf16.mxu0 0
      %1313 = vmatpush2.bf16.msra.mxu0 0
      %1314 = vmatprep.subr.bf16.mxu0 0
      %1315 = vmatpush2.bf16.msra.mxu0 0
      %1316 = vmatprep.subr.bf16.mxu0 0
      %1317 = vmatpush2.bf16.msra.mxu0 0
      %1318 = vmatprep.subr.bf16.mxu0 0
      %1319 = vmatpush2.bf16.msra.mxu0 0
      %1320 = vmatprep.subr.bf16.mxu0 0
      %1321 = vmatpush2.bf16.msra.mxu0 0
      %1322 = vmatprep.subr.bf16.mxu0 0
      %1323 = vmatpush2.bf16.msra.mxu0 0
      %1324 = vmatprep.subr.bf16.mxu0 0
      %1325 = vmatpush2.bf16.msra.mxu0 0
      %1326 = vmatprep.mubr.bf16.mxu0 0
      %1327 = vmatmul.mubr.bf16.gmra.mxu0 %v1277
      %v1328 = vpop.f32.mrf.mxu0
      %v1329 = vadd.f32 0.0, %v1328
      %v1330 = vpop.f32.mrf.mxu0
      %v1331 = vpop.f32.mrf.mxu0
      %v1332 = vadd.f32 0.0, %v1331
      %v1333 = vpop.f32.mrf.mxu0
      %1334 = vmatprep.mubr.bf16.mxu0 0
      %1335 = vmatmul.mubr.bf16.gmra.mxu0 %v1280
      %v1336 = vpop.f32.mrf.mxu0
      %v1337 = vadd.f32 0.0, %v1336
      %v1338 = vpop.f32.mrf.mxu0
      %v1339 = vpop.f32.mrf.mxu0
      %v1340 = vadd.f32 0.0, %v1339
      %v1341 = vpop.f32.mrf.mxu0
      %1342 = vmatprep.mubr.bf16.mxu0 0
      %1343 = vmatmul.mubr.bf16.gmra.mxu0 %v1283
      %v1344 = vpop.f32.mrf.mxu0
      %v1345 = vadd.f32 0.0, %v1344
      %v1346 = vpop.f32.mrf.mxu0
      %v1347 = vpop.f32.mrf.mxu0
      %v1348 = vadd.f32 0.0, %v1347
      %v1349 = vpop.f32.mrf.mxu0
      %1350 = vmatprep.mubr.bf16.mxu0 0
      %1351 = vmatmul.mubr.bf16.gmra.mxu0 %v1286
      %v1352 = vpop.f32.mrf.mxu0
      %v1353 = vadd.f32 0.0, %v1352
      %v1354 = vpop.f32.mrf.mxu0
      %v1355 = vpop.f32.mrf.mxu0
      %v1356 = vadd.f32 0.0, %v1355
      %v1357 = vpop.f32.mrf.mxu0
      %1358 = vmatprep.mubr.bf16.mxu0 0
      %1359 = vmatmul.mubr.bf16.gmra.mxu0 %v1289
      %v1360 = vpop.f32.mrf.mxu0
      %v1361 = vadd.f32 0.0, %v1360
      %v1362 = vpop.f32.mrf.mxu0
      %v1363 = vpop.f32.mrf.mxu0
      %v1364 = vpop.f32.mrf.mxu0
      %1365 = vdwg.mxu0
      %v1366 = vld [vmem:[#allocation2] sm:$0xff]
      %v1367 = vld [vmem:[#allocation2 + $0x8] sm:$0xff]
      %v1368 = vld [vmem:[#allocation2 + $0x10] sm:$0xff]
      %v1369 = vld [vmem:[#allocation2 + $0x18] sm:$0xff]
      %v1370 = vld [vmem:[#allocation2 + $0x20] sm:$0xff]
      %v1371 = vld [vmem:[#allocation2 + $0x28] sm:$0xff]
      %v1372 = vld [vmem:[#allocation2 + $0x30] sm:$0xff]
      %v1373 = vld [vmem:[#allocation2 + $0x38] sm:$0xff]
      %v1374 = vld [vmem:[#allocation2 + $0x40] sm:$0xff]
      %v1375 = vadd.f32 %v1366, %v1329
      %v1376 = vadd.f32 %v1367, %v1332
      %v1377 = vadd.f32 %v1368, %v1337
      %v1378 = vadd.f32 %v1369, %v1340
      %v1379 = vadd.f32 %v1370, %v1345
      %v1380 = vadd.f32 %v1371, %v1348
      %v1381 = vadd.f32 %v1372, %v1353
      %v1382 = vadd.f32 %v1373, %v1356
      %v1383 = vadd.f32 %v1374, %v1361
      %1384 = vst.msk [vmem:[#allocation2] sm:$0xff] %vm256, %v1375
      %1385 = vst.msk [vmem:[#allocation2 + $0x8] sm:$0xff] %vm256, %v1376
      %1386 = vst.msk [vmem:[#allocation2 + $0x10] sm:$0xff] %vm256, %v1377
      %1387 = vst.msk [vmem:[#allocation2 + $0x18] sm:$0xff] %vm256, %v1378
      %1388 = vst.msk [vmem:[#allocation2 + $0x20] sm:$0xff] %vm256, %v1379
      %1389 = vst.msk [vmem:[#allocation2 + $0x28] sm:$0xff] %vm256, %v1380
      %1390 = vst.msk [vmem:[#allocation2 + $0x30] sm:$0xff] %vm256, %v1381
      %1391 = vst.msk [vmem:[#allocation2 + $0x38] sm:$0xff] %vm256, %v1382
      %1392 = vst.msk [vmem:[#allocation2 + $0x40] sm:$0xff] %vm256, %v1383
      %v1393 = vld [vmem:[%s357 + $0x4] sm:$0xf]
      %v1394 = vld [vmem:[%s357 + $0x8] sm:$0xf]
      %v1395 = vld [vmem:[%s357 + $0xc] sm:$0xf]
      %v1396 = vld [vmem:[%s357 + $0x10] sm:$0xf]
      %v1397 = vld [vmem:[%s357 + $0x14] sm:$0xf]
      %v1398 = vld [vmem:[%s357 + $0x18] sm:$0xf]
      %v1399 = vld [vmem:[%s357 + $0x1c] sm:$0xf]
      %v1400 = vld [vmem:[%s357 + $0x20] sm:$0xf]
      %v1401 = vld [vmem:[%s357 + $0x24] sm:$0xf]
      %v1402 = vld [vmem:[%s357 + $0x28] sm:$0x1]
      %s1403 = scalar_lea.vmem %s210, 14
      %v1404 = vld [vmem:[%s1403] sm:$0x3]
      %v1415 = vunpack.c.l.b16 %v1393
      %v1416 = vunpack.c.l.b16 %v1394
      %v1417 = vunpack.c.l.b16 %v1395
      %v1418 = vunpack.c.l.b16 %v1396
      %v1419 = vunpack.c.l.b16 %v1397
      %v1420 = vunpack.c.l.b16 %v1398
      %v1421 = vunpack.c.l.b16 %v1399
      %v1422 = vunpack.c.l.b16 %v1400
      %v1423 = vunpack.c.l.b16 %v1401
      %v1424 = vunpack.c.l.b16 %v1402
      %v1425 = vpack.c.b16 %v1416, %v1415
      %v1426 = vpack.c.b16 %v1418, %v1417
      %v1427 = vpack.c.b16 %v1420, %v1419
      %v1428 = vpack.c.b16 %v1422, %v1421
      %v1429 = vpack.c.b16 %v1424, %v1423
      %v1431 = vshrl.u32 %v1425, 16
      %v1433 = vshll.u32 %v1425, 16
      %v1435 = vrot.slane %v1433, 1
      %v1436 = vor.u32 %v1431, %v1435
      %v1438 = vshll.u32 %v1426, 16
      %v1440 = vrot.slane %v1438, 1
      %v1441 = vsel %vm546, %v1436, %v1440
      %v1442 = vshrl.u32 %v1426, 16
      %v1444 = vor.u32 %v1442, %v1440
      %v1446 = vshll.u32 %v1427, 16
      %v1448 = vrot.slane %v1446, 1
      %v1449 = vsel %vm546, %v1444, %v1448
      %v1450 = vshrl.u32 %v1427, 16
      %v1452 = vor.u32 %v1450, %v1448
      %v1454 = vshll.u32 %v1428, 16
      %v1456 = vrot.slane %v1454, 1
      %v1457 = vsel %vm546, %v1452, %v1456
      %v1458 = vshrl.u32 %v1428, 16
      %v1460 = vor.u32 %v1458, %v1456
      %v1462 = vshll.u32 %v1429, 16
      %v1464 = vrot.slane %v1462, 1
      %v1465 = vsel %vm546, %v1460, %v1464
      %v1466 = vshrl.u32 %v1429, 16
      %v1468 = vor.u32 %v1466, %v1464
      %v1470 = vsel %vm256, %v1441, 0
      %v1473 = vsel %vm256, %v1449, 0
      %v1476 = vsel %vm256, %v1457, 0
      %v1479 = vsel %vm256, %v1465, 0
      %v1482 = vsel %vm256, %v1468, 0
      %v1485 = vsel %vm272, %v1404, 0
      %1487 = vmatprep.subr.bf16.mxu0 0
      %1488 = vmatpush1.bf16.msra.mxu0 0
      %1489 = vmatprep.subr.bf16.mxu0 0
      %1490 = vmatpush1.bf16.msra.mxu0 0
      %1491 = vmatprep.subr.bf16.mxu0 0
      %1492 = vmatpush1.bf16.msra.mxu0 0
      %1493 = vmatprep.subr.bf16.mxu0 0
      %1494 = vmatpush1.bf16.msra.mxu0 0
      %1495 = vmatprep.subr.bf16.mxu0 0
      %1496 = vmatpush1.bf16.msra.mxu0 0
      %1497 = vmatprep.subr.bf16.mxu0 0
      %1498 = vmatpush1.bf16.msra.mxu0 0
      %1499 = vmatprep.subr.bf16.mxu0 0
      %1500 = vmatpush1.bf16.msra.mxu0 0
      %1501 = vmatprep.subr.bf16.mxu0 0
      %1502 = vmatpush1.bf16.msra.mxu0 %v1485
      %1503 = vmatprep.subr.bf16.mxu0 0
      %1504 = vmatpush2.bf16.msra.mxu0 0
      %1505 = vmatprep.subr.bf16.mxu0 0
      %1506 = vmatpush2.bf16.msra.mxu0 0
      %1507 = vmatprep.subr.bf16.mxu0 0
      %1508 = vmatpush2.bf16.msra.mxu0 0
      %1509 = vmatprep.subr.bf16.mxu0 0
      %1510 = vmatpush2.bf16.msra.mxu0 0
      %1511 = vmatprep.subr.bf16.mxu0 0
      %1512 = vmatpush2.bf16.msra.mxu0 0
      %1513 = vmatprep.subr.bf16.mxu0 0
      %1514 = vmatpush2.bf16.msra.mxu0 0
      %1515 = vmatprep.subr.bf16.mxu0 0
      %1516 = vmatpush2.bf16.msra.mxu0 0
      %1517 = vmatprep.subr.bf16.mxu0 0
      %1518 = vmatpush2.bf16.msra.mxu0 0
      %1519 = vmatprep.mubr.bf16.mxu0 0
      %1520 = vmatmul.mubr.bf16.gmra.mxu0 %v1470
      %v1521 = vpop.f32.mrf.mxu0
      %v1522 = vadd.f32 0.0, %v1521
      %v1523 = vpop.f32.mrf.mxu0
      %v1524 = vpop.f32.mrf.mxu0
      %v1525 = vadd.f32 0.0, %v1524
      %v1526 = vpop.f32.mrf.mxu0
      %1527 = vmatprep.mubr.bf16.mxu0 0
      %1528 = vmatmul.mubr.bf16.gmra.mxu0 %v1473
      %v1529 = vpop.f32.mrf.mxu0
      %v1530 = vadd.f32 0.0, %v1529
      %v1531 = vpop.f32.mrf.mxu0
      %v1532 = vpop.f32.mrf.mxu0
      %v1533 = vadd.f32 0.0, %v1532
      %v1534 = vpop.f32.mrf.mxu0
      %1535 = vmatprep.mubr.bf16.mxu0 0
      %1536 = vmatmul.mubr.bf16.gmra.mxu0 %v1476
      %v1537 = vpop.f32.mrf.mxu0
      %v1538 = vadd.f32 0.0, %v1537
      %v1539 = vpop.f32.mrf.mxu0
      %v1540 = vpop.f32.mrf.mxu0
      %v1541 = vadd.f32 0.0, %v1540
      %v1542 = vpop.f32.mrf.mxu0
      %1543 = vmatprep.mubr.bf16.mxu0 0
      %1544 = vmatmul.mubr.bf16.gmra.mxu0 %v1479
      %v1545 = vpop.f32.mrf.mxu0
      %v1546 = vadd.f32 0.0, %v1545
      %v1547 = vpop.f32.mrf.mxu0
      %v1548 = vpop.f32.mrf.mxu0
      %v1549 = vadd.f32 0.0, %v1548
      %v1550 = vpop.f32.mrf.mxu0
      %1551 = vmatprep.mubr.bf16.mxu0 0
      %1552 = vmatmul.mubr.bf16.gmra.mxu0 %v1482
      %v1553 = vpop.f32.mrf.mxu0
      %v1554 = vadd.f32 0.0, %v1553
      %v1555 = vpop.f32.mrf.mxu0
      %v1556 = vpop.f32.mrf.mxu0
      %v1557 = vpop.f32.mrf.mxu0
      %1558 = vdwg.mxu0
      %v1559 = vld [vmem:[#allocation2] sm:$0xff]
      %v1560 = vld [vmem:[#allocation2 + $0x8] sm:$0xff]
      %v1561 = vld [vmem:[#allocation2 + $0x10] sm:$0xff]
      %v1562 = vld [vmem:[#allocation2 + $0x18] sm:$0xff]
      %v1563 = vld [vmem:[#allocation2 + $0x20] sm:$0xff]
      %v1564 = vld [vmem:[#allocation2 + $0x28] sm:$0xff]
      %v1565 = vld [vmem:[#allocation2 + $0x30] sm:$0xff]
      %v1566 = vld [vmem:[#allocation2 + $0x38] sm:$0xff]
      %v1567 = vld [vmem:[#allocation2 + $0x40] sm:$0xff]
      %v1568 = vadd.f32 %v1559, %v1522
      %v1569 = vadd.f32 %v1560, %v1525
      %v1570 = vadd.f32 %v1561, %v1530
      %v1571 = vadd.f32 %v1562, %v1533
      %v1572 = vadd.f32 %v1563, %v1538
      %v1573 = vadd.f32 %v1564, %v1541
      %v1574 = vadd.f32 %v1565, %v1546
      %v1575 = vadd.f32 %v1566, %v1549
      %v1576 = vadd.f32 %v1567, %v1554
      %1577 = vst.msk [vmem:[#allocation2] sm:$0xff] %vm256, %v1568
      %1578 = vst.msk [vmem:[#allocation2 + $0x8] sm:$0xff] %vm256, %v1569
      %1579 = vst.msk [vmem:[#allocation2 + $0x10] sm:$0xff] %vm256, %v1570
      %1580 = vst.msk [vmem:[#allocation2 + $0x18] sm:$0xff] %vm256, %v1571
      %1581 = vst.msk [vmem:[#allocation2 + $0x20] sm:$0xff] %vm256, %v1572
      %1582 = vst.msk [vmem:[#allocation2 + $0x28] sm:$0xff] %vm256, %v1573
      %1583 = vst.msk [vmem:[#allocation2 + $0x30] sm:$0xff] %vm256, %v1574
      %1584 = vst.msk [vmem:[#allocation2 + $0x38] sm:$0xff] %vm256, %v1575
      %1585 = vst.msk [vmem:[#allocation2 + $0x40] sm:$0xff] %vm256, %v1576
      %v1586 = vld [vmem:[%s206 + $0x4] sm:$0xe]
      %v1587 = vld [vmem:[%s206 + $0x8] sm:$0xf]
      %v1588 = vld [vmem:[%s206 + $0xc] sm:$0xf]
      %v1589 = vld [vmem:[%s206 + $0x10] sm:$0xf]
      %v1590 = vld [vmem:[%s206 + $0x14] sm:$0xf]
      %v1591 = vld [vmem:[%s206 + $0x18] sm:$0xf]
      %v1592 = vld [vmem:[%s206 + $0x1c] sm:$0xf]
      %v1593 = vld [vmem:[%s206 + $0x20] sm:$0xf]
      %v1594 = vld [vmem:[%s206 + $0x24] sm:$0xf]
      %v1595 = vld [vmem:[%s206 + $0x28] sm:$0x1]
      %s1596 = scalar_lea.vmem %s210, 16
      %v1597 = vld [vmem:[%s1596] sm:$0x3]
      %v1608 = vunpack.c.l.b16 %v1586
      %v1609 = vunpack.c.l.b16 %v1587
      %v1610 = vunpack.c.l.b16 %v1588
      %v1611 = vunpack.c.l.b16 %v1589
      %v1612 = vunpack.c.l.b16 %v1590
      %v1613 = vunpack.c.l.b16 %v1591
      %v1614 = vunpack.c.l.b16 %v1592
      %v1615 = vunpack.c.l.b16 %v1593
      %v1616 = vunpack.c.l.b16 %v1594
      %v1617 = vunpack.c.l.b16 %v1595
      %v1618 = vpack.c.b16 %v1609, %v1608
      %v1619 = vpack.c.b16 %v1611, %v1610
      %v1620 = vpack.c.b16 %v1613, %v1612
      %v1621 = vpack.c.b16 %v1615, %v1614
      %v1622 = vpack.c.b16 %v1617, %v1616
      %vm1623 = vcmask 1046528
      %v1624 = vrot.slane %v1618, 1
      %v1625 = vrot.slane %v1619, 1
      %v1626 = vsel %vm1623, %v1624, %v1625
      %v1627 = vrot.slane %v1620, 1
      %v1628 = vsel %vm1623, %v1625, %v1627
      %v1629 = vrot.slane %v1621, 1
      %v1630 = vsel %vm1623, %v1627, %v1629
      %v1631 = vrot.slane %v1622, 1
      %v1632 = vsel %vm1623, %v1629, %v1631
      %v1634 = vsel %vm256, %v1626, 0
      %v1637 = vsel %vm256, %v1628, 0
      %v1640 = vsel %vm256, %v1630, 0
      %v1643 = vsel %vm256, %v1632, 0
      %v1646 = vsel %vm256, %v1631, 0
      %v1649 = vsel %vm272, %v1597, 0
      %1651 = vmatprep.subr.bf16.mxu0 0
      %1652 = vmatpush1.bf16.msra.mxu0 0
      %1653 = vmatprep.subr.bf16.mxu0 0
      %1654 = vmatpush1.bf16.msra.mxu0 0
      %1655 = vmatprep.subr.bf16.mxu0 0
      %1656 = vmatpush1.bf16.msra.mxu0 0
      %1657 = vmatprep.subr.bf16.mxu0 0
      %1658 = vmatpush1.bf16.msra.mxu0 0
      %1659 = vmatprep.subr.bf16.mxu0 0
      %1660 = vmatpush1.bf16.msra.mxu0 0
      %1661 = vmatprep.subr.bf16.mxu0 0
      %1662 = vmatpush1.bf16.msra.mxu0 0
      %1663 = vmatprep.subr.bf16.mxu0 0
      %1664 = vmatpush1.bf16.msra.mxu0 0
      %1665 = vmatprep.subr.bf16.mxu0 0
      %1666 = vmatpush1.bf16.msra.mxu0 %v1649
      %1667 = vmatprep.subr.bf16.mxu0 0
      %1668 = vmatpush2.bf16.msra.mxu0 0
      %1669 = vmatprep.subr.bf16.mxu0 0
      %1670 = vmatpush2.bf16.msra.mxu0 0
      %1671 = vmatprep.subr.bf16.mxu0 0
      %1672 = vmatpush2.bf16.msra.mxu0 0
      %1673 = vmatprep.subr.bf16.mxu0 0
      %1674 = vmatpush2.bf16.msra.mxu0 0
      %1675 = vmatprep.subr.bf16.mxu0 0
      %1676 = vmatpush2.bf16.msra.mxu0 0
      %1677 = vmatprep.subr.bf16.mxu0 0
      %1678 = vmatpush2.bf16.msra.mxu0 0
      %1679 = vmatprep.subr.bf16.mxu0 0
      %1680 = vmatpush2.bf16.msra.mxu0 0
      %1681 = vmatprep.subr.bf16.mxu0 0
      %1682 = vmatpush2.bf16.msra.mxu0 0
      %1683 = vmatprep.mubr.bf16.mxu0 0
      %1684 = vmatmul.mubr.bf16.gmra.mxu0 %v1634
      %v1685 = vpop.f32.mrf.mxu0
      %v1686 = vadd.f32 0.0, %v1685
      %v1687 = vpop.f32.mrf.mxu0
      %v1688 = vpop.f32.mrf.mxu0
      %v1689 = vadd.f32 0.0, %v1688
      %v1690 = vpop.f32.mrf.mxu0
      %1691 = vmatprep.mubr.bf16.mxu0 0
      %1692 = vmatmul.mubr.bf16.gmra.mxu0 %v1637
      %v1693 = vpop.f32.mrf.mxu0
      %v1694 = vadd.f32 0.0, %v1693
      %v1695 = vpop.f32.mrf.mxu0
      %v1696 = vpop.f32.mrf.mxu0
      %v1697 = vadd.f32 0.0, %v1696
      %v1698 = vpop.f32.mrf.mxu0
      %1699 = vmatprep.mubr.bf16.mxu0 0
      %1700 = vmatmul.mubr.bf16.gmra.mxu0 %v1640
      %v1701 = vpop.f32.mrf.mxu0
      %v1702 = vadd.f32 0.0, %v1701
      %v1703 = vpop.f32.mrf.mxu0
      %v1704 = vpop.f32.mrf.mxu0
      %v1705 = vadd.f32 0.0, %v1704
      %v1706 = vpop.f32.mrf.mxu0
      %1707 = vmatprep.mubr.bf16.mxu0 0
      %1708 = vmatmul.mubr.bf16.gmra.mxu0 %v1643
      %v1709 = vpop.f32.mrf.mxu0
      %v1710 = vadd.f32 0.0, %v1709
      %v1711 = vpop.f32.mrf.mxu0
      %v1712 = vpop.f32.mrf.mxu0
      %v1713 = vadd.f32 0.0, %v1712
      %v1714 = vpop.f32.mrf.mxu0
      %1715 = vmatprep.mubr.bf16.mxu0 0
      %1716 = vmatmul.mubr.bf16.gmra.mxu0 %v1646
      %v1717 = vpop.f32.mrf.mxu0
      %v1718 = vadd.f32 0.0, %v1717
      %v1719 = vpop.f32.mrf.mxu0
      %v1720 = vpop.f32.mrf.mxu0
      %v1721 = vpop.f32.mrf.mxu0
      %1722 = vdwg.mxu0
      %v1723 = vld [vmem:[#allocation2] sm:$0xff]
      %v1724 = vld [vmem:[#allocation2 + $0x8] sm:$0xff]
      %v1725 = vld [vmem:[#allocation2 + $0x10] sm:$0xff]
      %v1726 = vld [vmem:[#allocation2 + $0x18] sm:$0xff]
      %v1727 = vld [vmem:[#allocation2 + $0x20] sm:$0xff]
      %v1728 = vld [vmem:[#allocation2 + $0x28] sm:$0xff]
      %v1729 = vld [vmem:[#allocation2 + $0x30] sm:$0xff]
      %v1730 = vld [vmem:[#allocation2 + $0x38] sm:$0xff]
      %v1731 = vld [vmem:[#allocation2 + $0x40] sm:$0xff]
      %v1732 = vadd.f32 %v1723, %v1686
      %v1733 = vadd.f32 %v1724, %v1689
      %v1734 = vadd.f32 %v1725, %v1694
      %v1735 = vadd.f32 %v1726, %v1697
      %v1736 = vadd.f32 %v1727, %v1702
      %v1737 = vadd.f32 %v1728, %v1705
      %v1738 = vadd.f32 %v1729, %v1710
      %v1739 = vadd.f32 %v1730, %v1713
      %v1740 = vadd.f32 %v1731, %v1718
      %1741 = vst.msk [vmem:[#allocation2] sm:$0xff] %vm256, %v1732
      %1742 = vst.msk [vmem:[#allocation2 + $0x8] sm:$0xff] %vm256, %v1733
      %1743 = vst.msk [vmem:[#allocation2 + $0x10] sm:$0xff] %vm256, %v1734
      %1744 = vst.msk [vmem:[#allocation2 + $0x18] sm:$0xff] %vm256, %v1735
      %1745 = vst.msk [vmem:[#allocation2 + $0x20] sm:$0xff] %vm256, %v1736
      %1746 = vst.msk [vmem:[#allocation2 + $0x28] sm:$0xff] %vm256, %v1737
      %1747 = vst.msk [vmem:[#allocation2 + $0x30] sm:$0xff] %vm256, %v1738
      %1748 = vst.msk [vmem:[#allocation2 + $0x38] sm:$0xff] %vm256, %v1739
      %1749 = vst.msk [vmem:[#allocation2 + $0x40] sm:$0xff] %vm256, %v1740
      %v1750 = vld [vmem:[#allocation2] sm:$0xff]
      %v1751 = vld [vmem:[#allocation2 + $0x8] sm:$0xff]
      %v1752 = vld [vmem:[#allocation2 + $0x10] sm:$0xff]
      %v1753 = vld [vmem:[#allocation2 + $0x18] sm:$0xff]
      %v1754 = vld [vmem:[#allocation2 + $0x20] sm:$0xff]
      %v1755 = vld [vmem:[#allocation2 + $0x28] sm:$0xff]
      %v1756 = vld [vmem:[#allocation2 + $0x30] sm:$0xff]
      %v1757 = vld [vmem:[#allocation2 + $0x38] sm:$0xff]
      %v1758 = vld [vmem:[#allocation2 + $0x40] sm:$0xff]
      %v1759 = vld [vmem:[%s213] sm:$0x1]
      %v1761 = vlaneseq
      %v1762 = vshrl.u32 %v1761, 7
      %v1763 = vsub.s32 0, %v1762
      %v1764 = vrot.slane %v1759, %v1763
      %v1766 = vadd.f32 %v1750, %v1764
      %v1767 = vadd.f32 %v1751, %v1764
      %v1768 = vadd.f32 %v1752, %v1764
      %v1769 = vadd.f32 %v1753, %v1764
      %v1770 = vadd.f32 %v1754, %v1764
      %v1771 = vadd.f32 %v1755, %v1764
      %v1772 = vadd.f32 %v1756, %v1764
      %v1773 = vadd.f32 %v1757, %v1764
      %v1774 = vadd.f32 %v1758, %v1764
      %v1775 = vmax.f32 %v1766, 0.0
      %v1776 = vmax.f32 %v1767, 0.0
      %v1777 = vmax.f32 %v1768, 0.0
      %v1778 = vmax.f32 %v1769, 0.0
      %v1779 = vmax.f32 %v1770, 0.0
      %v1780 = vmax.f32 %v1771, 0.0
      %v1781 = vmax.f32 %v1772, 0.0
      %v1782 = vmax.f32 %v1773, 0.0
      %v1783 = vmax.f32 %v1774, 0.0
      %v1793 = vcombine.high %v1775, %v1775
      %v1795 = vunpack.c.l.s4 1966171168
      %v1796 = vunpack.c.0.s8 %v1795
      %v1797 = vlaneseq
      %v1798 = vshrl.u32 %v1797, 7
      %v1799 = vsub.s32 %v1796, %v1798
      %v1800 = vrot.slane %v1775, %v1799
      %v1802 = vunpack.c.l.s4 1966171168
      %v1803 = vunpack.c.0.s8 %v1802
      %v1804 = vlaneseq
      %v1805 = vshrl.u32 %v1804, 7
      %v1806 = vsub.s32 %v1803, %v1805
      %v1807 = vrot.slane %v1793, %v1806
      %v1808 = vcombine.high %v1800, %v1800
      %v1809 = vcombine.high %v1807, %v1807
      %v1811 = vunpack.c.l.s4 1966171168
      %v1812 = vunpack.c.0.s8 %v1811
      %v1813 = vlaneseq
      %v1814 = vshrl.u32 %v1813, 7
      %v1815 = vsub.s32 %v1812, %v1814
      %v1816 = vrot.slane %v1800, %v1815
      %v1818 = vunpack.c.l.s4 1966171168
      %v1819 = vunpack.c.0.s8 %v1818
      %v1820 = vlaneseq
      %v1821 = vshrl.u32 %v1820, 7
      %v1822 = vsub.s32 %v1819, %v1821
      %v1823 = vrot.slane %v1807, %v1822
      %v1825 = vunpack.c.l.s4 1966171168
      %v1826 = vunpack.c.0.s8 %v1825
      %v1827 = vlaneseq
      %v1828 = vshrl.u32 %v1827, 7
      %v1829 = vsub.s32 %v1826, %v1828
      %v1830 = vrot.slane %v1808, %v1829
      %v1832 = vunpack.c.l.s4 1966171168
      %v1833 = vunpack.c.0.s8 %v1832
      %v1834 = vlaneseq
      %v1835 = vshrl.u32 %v1834, 7
      %v1836 = vsub.s32 %v1833, %v1835
      %v1837 = vrot.slane %v1809, %v1836
      %v1838 = vcombine.high %v1816, %v1816
      %v1839 = vcombine.high %v1823, %v1823
      %v1840 = vcombine.high %v1830, %v1830
      %v1841 = vcombine.high %v1837, %v1837
      %v1842 = vcombine.high %v1776, %v1776
      %v1844 = vunpack.c.l.s4 1966171168
      %v1845 = vunpack.c.0.s8 %v1844
      %v1846 = vlaneseq
      %v1847 = vshrl.u32 %v1846, 7
      %v1848 = vsub.s32 %v1845, %v1847
      %v1849 = vrot.slane %v1776, %v1848
      %v1851 = vunpack.c.l.s4 1966171168
      %v1852 = vunpack.c.0.s8 %v1851
      %v1853 = vlaneseq
      %v1854 = vshrl.u32 %v1853, 7
      %v1855 = vsub.s32 %v1852, %v1854
      %v1856 = vrot.slane %v1842, %v1855
      %v1857 = vcombine.high %v1849, %v1849
      %v1858 = vcombine.high %v1856, %v1856
      %v1860 = vunpack.c.l.s4 1966171168
      %v1861 = vunpack.c.0.s8 %v1860
      %v1862 = vlaneseq
      %v1863 = vshrl.u32 %v1862, 7
      %v1864 = vsub.s32 %v1861, %v1863
      %v1865 = vrot.slane %v1849, %v1864
      %v1867 = vunpack.c.l.s4 1966171168
      %v1868 = vunpack.c.0.s8 %v1867
      %v1869 = vlaneseq
      %v1870 = vshrl.u32 %v1869, 7
      %v1871 = vsub.s32 %v1868, %v1870
      %v1872 = vrot.slane %v1856, %v1871
      %v1874 = vunpack.c.l.s4 1966171168
      %v1875 = vunpack.c.0.s8 %v1874
      %v1876 = vlaneseq
      %v1877 = vshrl.u32 %v1876, 7
      %v1878 = vsub.s32 %v1875, %v1877
      %v1879 = vrot.slane %v1857, %v1878
      %v1881 = vunpack.c.l.s4 1966171168
      %v1882 = vunpack.c.0.s8 %v1881
      %v1883 = vlaneseq
      %v1884 = vshrl.u32 %v1883, 7
      %v1885 = vsub.s32 %v1882, %v1884
      %v1886 = vrot.slane %v1858, %v1885
      %v1887 = vcombine.high %v1865, %v1865
      %v1888 = vcombine.high %v1872, %v1872
      %v1889 = vcombine.high %v1879, %v1879
      %v1890 = vcombine.high %v1886, %v1886
      %v1891 = vcombine.high %v1777, %v1777
      %v1893 = vunpack.c.l.s4 1966171168
      %v1894 = vunpack.c.0.s8 %v1893
      %v1895 = vlaneseq
      %v1896 = vshrl.u32 %v1895, 7
      %v1897 = vsub.s32 %v1894, %v1896
      %v1898 = vrot.slane %v1777, %v1897
      %v1900 = vunpack.c.l.s4 1966171168
      %v1901 = vunpack.c.0.s8 %v1900
      %v1902 = vlaneseq
      %v1903 = vshrl.u32 %v1902, 7
      %v1904 = vsub.s32 %v1901, %v1903
      %v1905 = vrot.slane %v1891, %v1904
      %v1906 = vcombine.high %v1898, %v1898
      %v1907 = vcombine.high %v1905, %v1905
      %v1909 = vunpack.c.l.s4 1966171168
      %v1910 = vunpack.c.0.s8 %v1909
      %v1911 = vlaneseq
      %v1912 = vshrl.u32 %v1911, 7
      %v1913 = vsub.s32 %v1910, %v1912
      %v1914 = vrot.slane %v1898, %v1913
      %v1916 = vunpack.c.l.s4 1966171168
      %v1917 = vunpack.c.0.s8 %v1916
      %v1918 = vlaneseq
      %v1919 = vshrl.u32 %v1918, 7
      %v1920 = vsub.s32 %v1917, %v1919
      %v1921 = vrot.slane %v1905, %v1920
      %v1923 = vunpack.c.l.s4 1966171168
      %v1924 = vunpack.c.0.s8 %v1923
      %v1925 = vlaneseq
      %v1926 = vshrl.u32 %v1925, 7
      %v1927 = vsub.s32 %v1924, %v1926
      %v1928 = vrot.slane %v1906, %v1927
      %v1930 = vunpack.c.l.s4 1966171168
      %v1931 = vunpack.c.0.s8 %v1930
      %v1932 = vlaneseq
      %v1933 = vshrl.u32 %v1932, 7
      %v1934 = vsub.s32 %v1931, %v1933
      %v1935 = vrot.slane %v1907, %v1934
      %v1936 = vcombine.high %v1914, %v1914
      %v1937 = vcombine.high %v1921, %v1921
      %v1938 = vcombine.high %v1928, %v1928
      %v1939 = vcombine.high %v1935, %v1935
      %v1940 = vcombine.high %v1778, %v1778
      %v1942 = vunpack.c.l.s4 1966171168
      %v1943 = vunpack.c.0.s8 %v1942
      %v1944 = vlaneseq
      %v1945 = vshrl.u32 %v1944, 7
      %v1946 = vsub.s32 %v1943, %v1945
      %v1947 = vrot.slane %v1778, %v1946
      %v1949 = vunpack.c.l.s4 1966171168
      %v1950 = vunpack.c.0.s8 %v1949
      %v1951 = vlaneseq
      %v1952 = vshrl.u32 %v1951, 7
      %v1953 = vsub.s32 %v1950, %v1952
      %v1954 = vrot.slane %v1940, %v1953
      %v1955 = vcombine.high %v1947, %v1947
      %v1956 = vcombine.high %v1954, %v1954
      %v1958 = vunpack.c.l.s4 1966171168
      %v1959 = vunpack.c.0.s8 %v1958
      %v1960 = vlaneseq
      %v1961 = vshrl.u32 %v1960, 7
      %v1962 = vsub.s32 %v1959, %v1961
      %v1963 = vrot.slane %v1947, %v1962
      %v1965 = vunpack.c.l.s4 1966171168
      %v1966 = vunpack.c.0.s8 %v1965
      %v1967 = vlaneseq
      %v1968 = vshrl.u32 %v1967, 7
      %v1969 = vsub.s32 %v1966, %v1968
      %v1970 = vrot.slane %v1954, %v1969
      %v1972 = vunpack.c.l.s4 1966171168
      %v1973 = vunpack.c.0.s8 %v1972
      %v1974 = vlaneseq
      %v1975 = vshrl.u32 %v1974, 7
      %v1976 = vsub.s32 %v1973, %v1975
      %v1977 = vrot.slane %v1955, %v1976
      %v1979 = vunpack.c.l.s4 1966171168
      %v1980 = vunpack.c.0.s8 %v1979
      %v1981 = vlaneseq
      %v1982 = vshrl.u32 %v1981, 7
      %v1983 = vsub.s32 %v1980, %v1982
      %v1984 = vrot.slane %v1956, %v1983
      %v1985 = vcombine.high %v1970, %v1970
      %v1986 = vcombine.high %v1977, %v1977
      %v1987 = vcombine.high %v1984, %v1984
      %v1988 = vcombine.high %v1779, %v1779
      %v1990 = vunpack.c.l.s4 1966171168
      %v1991 = vunpack.c.0.s8 %v1990
      %v1992 = vlaneseq
      %v1993 = vshrl.u32 %v1992, 7
      %v1994 = vsub.s32 %v1991, %v1993
      %v1995 = vrot.slane %v1779, %v1994
      %v1997 = vunpack.c.l.s4 1966171168
      %v1998 = vunpack.c.0.s8 %v1997
      %v1999 = vlaneseq
      %v2000 = vshrl.u32 %v1999, 7
      %v2001 = vsub.s32 %v1998, %v2000
      %v2002 = vrot.slane %v1988, %v2001
      %v2003 = vcombine.high %v1995, %v1995
      %v2004 = vcombine.high %v2002, %v2002
      %v2006 = vunpack.c.l.s4 1966171168
      %v2007 = vunpack.c.0.s8 %v2006
      %v2008 = vlaneseq
      %v2009 = vshrl.u32 %v2008, 7
      %v2010 = vsub.s32 %v2007, %v2009
      %v2011 = vrot.slane %v1995, %v2010
      %v2013 = vunpack.c.l.s4 1966171168
      %v2014 = vunpack.c.0.s8 %v2013
      %v2015 = vlaneseq
      %v2016 = vshrl.u32 %v2015, 7
      %v2017 = vsub.s32 %v2014, %v2016
      %v2018 = vrot.slane %v2002, %v2017
      %v2020 = vunpack.c.l.s4 1966171168
      %v2021 = vunpack.c.0.s8 %v2020
      %v2022 = vlaneseq
      %v2023 = vshrl.u32 %v2022, 7
      %v2024 = vsub.s32 %v2021, %v2023
      %v2025 = vrot.slane %v2003, %v2024
      %v2027 = vunpack.c.l.s4 1966171168
      %v2028 = vunpack.c.0.s8 %v2027
      %v2029 = vlaneseq
      %v2030 = vshrl.u32 %v2029, 7
      %v2031 = vsub.s32 %v2028, %v2030
      %v2032 = vrot.slane %v2004, %v2031
      %v2033 = vcombine.high %v2011, %v2011
      %v2034 = vcombine.high %v2018, %v2018
      %v2035 = vcombine.high %v2032, %v2032
      %v2036 = vcombine.high %v1780, %v1780
      %v2038 = vunpack.c.l.s4 1966171168
      %v2039 = vunpack.c.0.s8 %v2038
      %v2040 = vlaneseq
      %v2041 = vshrl.u32 %v2040, 7
      %v2042 = vsub.s32 %v2039, %v2041
      %v2043 = vrot.slane %v1780, %v2042
      %v2045 = vunpack.c.l.s4 1966171168
      %v2046 = vunpack.c.0.s8 %v2045
      %v2047 = vlaneseq
      %v2048 = vshrl.u32 %v2047, 7
      %v2049 = vsub.s32 %v2046, %v2048
      %v2050 = vrot.slane %v2036, %v2049
      %v2051 = vcombine.high %v2043, %v2043
      %v2052 = vcombine.high %v2050, %v2050
      %v2054 = vunpack.c.l.s4 1966171168
      %v2055 = vunpack.c.0.s8 %v2054
      %v2056 = vlaneseq
      %v2057 = vshrl.u32 %v2056, 7
      %v2058 = vsub.s32 %v2055, %v2057
      %v2059 = vrot.slane %v2043, %v2058
      %v2061 = vunpack.c.l.s4 1966171168
      %v2062 = vunpack.c.0.s8 %v2061
      %v2063 = vlaneseq
      %v2064 = vshrl.u32 %v2063, 7
      %v2065 = vsub.s32 %v2062, %v2064
      %v2066 = vrot.slane %v2050, %v2065
      %v2068 = vunpack.c.l.s4 1966171168
      %v2069 = vunpack.c.0.s8 %v2068
      %v2070 = vlaneseq
      %v2071 = vshrl.u32 %v2070, 7
      %v2072 = vsub.s32 %v2069, %v2071
      %v2073 = vrot.slane %v2051, %v2072
      %v2075 = vunpack.c.l.s4 1966171168
      %v2076 = vunpack.c.0.s8 %v2075
      %v2077 = vlaneseq
      %v2078 = vshrl.u32 %v2077, 7
      %v2079 = vsub.s32 %v2076, %v2078
      %v2080 = vrot.slane %v2052, %v2079
      %v2081 = vcombine.high %v2059, %v2059
      %v2082 = vcombine.high %v2066, %v2066
      %v2083 = vcombine.high %v2073, %v2073
      %v2084 = vcombine.high %v2080, %v2080
      %v2085 = vcombine.high %v1781, %v1781
      %v2087 = vunpack.c.l.s4 1966171168
      %v2088 = vunpack.c.0.s8 %v2087
      %v2089 = vlaneseq
      %v2090 = vshrl.u32 %v2089, 7
      %v2091 = vsub.s32 %v2088, %v2090
      %v2092 = vrot.slane %v1781, %v2091
      %v2094 = vunpack.c.l.s4 1966171168
      %v2095 = vunpack.c.0.s8 %v2094
      %v2096 = vlaneseq
      %v2097 = vshrl.u32 %v2096, 7
      %v2098 = vsub.s32 %v2095, %v2097
      %v2099 = vrot.slane %v2085, %v2098
      %v2100 = vcombine.high %v2092, %v2092
      %v2101 = vcombine.high %v2099, %v2099
      %v2103 = vunpack.c.l.s4 1966171168
      %v2104 = vunpack.c.0.s8 %v2103
      %v2105 = vlaneseq
      %v2106 = vshrl.u32 %v2105, 7
      %v2107 = vsub.s32 %v2104, %v2106
      %v2108 = vrot.slane %v2092, %v2107
      %v2110 = vunpack.c.l.s4 1966171168
      %v2111 = vunpack.c.0.s8 %v2110
      %v2112 = vlaneseq
      %v2113 = vshrl.u32 %v2112, 7
      %v2114 = vsub.s32 %v2111, %v2113
      %v2115 = vrot.slane %v2099, %v2114
      %v2117 = vunpack.c.l.s4 1966171168
      %v2118 = vunpack.c.0.s8 %v2117
      %v2119 = vlaneseq
      %v2120 = vshrl.u32 %v2119, 7
      %v2121 = vsub.s32 %v2118, %v2120
      %v2122 = vrot.slane %v2100, %v2121
      %v2124 = vunpack.c.l.s4 1966171168
      %v2125 = vunpack.c.0.s8 %v2124
      %v2126 = vlaneseq
      %v2127 = vshrl.u32 %v2126, 7
      %v2128 = vsub.s32 %v2125, %v2127
      %v2129 = vrot.slane %v2101, %v2128
      %v2130 = vcombine.high %v2108, %v2108
      %v2131 = vcombine.high %v2115, %v2115
      %v2132 = vcombine.high %v2122, %v2122
      %v2133 = vcombine.high %v2129, %v2129
      %v2134 = vcombine.high %v1782, %v1782
      %v2136 = vunpack.c.l.s4 1966171168
      %v2137 = vunpack.c.0.s8 %v2136
      %v2138 = vlaneseq
      %v2139 = vshrl.u32 %v2138, 7
      %v2140 = vsub.s32 %v2137, %v2139
      %v2141 = vrot.slane %v1782, %v2140
      %v2143 = vunpack.c.l.s4 1966171168
      %v2144 = vunpack.c.0.s8 %v2143
      %v2145 = vlaneseq
      %v2146 = vshrl.u32 %v2145, 7
      %v2147 = vsub.s32 %v2144, %v2146
      %v2148 = vrot.slane %v2134, %v2147
      %v2149 = vcombine.high %v2141, %v2141
      %v2150 = vcombine.high %v2148, %v2148
      %v2152 = vunpack.c.l.s4 1966171168
      %v2153 = vunpack.c.0.s8 %v2152
      %v2154 = vlaneseq
      %v2155 = vshrl.u32 %v2154, 7
      %v2156 = vsub.s32 %v2153, %v2155
      %v2157 = vrot.slane %v2141, %v2156
      %v2159 = vunpack.c.l.s4 1966171168
      %v2160 = vunpack.c.0.s8 %v2159
      %v2161 = vlaneseq
      %v2162 = vshrl.u32 %v2161, 7
      %v2163 = vsub.s32 %v2160, %v2162
      %v2164 = vrot.slane %v2148, %v2163
      %v2166 = vunpack.c.l.s4 1966171168
      %v2167 = vunpack.c.0.s8 %v2166
      %v2168 = vlaneseq
      %v2169 = vshrl.u32 %v2168, 7
      %v2170 = vsub.s32 %v2167, %v2169
      %v2171 = vrot.slane %v2149, %v2170
      %v2173 = vunpack.c.l.s4 1966171168
      %v2174 = vunpack.c.0.s8 %v2173
      %v2175 = vlaneseq
      %v2176 = vshrl.u32 %v2175, 7
      %v2177 = vsub.s32 %v2174, %v2176
      %v2178 = vrot.slane %v2150, %v2177
      %v2179 = vcombine.high %v2157, %v2157
      %v2180 = vcombine.high %v2171, %v2171
      %v2181 = vcombine.high %v2178, %v2178
      %v2182 = vcombine.high %v1783, %v1783
      %v2184 = vunpack.c.l.s4 1966171168
      %v2185 = vunpack.c.0.s8 %v2184
      %v2186 = vlaneseq
      %v2187 = vshrl.u32 %v2186, 7
      %v2188 = vsub.s32 %v2185, %v2187
      %v2189 = vrot.slane %v1783, %v2188
      %v2191 = vunpack.c.l.s4 1966171168
      %v2192 = vunpack.c.0.s8 %v2191
      %v2193 = vlaneseq
      %v2194 = vshrl.u32 %v2193, 7
      %v2195 = vsub.s32 %v2192, %v2194
      %v2196 = vrot.slane %v2182, %v2195
      %v2197 = vcombine.high %v2189, %v2189
      %v2198 = vcombine.high %v2196, %v2196
      %v2200 = vunpack.c.l.s4 1966171168
      %v2201 = vunpack.c.0.s8 %v2200
      %v2202 = vlaneseq
      %v2203 = vshrl.u32 %v2202, 7
      %v2204 = vsub.s32 %v2201, %v2203
      %v2205 = vrot.slane %v2189, %v2204
      %v2207 = vunpack.c.l.s4 1966171168
      %v2208 = vunpack.c.0.s8 %v2207
      %v2209 = vlaneseq
      %v2210 = vshrl.u32 %v2209, 7
      %v2211 = vsub.s32 %v2208, %v2210
      %v2212 = vrot.slane %v2196, %v2211
      %v2214 = vunpack.c.l.s4 1966171168
      %v2215 = vunpack.c.0.s8 %v2214
      %v2216 = vlaneseq
      %v2217 = vshrl.u32 %v2216, 7
      %v2218 = vsub.s32 %v2215, %v2217
      %v2219 = vrot.slane %v2197, %v2218
      %v2221 = vunpack.c.l.s4 1966171168
      %v2222 = vunpack.c.0.s8 %v2221
      %v2223 = vlaneseq
      %v2224 = vshrl.u32 %v2223, 7
      %v2225 = vsub.s32 %v2222, %v2224
      %v2226 = vrot.slane %v2198, %v2225
      %v2227 = vcombine.high %v2205, %v2205
      %v2228 = vcombine.high %v2212, %v2212
      %v2229 = vcombine.high %v2219, %v2219
      %v2230 = vcombine.low %v1816, %v1830
      %v2231 = vcombine.low %v1838, %v1840
      %v2232 = vcombine.low %v1823, %v1837
      %v2233 = vcombine.low %v1839, %v1841
      %v2235 = vunpack.c.l.s4 1966171168
      %v2236 = vunpack.c.0.s8 %v2235
      %v2237 = vlaneseq
      %v2238 = vshrl.u32 %v2237, 7
      %v2239 = vsub.s32 %v2236, %v2238
      %v2240 = vrot.slane %v2230, %v2239
      %v2242 = vunpack.c.l.s4 1966171168
      %v2243 = vunpack.c.0.s8 %v2242
      %v2244 = vlaneseq
      %v2245 = vshrl.u32 %v2244, 7
      %v2246 = vsub.s32 %v2243, %v2245
      %v2247 = vrot.slane %v2231, %v2246
      %v2249 = vunpack.c.l.s4 1966171168
      %v2250 = vunpack.c.0.s8 %v2249
      %v2251 = vlaneseq
      %v2252 = vshrl.u32 %v2251, 7
      %v2253 = vsub.s32 %v2250, %v2252
      %v2254 = vrot.slane %v2232, %v2253
      %v2256 = vunpack.c.l.s4 1966171168
      %v2257 = vunpack.c.0.s8 %v2256
      %v2258 = vlaneseq
      %v2259 = vshrl.u32 %v2258, 7
      %v2260 = vsub.s32 %v2257, %v2259
      %v2261 = vrot.slane %v2233, %v2260
      %v2262 = vcombine.low %v2240, %v2247
      %v2263 = vcombine.low %v2254, %v2261
      %v2265 = vunpack.c.l.s4 1966171168
      %v2266 = vunpack.c.0.s8 %v2265
      %v2267 = vlaneseq
      %v2268 = vshrl.u32 %v2267, 7
      %v2269 = vsub.s32 %v2266, %v2268
      %v2270 = vrot.slane %v2262, %v2269
      %v2272 = vunpack.c.l.s4 1966171168
      %v2273 = vunpack.c.0.s8 %v2272
      %v2274 = vlaneseq
      %v2275 = vshrl.u32 %v2274, 7
      %v2276 = vsub.s32 %v2273, %v2275
      %v2277 = vrot.slane %v2263, %v2276
      %v2278 = vcombine.low %v2270, %v2277
      %v2279 = vcombine.low %v1879, %v1887
      %v2280 = vcombine.low %v1889, %v1872
      %v2281 = vcombine.low %v1886, %v1888
      %v2282 = vcombine.low %v1890, %v1914
      %v2284 = vunpack.c.l.s4 1966171168
      %v2285 = vunpack.c.0.s8 %v2284
      %v2286 = vlaneseq
      %v2287 = vshrl.u32 %v2286, 7
      %v2288 = vsub.s32 %v2285, %v2287
      %v2289 = vrot.slane %v2279, %v2288
      %v2291 = vunpack.c.l.s4 1966171168
      %v2292 = vunpack.c.0.s8 %v2291
      %v2293 = vlaneseq
      %v2294 = vshrl.u32 %v2293, 7
      %v2295 = vsub.s32 %v2292, %v2294
      %v2296 = vrot.slane %v2280, %v2295
      %v2298 = vunpack.c.l.s4 1966171168
      %v2299 = vunpack.c.0.s8 %v2298
      %v2300 = vlaneseq
      %v2301 = vshrl.u32 %v2300, 7
      %v2302 = vsub.s32 %v2299, %v2301
      %v2303 = vrot.slane %v2281, %v2302
      %v2305 = vunpack.c.l.s4 1966171168
      %v2306 = vunpack.c.0.s8 %v2305
      %v2307 = vlaneseq
      %v2308 = vshrl.u32 %v2307, 7
      %v2309 = vsub.s32 %v2306, %v2308
      %v2310 = vrot.slane %v2282, %v2309
      %v2311 = vcombine.low %v2289, %v2296
      %v2312 = vcombine.low %v2303, %v2310
      %v2314 = vunpack.c.l.s4 1966171168
      %v2315 = vunpack.c.0.s8 %v2314
      %v2316 = vlaneseq
      %v2317 = vshrl.u32 %v2316, 7
      %v2318 = vsub.s32 %v2315, %v2317
      %v2319 = vrot.slane %v2311, %v2318
      %v2321 = vunpack.c.l.s4 1966171168
      %v2322 = vunpack.c.0.s8 %v2321
      %v2323 = vlaneseq
      %v2324 = vshrl.u32 %v2323, 7
      %v2325 = vsub.s32 %v2322, %v2324
      %v2326 = vrot.slane %v2312, %v2325
      %v2327 = vcombine.low %v2319, %v2326
      %v2328 = vcombine.low %v1936, %v1938
      %v2329 = vcombine.low %v1921, %v1935
      %v2330 = vcombine.low %v1937, %v1939
      %v2331 = vcombine.low %v1963, %v1977
      %v2333 = vunpack.c.l.s4 1966171168
      %v2334 = vunpack.c.0.s8 %v2333
      %v2335 = vlaneseq
      %v2336 = vshrl.u32 %v2335, 7
      %v2337 = vsub.s32 %v2334, %v2336
      %v2338 = vrot.slane %v2328, %v2337
      %v2340 = vunpack.c.l.s4 1966171168
      %v2341 = vunpack.c.0.s8 %v2340
      %v2342 = vlaneseq
      %v2343 = vshrl.u32 %v2342, 7
      %v2344 = vsub.s32 %v2341, %v2343
      %v2345 = vrot.slane %v2329, %v2344
      %v2347 = vunpack.c.l.s4 1966171168
      %v2348 = vunpack.c.0.s8 %v2347
      %v2349 = vlaneseq
      %v2350 = vshrl.u32 %v2349, 7
      %v2351 = vsub.s32 %v2348, %v2350
      %v2352 = vrot.slane %v2330, %v2351
      %v2354 = vunpack.c.l.s4 1966171168
      %v2355 = vunpack.c.0.s8 %v2354
      %v2356 = vlaneseq
      %v2357 = vshrl.u32 %v2356, 7
      %v2358 = vsub.s32 %v2355, %v2357
      %v2359 = vrot.slane %v2331, %v2358
      %v2360 = vcombine.low %v2338, %v2345
      %v2361 = vcombine.low %v2352, %v2359
      %v2363 = vunpack.c.l.s4 1966171168
      %v2364 = vunpack.c.0.s8 %v2363
      %v2365 = vlaneseq
      %v2366 = vshrl.u32 %v2365, 7
      %v2367 = vsub.s32 %v2364, %v2366
      %v2368 = vrot.slane %v2360, %v2367
      %v2370 = vunpack.c.l.s4 1966171168
      %v2371 = vunpack.c.0.s8 %v2370
      %v2372 = vlaneseq
      %v2373 = vshrl.u32 %v2372, 7
      %v2374 = vsub.s32 %v2371, %v2373
      %v2375 = vrot.slane %v2361, %v2374
      %v2376 = vcombine.low %v2368, %v2375
      %v2377 = vcombine.low %v1986, %v1970
      %v2378 = vcombine.low %v1984, %v1985
      %v2379 = vcombine.low %v1987, %v2011
      %v2380 = vcombine.low %v2025, %v2033
      %v2382 = vunpack.c.l.s4 1966171168
      %v2383 = vunpack.c.0.s8 %v2382
      %v2384 = vlaneseq
      %v2385 = vshrl.u32 %v2384, 7
      %v2386 = vsub.s32 %v2383, %v2385
      %v2387 = vrot.slane %v2377, %v2386
      %v2389 = vunpack.c.l.s4 1966171168
      %v2390 = vunpack.c.0.s8 %v2389
      %v2391 = vlaneseq
      %v2392 = vshrl.u32 %v2391, 7
      %v2393 = vsub.s32 %v2390, %v2392
      %v2394 = vrot.slane %v2378, %v2393
      %v2396 = vunpack.c.l.s4 1966171168
      %v2397 = vunpack.c.0.s8 %v2396
      %v2398 = vlaneseq
      %v2399 = vshrl.u32 %v2398, 7
      %v2400 = vsub.s32 %v2397, %v2399
      %v2401 = vrot.slane %v2379, %v2400
      %v2403 = vunpack.c.l.s4 1966171168
      %v2404 = vunpack.c.0.s8 %v2403
      %v2405 = vlaneseq
      %v2406 = vshrl.u32 %v2405, 7
      %v2407 = vsub.s32 %v2404, %v2406
      %v2408 = vrot.slane %v2380, %v2407
      %v2409 = vcombine.low %v2387, %v2394
      %v2410 = vcombine.low %v2401, %v2408
      %v2412 = vunpack.c.l.s4 1966171168
      %v2413 = vunpack.c.0.s8 %v2412
      %v2414 = vlaneseq
      %v2415 = vshrl.u32 %v2414, 7
      %v2416 = vsub.s32 %v2413, %v2415
      %v2417 = vrot.slane %v2409, %v2416
      %v2419 = vunpack.c.l.s4 1966171168
      %v2420 = vunpack.c.0.s8 %v2419
      %v2421 = vlaneseq
      %v2422 = vshrl.u32 %v2421, 7
      %v2423 = vsub.s32 %v2420, %v2422
      %v2424 = vrot.slane %v2410, %v2423
      %v2425 = vcombine.low %v2417, %v2424
      %v2426 = vcombine.low %v2018, %v2032
      %v2427 = vcombine.low %v2034, %v2035
      %v2428 = vcombine.low %v2059, %v2073
      %v2429 = vcombine.low %v2081, %v2083
      %v2431 = vunpack.c.l.s4 1966171168
      %v2432 = vunpack.c.0.s8 %v2431
      %v2433 = vlaneseq
      %v2434 = vshrl.u32 %v2433, 7
      %v2435 = vsub.s32 %v2432, %v2434
      %v2436 = vrot.slane %v2426, %v2435
      %v2438 = vunpack.c.l.s4 1966171168
      %v2439 = vunpack.c.0.s8 %v2438
      %v2440 = vlaneseq
      %v2441 = vshrl.u32 %v2440, 7
      %v2442 = vsub.s32 %v2439, %v2441
      %v2443 = vrot.slane %v2427, %v2442
      %v2445 = vunpack.c.l.s4 1966171168
      %v2446 = vunpack.c.0.s8 %v2445
      %v2447 = vlaneseq
      %v2448 = vshrl.u32 %v2447, 7
      %v2449 = vsub.s32 %v2446, %v2448
      %v2450 = vrot.slane %v2428, %v2449
      %v2452 = vunpack.c.l.s4 1966171168
      %v2453 = vunpack.c.0.s8 %v2452
      %v2454 = vlaneseq
      %v2455 = vshrl.u32 %v2454, 7
      %v2456 = vsub.s32 %v2453, %v2455
      %v2457 = vrot.slane %v2429, %v2456
      %v2458 = vcombine.low %v2436, %v2443
      %v2459 = vcombine.low %v2450, %v2457
      %v2461 = vunpack.c.l.s4 1966171168
      %v2462 = vunpack.c.0.s8 %v2461
      %v2463 = vlaneseq
      %v2464 = vshrl.u32 %v2463, 7
      %v2465 = vsub.s32 %v2462, %v2464
      %v2466 = vrot.slane %v2458, %v2465
      %v2468 = vunpack.c.l.s4 1966171168
      %v2469 = vunpack.c.0.s8 %v2468
      %v2470 = vlaneseq
      %v2471 = vshrl.u32 %v2470, 7
      %v2472 = vsub.s32 %v2469, %v2471
      %v2473 = vrot.slane %v2459, %v2472
      %v2474 = vcombine.low %v2466, %v2473
      %v2475 = vcombine.low %v2080, %v2082
      %v2476 = vcombine.low %v2084, %v2108
      %v2477 = vcombine.low %v2122, %v2130
      %v2478 = vcombine.low %v2132, %v2115
      %v2480 = vunpack.c.l.s4 1966171168
      %v2481 = vunpack.c.0.s8 %v2480
      %v2482 = vlaneseq
      %v2483 = vshrl.u32 %v2482, 7
      %v2484 = vsub.s32 %v2481, %v2483
      %v2485 = vrot.slane %v2475, %v2484
      %v2487 = vunpack.c.l.s4 1966171168
      %v2488 = vunpack.c.0.s8 %v2487
      %v2489 = vlaneseq
      %v2490 = vshrl.u32 %v2489, 7
      %v2491 = vsub.s32 %v2488, %v2490
      %v2492 = vrot.slane %v2476, %v2491
      %v2494 = vunpack.c.l.s4 1966171168
      %v2495 = vunpack.c.0.s8 %v2494
      %v2496 = vlaneseq
      %v2497 = vshrl.u32 %v2496, 7
      %v2498 = vsub.s32 %v2495, %v2497
      %v2499 = vrot.slane %v2477, %v2498
      %v2501 = vunpack.c.l.s4 1966171168
      %v2502 = vunpack.c.0.s8 %v2501
      %v2503 = vlaneseq
      %v2504 = vshrl.u32 %v2503, 7
      %v2505 = vsub.s32 %v2502, %v2504
      %v2506 = vrot.slane %v2478, %v2505
      %v2507 = vcombine.low %v2485, %v2492
      %v2508 = vcombine.low %v2499, %v2506
      %v2510 = vunpack.c.l.s4 1966171168
      %v2511 = vunpack.c.0.s8 %v2510
      %v2512 = vlaneseq
      %v2513 = vshrl.u32 %v2512, 7
      %v2514 = vsub.s32 %v2511, %v2513
      %v2515 = vrot.slane %v2507, %v2514
      %v2517 = vunpack.c.l.s4 1966171168
      %v2518 = vunpack.c.0.s8 %v2517
      %v2519 = vlaneseq
      %v2520 = vshrl.u32 %v2519, 7
      %v2521 = vsub.s32 %v2518, %v2520
      %v2522 = vrot.slane %v2508, %v2521
      %v2523 = vcombine.low %v2515, %v2522
      %v2524 = vcombine.low %v2131, %v2133
      %v2525 = vcombine.low %v2157, %v2171
      %v2526 = vcombine.low %v2179, %v2180
      %v2527 = vcombine.low %v2164, %v2178
      %v2529 = vunpack.c.l.s4 1966171168
      %v2530 = vunpack.c.0.s8 %v2529
      %v2531 = vlaneseq
      %v2532 = vshrl.u32 %v2531, 7
      %v2533 = vsub.s32 %v2530, %v2532
      %v2534 = vrot.slane %v2524, %v2533
      %v2536 = vunpack.c.l.s4 1966171168
      %v2537 = vunpack.c.0.s8 %v2536
      %v2538 = vlaneseq
      %v2539 = vshrl.u32 %v2538, 7
      %v2540 = vsub.s32 %v2537, %v2539
      %v2541 = vrot.slane %v2525, %v2540
      %v2543 = vunpack.c.l.s4 1966171168
      %v2544 = vunpack.c.0.s8 %v2543
      %v2545 = vlaneseq
      %v2546 = vshrl.u32 %v2545, 7
      %v2547 = vsub.s32 %v2544, %v2546
      %v2548 = vrot.slane %v2526, %v2547
      %v2550 = vunpack.c.l.s4 1966171168
      %v2551 = vunpack.c.0.s8 %v2550
      %v2552 = vlaneseq
      %v2553 = vshrl.u32 %v2552, 7
      %v2554 = vsub.s32 %v2551, %v2553
      %v2555 = vrot.slane %v2527, %v2554
      %v2556 = vcombine.low %v2534, %v2541
      %v2557 = vcombine.low %v2548, %v2555
      %v2559 = vunpack.c.l.s4 1966171168
      %v2560 = vunpack.c.0.s8 %v2559
      %v2561 = vlaneseq
      %v2562 = vshrl.u32 %v2561, 7
      %v2563 = vsub.s32 %v2560, %v2562
      %v2564 = vrot.slane %v2556, %v2563
      %v2566 = vunpack.c.l.s4 1966171168
      %v2567 = vunpack.c.0.s8 %v2566
      %v2568 = vlaneseq
      %v2569 = vshrl.u32 %v2568, 7
      %v2570 = vsub.s32 %v2567, %v2569
      %v2571 = vrot.slane %v2557, %v2570
      %v2572 = vcombine.low %v2564, %v2571
      %v2573 = vcombine.low %v2181, %v2205
      %v2574 = vcombine.low %v2219, %v2227
      %v2575 = vcombine.low %v2229, %v2212
      %v2576 = vcombine.low %v2226, %v2228
      %v2578 = vunpack.c.l.s4 1966171168
      %v2579 = vunpack.c.0.s8 %v2578
      %v2580 = vlaneseq
      %v2581 = vshrl.u32 %v2580, 7
      %v2582 = vsub.s32 %v2579, %v2581
      %v2583 = vrot.slane %v2573, %v2582
      %v2585 = vunpack.c.l.s4 1966171168
      %v2586 = vunpack.c.0.s8 %v2585
      %v2587 = vlaneseq
      %v2588 = vshrl.u32 %v2587, 7
      %v2589 = vsub.s32 %v2586, %v2588
      %v2590 = vrot.slane %v2574, %v2589
      %v2592 = vunpack.c.l.s4 1966171168
      %v2593 = vunpack.c.0.s8 %v2592
      %v2594 = vlaneseq
      %v2595 = vshrl.u32 %v2594, 7
      %v2596 = vsub.s32 %v2593, %v2595
      %v2597 = vrot.slane %v2575, %v2596
      %v2599 = vunpack.c.l.s4 1966171168
      %v2600 = vunpack.c.0.s8 %v2599
      %v2601 = vlaneseq
      %v2602 = vshrl.u32 %v2601, 7
      %v2603 = vsub.s32 %v2600, %v2602
      %v2604 = vrot.slane %v2576, %v2603
      %v2605 = vcombine.low %v2583, %v2590
      %v2606 = vcombine.low %v2597, %v2604
      %v2608 = vunpack.c.l.s4 1966171168
      %v2609 = vunpack.c.0.s8 %v2608
      %v2610 = vlaneseq
      %v2611 = vshrl.u32 %v2610, 7
      %v2612 = vsub.s32 %v2609, %v2611
      %v2613 = vrot.slane %v2605, %v2612
      %v2615 = vunpack.c.l.s4 1966171168
      %v2616 = vunpack.c.0.s8 %v2615
      %v2617 = vlaneseq
      %v2618 = vshrl.u32 %v2617, 7
      %v2619 = vsub.s32 %v2616, %v2618
      %v2620 = vrot.slane %v2606, %v2619
      %v2621 = vcombine.low %v2613, %v2620
      %v2630 = vpack.c.bf16 %v2278, %v2278
      %v2631 = vpack.c.bf16 %v2327, %v2327
      %v2632 = vpack.c.bf16 %v2376, %v2376
      %v2633 = vpack.c.bf16 %v2425, %v2425
      %v2634 = vpack.c.bf16 %v2474, %v2474
      %v2635 = vpack.c.bf16 %v2523, %v2523
      %v2636 = vpack.c.bf16 %v2572, %v2572
      %v2637 = vpack.c.bf16 %v2621, %v2621
      %vm2638 = vcmask 27648
      %2639 = vst.msk [vmem:[%s221] sm:$0xf] %vm2638, %v2630
      %2640 = vst.msk [vmem:[%s221 + $0x4] sm:$0xf] %vm2638, %v2631
      %2641 = vst.msk [vmem:[%s221 + $0x8] sm:$0xf] %vm2638, %v2632
      %2642 = vst.msk [vmem:[%s221 + $0xc] sm:$0xf] %vm2638, %v2633
      %2643 = vst.msk [vmem:[%s221 + $0x10] sm:$0xf] %vm2638, %v2634
      %2644 = vst.msk [vmem:[%s221 + $0x14] sm:$0xf] %vm2638, %v2635
      %2645 = vst.msk [vmem:[%s221 + $0x18] sm:$0xf] %vm2638, %v2636
      %2646 = vst.msk [vmem:[%s221 + $0x1c] sm:$0xf] %vm2638, %v2637
      %p2647 = scmp.lt.s32.totalorder %s18, 1
      %s2648 = scalar_select %p2647, %s18, 1
      %p2649 = scmp.lt.s32.totalorder %s19, 0
      %s2650 = scalar_select %p2649, %s19, 0
      %s2651 = smul.addr %s2648, 8
      %s2652 = sadd.s32 %s2650, %s2651
      %s2653 = smul.addr %s2652, 4
      %s2654 = scalar_lea.vmem %s3, %s2653
      // Predicated region
      $region33: #{bottleneck_forward.4} parent=31 // pred_check
        %p2655 = pneg %p124
      $region34: #{bottleneck_forward.4} parent=31 // pred_check_branch
        %2657 = sbr.rel (%p2655) target = $region36
      $region35: #{bottleneck_forward.4} parent=31 // pred_region
        _
      $region36: #{bottleneck_forward.4} parent=31 // pred_fallthru
        _
    $region32: #{bottleneck_forward.4} parent=5 // pred_fallthru
      _
    %p2658 = scmp.le.s32.totalorder 2, %s9
    // Predicated region
    $region37: #{bottleneck_forward.4} parent=5 // pred_check
      %p2659 = pneg %p2658
    $region38: #{bottleneck_forward.4} parent=5 // pred_check_branch
      %2661 = sbr.rel (%p2659) target = $region40
    $region39: #{bottleneck_forward.4} parent=5 // pred_region
      %s2662 = ssub.s32 %s9, 2
      // Predicated region
      $region41: #{bottleneck_forward.4} parent=39 // pred_check
        %p2663 = pneg %p130
      $region42: #{bottleneck_forward.4} parent=39 // pred_check_branch
        %2665 = sbr.rel (%p2663) target = $region44
      $region43: #{bottleneck_forward.4} parent=39 // pred_region
        %p2666 = scmp.lt.s32.totalorder %s20, 1
        %s2667 = scalar_select %p2666, %s20, 1
        %p2668 = scmp.lt.s32.totalorder %s21, 0
        %s2669 = scalar_select %p2668, %s21, 0
        %s2670 = smul.addr %s2667, 8
        %s2671 = sadd.s32 %s2669, %s2670
        %s2672 = smul.addr %s2671, 4
        %s2673 = scalar_lea.vmem %s3, %s2672
      $region44: #{bottleneck_forward.4} parent=39 // pred_fallthru
        _
    $region40: #{bottleneck_forward.4} parent=5 // pred_fallthru
      _
  $region6: #{bottleneck_forward.4} parent=0 // loop_footer
    %s13 = sadd.s32 1, %s9
  $region7: #{bottleneck_forward.4} parent=0 // loop_footer_branch
    %8 = sbr.rel target = $region3
  $region8: #{bottleneck_forward.4} parent=0 // loop_exit
    _

</llo_original>
